<compile_context>
chip_gen: v6e
topology: v6e:2x2x1
jax: 0.10.0
libtpu: 0.0.40
codegen_flags: <defaults>
</compile_context>

<pallas_src>
import jax
import jax.numpy as jnp
from jax.experimental import pallas as pl
from jax.experimental.pallas import tpu as pltpu

D1, D2 = 2, 3  # dilations of the two 3x3 convs ("same" padding = dilation)


def _up4_forward(params, x1, x2, x3, x4):
    N, c1, hu, wu = x1.shape            # x1 is half resolution
    _, c2, H, W = x2.shape
    c3, c4 = x3.shape[1], x4.shape[1]
    assert (H, W) == (2 * hu, 2 * wu)
    assert x3.shape[2:] == (H, W) and x4.shape[2:] == (H, W)
    cin = c4 + c3 + c2 + c1
    cout = params["b1"].shape[0]

    pad = max(D1, D2)                   # grid halo (covers both dilations)
    Wg = W + 2 * pad                    # padded grid row width
    VR = H * Wg                         # flattened "valid rows" window
    G1 = D1 * (Wg + 1)                  # guards so every tap slice is in-bounds
    G2 = D2 * (Wg + 1)
    FLAT1 = VR + 2 * G1
    FLAT2 = VR + 2 * G2
    offs1 = [(ky - 1) * D1 * Wg + (kx - 1) * D1 for ky in range(3) for kx in range(3)]
    offs2 = [(ky - 1) * D2 * Wg + (kx - 1) * D2 for ky in range(3) for kx in range(3)]

    # 1 for grid columns holding real image pixels, 0 for the padding halo.
    cols = jnp.arange(VR, dtype=jnp.int32) % Wg
    mask = ((cols >= pad) & (cols < pad + W)).astype(jnp.float32).reshape(1, VR)

    def kernel(x4_ref, x3_ref, x2_ref, x1_ref, w1_ref, b1_ref, w2_ref, b2_ref,
               mask_ref, o_ref, xg_ref, x1u_ref):
        f32, bf16 = jnp.float32, jnp.bfloat16

        # ---- nearest-neighbour 2x upsample of x1 via 0/1 selection matmuls --
        # U_h[i, m] = 1 iff m == i // 2 ;  U_w[k, j] = 1 iff k == j // 2
        ri = jax.lax.broadcasted_iota(jnp.int32, (H, hu), 0)
        ci = jax.lax.broadcasted_iota(jnp.int32, (H, hu), 1)
        U_h = jnp.where((2 * ci == ri) | (2 * ci + 1 == ri), 1.0, 0.0)
        rj = jax.lax.broadcasted_iota(jnp.int32, (wu, W), 0)
        cj = jax.lax.broadcasted_iota(jnp.int32, (wu, W), 1)
        U_w = jnp.where((2 * rj == cj) | (2 * rj + 1 == cj), 1.0, 0.0)
        for c in range(c1):
            t = jnp.dot(U_h, x1_ref[0, c], preferred_element_type=f32)    # (H, wu)
            x1u_ref[c] = jnp.dot(t, U_w, preferred_element_type=f32).astype(bf16)

        # ---- assemble channel-concat input on the flat zero-padded grid -----
        xg_ref[...] = jnp.zeros((cin, FLAT1), bf16)
        for r in range(H):
            base = G1 + r * Wg + pad
            xg_ref[0:c4, base:base + W] = x4_ref[0, :, r, :].astype(bf16)
            xg_ref[c4:c4 + c3, base:base + W] = x3_ref[0, :, r, :].astype(bf16)
            xg_ref[c4 + c3:c4 + c3 + c2, base:base + W] = x2_ref[0, :, r, :].astype(bf16)
            xg_ref[c4 + c3 + c2:cin, base:base + W] = x1u_ref[:, r, :]
        xfull = xg_ref[...]                                               # (cin, FLAT1) bf16

        # ---- conv1 (dil=2): 9 lane-offset slices -> one im2col matmul -------
        patches1 = jnp.concatenate(
            [xfull[:, G1 + o: G1 + o + VR] for o in offs1], axis=0)       # (9*cin, VR)
        acc1 = jnp.dot(w1_ref[...], patches1, preferred_element_type=f32)  # (cout, VR) f32
        y1 = jnp.maximum(acc1 + b1_ref[...], 0.0) * mask_ref[...]          # halo cols -> 0

        # ---- conv2 (dil=3): same trick on the VMEM-resident intermediate ----
        zg = jnp.zeros((cout, G2), f32)
        y1full = jnp.concatenate([zg, y1, zg], axis=1)                     # (cout, FLAT2)
        patches2 = jnp.concatenate(
            [y1full[:, G2 + o: G2 + o + VR] for o in offs2], axis=0).astype(bf16)
        acc2 = jnp.dot(w2_ref[...], patches2, preferred_element_type=f32)
        y2 = jnp.maximum(acc2 + b2_ref[...], 0.0)                          # (cout, VR) f32

        # ---- drop halo columns -> lane-dense (cout, H*W) NCHW output --------
        out = jnp.concatenate(
            [y2[:, r * Wg + pad: r * Wg + pad + W] for r in range(H)], axis=1)
        o_ref[0] = out.astype(o_ref.dtype)

    out_flat = pl.pallas_call(
        kernel,
        out_shape=jax.ShapeDtypeStruct((N, cout, H * W), jnp.float32),
        grid=(N,),
        in_specs=[
            pl.BlockSpec((1, c4, H, W), lambda n: (n, 0, 0, 0)),
            pl.BlockSpec((1, c3, H, W), lambda n: (n, 0, 0, 0)),
            pl.BlockSpec((1, c2, H, W), lambda n: (n, 0, 0, 0)),
            pl.BlockSpec((1, c1, hu, wu), lambda n: (n, 0, 0, 0)),
            pl.BlockSpec((cout, 9 * cin), lambda n: (0, 0)),   # folded conv1 weights (bf16)
            pl.BlockSpec((cout, 1), lambda n: (0, 0)),         # fused bias 1
            pl.BlockSpec((cout, 9 * cout), lambda n: (0, 0)),  # folded conv2 weights (bf16)
            pl.BlockSpec((cout, 1), lambda n: (0, 0)),         # fused bias 2
            pl.BlockSpec((1, VR), lambda n: (0, 0)),           # valid-column mask
        ],
        out_specs=pl.BlockSpec((1, cout, H * W), lambda n: (n, 0, 0)),
        scratch_shapes=[
            pltpu.VMEM((cin, FLAT1), jnp.bfloat16),   # assembled padded input
            pltpu.VMEM((c1, H, W), jnp.bfloat16),     # upsampled x1
        ],
        compiler_params=pltpu.CompilerParams(dimension_semantics=("parallel",)),
    )(x4, x3, x2, x1, params["w1"], params["b1"], params["w2"], params["b2"], mask)

    return out_flat.reshape(N, cout, H, W)   # free reshape: already NCHW


up4_forward = jax.jit(_up4_forward)


# ----------------------------------------------------------------------------
# Parameter init (raw torch-style params) + BN fold / weight layout.
# ----------------------------------------------------------------------------
def init_params(key, in_ch, out_ch):
    ks = jax.random.split(key, 8)
    return dict(
        w1=0.1 * jax.random.normal(ks[0], (out_ch, in_ch, 3, 3), jnp.float32),
        cb1=0.1 * jax.random.normal(ks[1], (out_ch,), jnp.float32),
        g1=1.0 + 0.1 * jax.random.normal(ks[2], (out_ch,), jnp.float32),
        be1=0.1 * jax.random.normal(ks[3], (out_ch,), jnp.float32),
        w2=0.1 * jax.random.normal(ks[4], (out_ch, out_ch, 3, 3), jnp.float32),
        cb2=0.1 * jax.random.normal(ks[5], (out_ch,), jnp.float32),
        g2=1.0 + 0.1 * jax.random.normal(ks[6], (out_ch,), jnp.float32),
        be2=0.1 * jax.random.normal(ks[7], (out_ch,), jnp.float32),
    )


def fold_params(raw, eps=1e-5):
    """Fold eval-mode BN (mean=0, var=1) into the conv weights and lay the
    weights out tap-major as (Cout, 9*Cin) bf16 for the im2col matmul."""
    def fold(w, cb, g, be):
        s = g / jnp.sqrt(1.0 + eps)
        wf = w * s[:, None, None, None]
        bf = (s * cb + be).reshape(-1, 1).astype(jnp.float32)
        wc = jnp.transpose(wf, (0, 2, 3, 1)).reshape(w.shape[0], -1)  # (O, ky,kx,I)->(O, 9I)
        return wc.astype(jnp.bfloat16), bf
    w1c, b1 = fold(raw["w1"], raw["cb1"], raw["g1"], raw["be1"])
    w2c, b2 = fold(raw["w2"], raw["cb2"], raw["g2"], raw["be2"])
    return dict(w1=w1c, b1=b1, w2=w2c, b2=b2)


# Pure-JAX reference (lax.conv).  Uses the same BN fold and the same bf16 MXU
# operands / f32 accumulation as the kernel so the comparison is tight.
def ref_forward(raw, x1, x2, x3, x4, eps=1e-5):
    def fold(w, cb, g, be):
        s = g / jnp.sqrt(1.0 + eps)
        return w * s[:, None, None, None], s * cb + be

    w1f, b1 = fold(raw["w1"], raw["cb1"], raw["g1"], raw["be1"])
    w2f, b2 = fold(raw["w2"], raw["cb2"], raw["g2"], raw["be2"])

    def conv(x, w, d):
        return jax.lax.conv_general_dilated(
            x.astype(jnp.bfloat16), w.astype(jnp.bfloat16),
            window_strides=(1, 1), padding=((d, d), (d, d)), rhs_dilation=(d, d),
            dimension_numbers=("NCHW", "OIHW", "NCHW"),
            preferred_element_type=jnp.float32)

    x1u = jnp.repeat(jnp.repeat(x1, 2, axis=2), 2, axis=3)
    x = jnp.concatenate([x4, x3, x2, x1u], axis=1)
    a = jnp.maximum(conv(x, w1f, D1) + b1[None, :, None, None], 0.0)
    a = jnp.maximum(conv(a, w2f, D2) + b2[None, :, None, None], 0.0)
    return a


if __name__ == "__main__":
    key = jax.random.PRNGKey(0)
    in_ch, out_ch = 16, 8            # concat of 4 tensors with 4 channels each
    N, Hs, Ws = 2, 8, 8              # x1 spatial; x2/x3/x4 are (2*Hs, 2*Ws)

    kx = jax.random.split(key, 5)
    x1 = jax.random.normal(kx[0], (N, 4, Hs, Ws), jnp.float32)
    x2 = jax.random.normal(kx[1], (N, 4, 2 * Hs, 2 * Ws), jnp.float32)
    x3 = jax.random.normal(kx[2], (N, 4, 2 * Hs, 2 * Ws), jnp.float32)
    x4 = jax.random.normal(kx[3], (N, 4, 2 * Hs, 2 * Ws), jnp.float32)

    raw = init_params(kx[4], in_ch, out_ch)
    params = fold_params(raw)

    out = jax.block_until_ready(up4_forward(params, x1, x2, x3, x4))
    expected = jax.block_until_ready(ref_forward(raw, x1, x2, x3, x4))

    assert out.shape == (N, out_ch, 2 * Hs, 2 * Ws), out.shape
    max_err = float(jnp.max(jnp.abs(out - expected)))
    # Kernel and reference use identical bf16 MXU operands with f32 accumulation,
    # so differences are only summation order / one-ulp rounding of the bf16
    # intermediate; 5e-3 is 4x tighter than before and any tap/layout/indexing
    # bug shows up as O(0.1..1) error.
    assert max_err < 5e-3, f"max abs error {max_err}"
    print("KERNEL_OK")
</pallas_src>

<mosaic_0001>
module attributes {stable_mosaic.version = 11 : i64} {
  func.func @kernel(%arg0: i32, %arg1: memref<1x4x16x16xf32, #tpu.memory_space<vmem>>, %arg2: memref<1x4x16x16xf32, #tpu.memory_space<vmem>>, %arg3: memref<1x4x16x16xf32, #tpu.memory_space<vmem>>, %arg4: memref<1x4x8x8xf32, #tpu.memory_space<vmem>>, %arg5: memref<8x144xbf16, #tpu.memory_space<vmem>>, %arg6: memref<8x1xf32, #tpu.memory_space<vmem>>, %arg7: memref<8x72xbf16, #tpu.memory_space<vmem>>, %arg8: memref<8x1xf32, #tpu.memory_space<vmem>>, %arg9: memref<1x352xf32, #tpu.memory_space<vmem>>, %arg10: memref<1x8x256xf32, #tpu.memory_space<vmem>>, %arg11: memref<16x444xbf16, #tpu.memory_space<vmem>>, %arg12: memref<4x16x16xbf16, #tpu.memory_space<vmem>>) attributes {dimension_semantics = [#tpu.dimension_semantics<parallel>], iteration_bounds = array<i64: 2>, scalar_prefetch = 0 : i64, scratch_operands = 2 : i64, tpu.core_type = #tpu.core_type<tc>, window_params = [{transform_indices = @transform_0, window_bounds = array<i64: 1, 4, 16, 16>}, {transform_indices = @transform_1, window_bounds = array<i64: 1, 4, 16, 16>}, {transform_indices = @transform_2, window_bounds = array<i64: 1, 4, 16, 16>}, {transform_indices = @transform_3, window_bounds = array<i64: 1, 4, 8, 8>}, {pipeline_mode = #tpu.pipeline_mode<synchronous>, transform_indices = @transform_4, window_bounds = array<i64: 8, 144>}, {pipeline_mode = #tpu.pipeline_mode<synchronous>, transform_indices = @transform_5, window_bounds = array<i64: 8, 1>}, {pipeline_mode = #tpu.pipeline_mode<synchronous>, transform_indices = @transform_6, window_bounds = array<i64: 8, 72>}, {pipeline_mode = #tpu.pipeline_mode<synchronous>, transform_indices = @transform_7, window_bounds = array<i64: 8, 1>}, {pipeline_mode = #tpu.pipeline_mode<synchronous>, transform_indices = @transform_8, window_bounds = array<i64: 1, 352>}, {transform_indices = @transform_9, window_bounds = array<i64: 1, 8, 256>}]} {
    %0 = tpu.iota {dimensions = array<i32: 0>} : vector<16x8xi32>
    %1 = tpu.iota {dimensions = array<i32: 1>} : vector<16x8xi32>
    %c2_i32 = arith.constant 2 : i32
    %2 = vector.broadcast %c2_i32 : i32 to vector<16x8xi32>
    %3 = arith.muli %2, %1 : vector<16x8xi32>
    %4 = arith.cmpi eq, %3, %0 : vector<16x8xi32>
    %c2_i32_0 = arith.constant 2 : i32
    %5 = vector.broadcast %c2_i32_0 : i32 to vector<16x8xi32>
    %6 = arith.muli %5, %1 : vector<16x8xi32>
    %c1_i32 = arith.constant 1 : i32
    %7 = vector.broadcast %c1_i32 : i32 to vector<16x8xi32>
    %8 = arith.addi %6, %7 : vector<16x8xi32>
    %9 = arith.cmpi eq, %8, %0 : vector<16x8xi32>
    %10 = arith.ori %4, %9 : vector<16x8xi1>
    %cst = arith.constant 1.000000e+00 : f32
    %cst_1 = arith.constant 0.000000e+00 : f32
    %11 = vector.broadcast %cst : f32 to vector<16x8xf32>
    %12 = vector.broadcast %cst_1 : f32 to vector<16x8xf32>
    %13 = arith.select %10, %11, %12 : vector<16x8xi1>, vector<16x8xf32>
    %14 = tpu.iota {dimensions = array<i32: 0>} : vector<8x16xi32>
    %15 = tpu.iota {dimensions = array<i32: 1>} : vector<8x16xi32>
    %c2_i32_2 = arith.constant 2 : i32
    %16 = vector.broadcast %c2_i32_2 : i32 to vector<8x16xi32>
    %17 = arith.muli %16, %14 : vector<8x16xi32>
    %18 = arith.cmpi eq, %17, %15 : vector<8x16xi32>
    %c2_i32_3 = arith.constant 2 : i32
    %19 = vector.broadcast %c2_i32_3 : i32 to vector<8x16xi32>
    %20 = arith.muli %19, %14 : vector<8x16xi32>
    %c1_i32_4 = arith.constant 1 : i32
    %21 = vector.broadcast %c1_i32_4 : i32 to vector<8x16xi32>
    %22 = arith.addi %20, %21 : vector<8x16xi32>
    %23 = arith.cmpi eq, %22, %15 : vector<8x16xi32>
    %24 = arith.ori %18, %23 : vector<8x16xi1>
    %cst_5 = arith.constant 1.000000e+00 : f32
    %cst_6 = arith.constant 0.000000e+00 : f32
    %25 = vector.broadcast %cst_5 : f32 to vector<8x16xf32>
    %26 = vector.broadcast %cst_6 : f32 to vector<8x16xf32>
    %27 = arith.select %24, %25, %26 : vector<8x16xi1>, vector<8x16xf32>
    %c0 = arith.constant 0 : index
    %c0_7 = arith.constant 0 : index
    %c0_8 = arith.constant 0 : index
    %c0_9 = arith.constant 0 : index
    %28 = vector.load %arg4[%c0, %c0_7, %c0_8, %c0_9] : memref<1x4x8x8xf32, #tpu.memory_space<vmem>>, vector<1x1x8x8xf32>
    %29 = vector.shape_cast %28 : vector<1x1x8x8xf32> to vector<8x8xf32>
    %cst_10 = arith.constant dense<0.000000e+00> : vector<16x8xf32>
    %30 = tpu.matmul %13, %29, %cst_10 {dimension_numbers = #tpu.dot_dimension_numbers<[1], [0], [0], [1], [0, 0, 1, 1], [], []>} : vector<16x8xf32>, vector<8x8xf32>, vector<16x8xf32> -> vector<16x8xf32>
    %cst_11 = arith.constant dense<0.000000e+00> : vector<16x16xf32>
    %31 = tpu.matmul %30, %27, %cst_11 {dimension_numbers = #tpu.dot_dimension_numbers<[1], [0], [0], [1], [0, 0, 1, 1], [], []>} : vector<16x8xf32>, vector<8x16xf32>, vector<16x16xf32> -> vector<16x16xf32>
    %32 = arith.truncf %31 : vector<16x16xf32> to vector<16x16xbf16>
    %c0_12 = arith.constant 0 : index
    %c0_13 = arith.constant 0 : index
    %c0_14 = arith.constant 0 : index
    %33 = vector.load %arg12[%c0_12, %c0_13, %c0_14] : memref<4x16x16xbf16, #tpu.memory_space<vmem>>, vector<1x16x16xbf16>
    %34 = vector.shape_cast %33 : vector<1x16x16xbf16> to vector<16x16xbf16>
    %35 = vector.shape_cast %32 : vector<16x16xbf16> to vector<1x16x16xbf16>
    tpu.vector_store %arg12[%c0_12, %c0_13, %c0_14], %35 {strides = array<i32>} : memref<4x16x16xbf16, #tpu.memory_space<vmem>>, vector<1x16x16xbf16>,
    %c0_15 = arith.constant 0 : index
    %c1 = arith.constant 1 : index
    %c0_16 = arith.constant 0 : index
    %c0_17 = arith.constant 0 : index
    %36 = vector.load %arg4[%c0_15, %c1, %c0_16, %c0_17] : memref<1x4x8x8xf32, #tpu.memory_space<vmem>>, vector<1x1x8x8xf32>
    %37 = vector.shape_cast %36 : vector<1x1x8x8xf32> to vector<8x8xf32>
    %cst_18 = arith.constant dense<0.000000e+00> : vector<16x8xf32>
    %38 = tpu.matmul %13, %37, %cst_18 {dimension_numbers = #tpu.dot_dimension_numbers<[1], [0], [0], [1], [0, 0, 1, 1], [], []>} : vector<16x8xf32>, vector<8x8xf32>, vector<16x8xf32> -> vector<16x8xf32>
    %cst_19 = arith.constant dense<0.000000e+00> : vector<16x16xf32>
    %39 = tpu.matmul %38, %27, %cst_19 {dimension_numbers = #tpu.dot_dimension_numbers<[1], [0], [0], [1], [0, 0, 1, 1], [], []>} : vector<16x8xf32>, vector<8x16xf32>, vector<16x16xf32> -> vector<16x16xf32>
    %40 = arith.truncf %39 : vector<16x16xf32> to vector<16x16xbf16>
    %c1_20 = arith.constant 1 : index
    %c0_21 = arith.constant 0 : index
    %c0_22 = arith.constant 0 : index
    %41 = vector.load %arg12[%c1_20, %c0_21, %c0_22] : memref<4x16x16xbf16, #tpu.memory_space<vmem>>, vector<1x16x16xbf16>
    %42 = vector.shape_cast %41 : vector<1x16x16xbf16> to vector<16x16xbf16>
    %43 = vector.shape_cast %40 : vector<16x16xbf16> to vector<1x16x16xbf16>
    tpu.vector_store %arg12[%c1_20, %c0_21, %c0_22], %43 {strides = array<i32>} : memref<4x16x16xbf16, #tpu.memory_space<vmem>>, vector<1x16x16xbf16>,
    %c0_23 = arith.constant 0 : index
    %c2 = arith.constant 2 : index
    %c0_24 = arith.constant 0 : index
    %c0_25 = arith.constant 0 : index
    %44 = vector.load %arg4[%c0_23, %c2, %c0_24, %c0_25] : memref<1x4x8x8xf32, #tpu.memory_space<vmem>>, vector<1x1x8x8xf32>
    %45 = vector.shape_cast %44 : vector<1x1x8x8xf32> to vector<8x8xf32>
    %cst_26 = arith.constant dense<0.000000e+00> : vector<16x8xf32>
    %46 = tpu.matmul %13, %45, %cst_26 {dimension_numbers = #tpu.dot_dimension_numbers<[1], [0], [0], [1], [0, 0, 1, 1], [], []>} : vector<16x8xf32>, vector<8x8xf32>, vector<16x8xf32> -> vector<16x8xf32>
    %cst_27 = arith.constant dense<0.000000e+00> : vector<16x16xf32>
    %47 = tpu.matmul %46, %27, %cst_27 {dimension_numbers = #tpu.dot_dimension_numbers<[1], [0], [0], [1], [0, 0, 1, 1], [], []>} : vector<16x8xf32>, vector<8x16xf32>, vector<16x16xf32> -> vector<16x16xf32>
    %48 = arith.truncf %47 : vector<16x16xf32> to vector<16x16xbf16>
    %c2_28 = arith.constant 2 : index
    %c0_29 = arith.constant 0 : index
    %c0_30 = arith.constant 0 : index
    %49 = vector.load %arg12[%c2_28, %c0_29, %c0_30] : memref<4x16x16xbf16, #tpu.memory_space<vmem>>, vector<1x16x16xbf16>
    %50 = vector.shape_cast %49 : vector<1x16x16xbf16> to vector<16x16xbf16>
    %51 = vector.shape_cast %48 : vector<16x16xbf16> to vector<1x16x16xbf16>
    tpu.vector_store %arg12[%c2_28, %c0_29, %c0_30], %51 {strides = array<i32>} : memref<4x16x16xbf16, #tpu.memory_space<vmem>>, vector<1x16x16xbf16>,
    %c0_31 = arith.constant 0 : index
    %c3 = arith.constant 3 : index
    %c0_32 = arith.constant 0 : index
    %c0_33 = arith.constant 0 : index
    %52 = vector.load %arg4[%c0_31, %c3, %c0_32, %c0_33] : memref<1x4x8x8xf32, #tpu.memory_space<vmem>>, vector<1x1x8x8xf32>
    %53 = vector.shape_cast %52 : vector<1x1x8x8xf32> to vector<8x8xf32>
    %cst_34 = arith.constant dense<0.000000e+00> : vector<16x8xf32>
    %54 = tpu.matmul %13, %53, %cst_34 {dimension_numbers = #tpu.dot_dimension_numbers<[1], [0], [0], [1], [0, 0, 1, 1], [], []>} : vector<16x8xf32>, vector<8x8xf32>, vector<16x8xf32> -> vector<16x8xf32>
    %cst_35 = arith.constant dense<0.000000e+00> : vector<16x16xf32>
    %55 = tpu.matmul %54, %27, %cst_35 {dimension_numbers = #tpu.dot_dimension_numbers<[1], [0], [0], [1], [0, 0, 1, 1], [], []>} : vector<16x8xf32>, vector<8x16xf32>, vector<16x16xf32> -> vector<16x16xf32>
    %56 = arith.truncf %55 : vector<16x16xf32> to vector<16x16xbf16>
    %c3_36 = arith.constant 3 : index
    %c0_37 = arith.constant 0 : index
    %c0_38 = arith.constant 0 : index
    %57 = vector.load %arg12[%c3_36, %c0_37, %c0_38] : memref<4x16x16xbf16, #tpu.memory_space<vmem>>, vector<1x16x16xbf16>
    %58 = vector.shape_cast %57 : vector<1x16x16xbf16> to vector<16x16xbf16>
    %59 = vector.shape_cast %56 : vector<16x16xbf16> to vector<1x16x16xbf16>
    tpu.vector_store %arg12[%c3_36, %c0_37, %c0_38], %59 {strides = array<i32>} : memref<4x16x16xbf16, #tpu.memory_space<vmem>>, vector<1x16x16xbf16>,
    %cst_39 = arith.constant 0.000000e+00 : bf16
    %60 = vector.broadcast %cst_39 : bf16 to vector<16x444xbf16>
    %c0_40 = arith.constant 0 : index
    %c0_41 = arith.constant 0 : index
    %61 = vector.load %arg11[%c0_40, %c0_41] : memref<16x444xbf16, #tpu.memory_space<vmem>>, vector<16x444xbf16>
    tpu.vector_store %arg11[%c0_40, %c0_41], %60 {strides = array<i32>} : memref<16x444xbf16, #tpu.memory_space<vmem>>, vector<16x444xbf16>,
    %c0_42 = arith.constant 0 : index
    %c0_43 = arith.constant 0 : index
    %c0_44 = arith.constant 0 : index
    %c0_45 = arith.constant 0 : index
    %62 = vector.load %arg1[%c0_42, %c0_43, %c0_44, %c0_45] : memref<1x4x16x16xf32, #tpu.memory_space<vmem>>, vector<1x4x1x16xf32>
    %63 = vector.shape_cast %62 : vector<1x4x1x16xf32> to vector<4x16xf32>
    %64 = arith.truncf %63 : vector<4x16xf32> to vector<4x16xbf16>
    %c0_46 = arith.constant 0 : index
    %c49 = arith.constant 49 : index
    %65 = vector.load %arg11[%c0_46, %c49] : memref<16x444xbf16, #tpu.memory_space<vmem>>, vector<4x16xbf16>
    tpu.vector_store %arg11[%c0_46, %c49], %64 {strides = array<i32>} : memref<16x444xbf16, #tpu.memory_space<vmem>>, vector<4x16xbf16>,
    %c0_47 = arith.constant 0 : index
    %c0_48 = arith.constant 0 : index
    %c0_49 = arith.constant 0 : index
    %c0_50 = arith.constant 0 : index
    %66 = vector.load %arg2[%c0_47, %c0_48, %c0_49, %c0_50] : memref<1x4x16x16xf32, #tpu.memory_space<vmem>>, vector<1x4x1x16xf32>
    %67 = vector.shape_cast %66 : vector<1x4x1x16xf32> to vector<4x16xf32>
    %68 = arith.truncf %67 : vector<4x16xf32> to vector<4x16xbf16>
    %c4 = arith.constant 4 : index
    %c49_51 = arith.constant 49 : index
    %69 = vector.load %arg11[%c4, %c49_51] : memref<16x444xbf16, #tpu.memory_space<vmem>>, vector<4x16xbf16>
    tpu.vector_store %arg11[%c4, %c49_51], %68 {strides = array<i32>} : memref<16x444xbf16, #tpu.memory_space<vmem>>, vector<4x16xbf16>,
    %c0_52 = arith.constant 0 : index
    %c0_53 = arith.constant 0 : index
    %c0_54 = arith.constant 0 : index
    %c0_55 = arith.constant 0 : index
    %70 = vector.load %arg3[%c0_52, %c0_53, %c0_54, %c0_55] : memref<1x4x16x16xf32, #tpu.memory_space<vmem>>, vector<1x4x1x16xf32>
    %71 = vector.shape_cast %70 : vector<1x4x1x16xf32> to vector<4x16xf32>
    %72 = arith.truncf %71 : vector<4x16xf32> to vector<4x16xbf16>
    %c8 = arith.constant 8 : index
    %c49_56 = arith.constant 49 : index
    %73 = vector.load %arg11[%c8, %c49_56] : memref<16x444xbf16, #tpu.memory_space<vmem>>, vector<4x16xbf16>
    tpu.vector_store %arg11[%c8, %c49_56], %72 {strides = array<i32>} : memref<16x444xbf16, #tpu.memory_space<vmem>>, vector<4x16xbf16>,
    %c0_57 = arith.constant 0 : index
    %c0_58 = arith.constant 0 : index
    %c0_59 = arith.constant 0 : index
    %74 = vector.load %arg12[%c0_57, %c0_58, %c0_59] : memref<4x16x16xbf16, #tpu.memory_space<vmem>>, vector<4x1x16xbf16>
    %75 = vector.shape_cast %74 : vector<4x1x16xbf16> to vector<4x16xbf16>
    %c12 = arith.constant 12 : index
    %c49_60 = arith.constant 49 : index
    %76 = vector.load %arg11[%c12, %c49_60] : memref<16x444xbf16, #tpu.memory_space<vmem>>, vector<4x16xbf16>
    tpu.vector_store %arg11[%c12, %c49_60], %75 {strides = array<i32>} : memref<16x444xbf16, #tpu.memory_space<vmem>>, vector<4x16xbf16>,
    %c0_61 = arith.constant 0 : index
    %c0_62 = arith.constant 0 : index
    %c1_63 = arith.constant 1 : index
    %c0_64 = arith.constant 0 : index
    %77 = vector.load %arg1[%c0_61, %c0_62, %c1_63, %c0_64] : memref<1x4x16x16xf32, #tpu.memory_space<vmem>>, vector<1x4x1x16xf32>
    %78 = vector.shape_cast %77 : vector<1x4x1x16xf32> to vector<4x16xf32>
    %79 = arith.truncf %78 : vector<4x16xf32> to vector<4x16xbf16>
    %c0_65 = arith.constant 0 : index
    %c71 = arith.constant 71 : index
    %80 = vector.load %arg11[%c0_65, %c71] : memref<16x444xbf16, #tpu.memory_space<vmem>>, vector<4x16xbf16>
    tpu.vector_store %arg11[%c0_65, %c71], %79 {strides = array<i32>} : memref<16x444xbf16, #tpu.memory_space<vmem>>, vector<4x16xbf16>,
    %c0_66 = arith.constant 0 : index
    %c0_67 = arith.constant 0 : index
    %c1_68 = arith.constant 1 : index
    %c0_69 = arith.constant 0 : index
    %81 = vector.load %arg2[%c0_66, %c0_67, %c1_68, %c0_69] : memref<1x4x16x16xf32, #tpu.memory_space<vmem>>, vector<1x4x1x16xf32>
    %82 = vector.shape_cast %81 : vector<1x4x1x16xf32> to vector<4x16xf32>
    %83 = arith.truncf %82 : vector<4x16xf32> to vector<4x16xbf16>
    %c4_70 = arith.constant 4 : index
    %c71_71 = arith.constant 71 : index
    %84 = vector.load %arg11[%c4_70, %c71_71] : memref<16x444xbf16, #tpu.memory_space<vmem>>, vector<4x16xbf16>
    tpu.vector_store %arg11[%c4_70, %c71_71], %83 {strides = array<i32>} : memref<16x444xbf16, #tpu.memory_space<vmem>>, vector<4x16xbf16>,
    %c0_72 = arith.constant 0 : index
    %c0_73 = arith.constant 0 : index
    %c1_74 = arith.constant 1 : index
    %c0_75 = arith.constant 0 : index
    %85 = vector.load %arg3[%c0_72, %c0_73, %c1_74, %c0_75] : memref<1x4x16x16xf32, #tpu.memory_space<vmem>>, vector<1x4x1x16xf32>
    %86 = vector.shape_cast %85 : vector<1x4x1x16xf32> to vector<4x16xf32>
    %87 = arith.truncf %86 : vector<4x16xf32> to vector<4x16xbf16>
    %c8_76 = arith.constant 8 : index
    %c71_77 = arith.constant 71 : index
    %88 = vector.load %arg11[%c8_76, %c71_77] : memref<16x444xbf16, #tpu.memory_space<vmem>>, vector<4x16xbf16>
    tpu.vector_store %arg11[%c8_76, %c71_77], %87 {strides = array<i32>} : memref<16x444xbf16, #tpu.memory_space<vmem>>, vector<4x16xbf16>,
    %c0_78 = arith.constant 0 : index
    %c1_79 = arith.constant 1 : index
    %c0_80 = arith.constant 0 : index
    %89 = vector.load %arg12[%c0_78, %c1_79, %c0_80] : memref<4x16x16xbf16, #tpu.memory_space<vmem>>, vector<4x1x16xbf16>
    %90 = vector.shape_cast %89 : vector<4x1x16xbf16> to vector<4x16xbf16>
    %c12_81 = arith.constant 12 : index
    %c71_82 = arith.constant 71 : index
    %91 = vector.load %arg11[%c12_81, %c71_82] : memref<16x444xbf16, #tpu.memory_space<vmem>>, vector<4x16xbf16>
    tpu.vector_store %arg11[%c12_81, %c71_82], %90 {strides = array<i32>} : memref<16x444xbf16, #tpu.memory_space<vmem>>, vector<4x16xbf16>,
    %c0_83 = arith.constant 0 : index
    %c0_84 = arith.constant 0 : index
    %c2_85 = arith.constant 2 : index
    %c0_86 = arith.constant 0 : index
    %92 = vector.load %arg1[%c0_83, %c0_84, %c2_85, %c0_86] : memref<1x4x16x16xf32, #tpu.memory_space<vmem>>, vector<1x4x1x16xf32>
    %93 = vector.shape_cast %92 : vector<1x4x1x16xf32> to vector<4x16xf32>
    %94 = arith.truncf %93 : vector<4x16xf32> to vector<4x16xbf16>
    %c0_87 = arith.constant 0 : index
    %c93 = arith.constant 93 : index
    %95 = vector.load %arg11[%c0_87, %c93] : memref<16x444xbf16, #tpu.memory_space<vmem>>, vector<4x16xbf16>
    tpu.vector_store %arg11[%c0_87, %c93], %94 {strides = array<i32>} : memref<16x444xbf16, #tpu.memory_space<vmem>>, vector<4x16xbf16>,
    %c0_88 = arith.constant 0 : index
    %c0_89 = arith.constant 0 : index
    %c2_90 = arith.constant 2 : index
    %c0_91 = arith.constant 0 : index
    %96 = vector.load %arg2[%c0_88, %c0_89, %c2_90, %c0_91] : memref<1x4x16x16xf32, #tpu.memory_space<vmem>>, vector<1x4x1x16xf32>
    %97 = vector.shape_cast %96 : vector<1x4x1x16xf32> to vector<4x16xf32>
    %98 = arith.truncf %97 : vector<4x16xf32> to vector<4x16xbf16>
    %c4_92 = arith.constant 4 : index
    %c93_93 = arith.constant 93 : index
    %99 = vector.load %arg11[%c4_92, %c93_93] : memref<16x444xbf16, #tpu.memory_space<vmem>>, vector<4x16xbf16>
    tpu.vector_store %arg11[%c4_92, %c93_93], %98 {strides = array<i32>} : memref<16x444xbf16, #tpu.memory_space<vmem>>, vector<4x16xbf16>,
    %c0_94 = arith.constant 0 : index
    %c0_95 = arith.constant 0 : index
    %c2_96 = arith.constant 2 : index
    %c0_97 = arith.constant 0 : index
    %100 = vector.load %arg3[%c0_94, %c0_95, %c2_96, %c0_97] : memref<1x4x16x16xf32, #tpu.memory_space<vmem>>, vector<1x4x1x16xf32>
    %101 = vector.shape_cast %100 : vector<1x4x1x16xf32> to vector<4x16xf32>
    %102 = arith.truncf %101 : vector<4x16xf32> to vector<4x16xbf16>
    %c8_98 = arith.constant 8 : index
    %c93_99 = arith.constant 93 : index
    %103 = vector.load %arg11[%c8_98, %c93_99] : memref<16x444xbf16, #tpu.memory_space<vmem>>, vector<4x16xbf16>
    tpu.vector_store %arg11[%c8_98, %c93_99], %102 {strides = array<i32>} : memref<16x444xbf16, #tpu.memory_space<vmem>>, vector<4x16xbf16>,
    %c0_100 = arith.constant 0 : index
    %c2_101 = arith.constant 2 : index
    %c0_102 = arith.constant 0 : index
    %104 = vector.load %arg12[%c0_100, %c2_101, %c0_102] : memref<4x16x16xbf16, #tpu.memory_space<vmem>>, vector<4x1x16xbf16>
    %105 = vector.shape_cast %104 : vector<4x1x16xbf16> to vector<4x16xbf16>
    %c12_103 = arith.constant 12 : index
    %c93_104 = arith.constant 93 : index
    %106 = vector.load %arg11[%c12_103, %c93_104] : memref<16x444xbf16, #tpu.memory_space<vmem>>, vector<4x16xbf16>
    tpu.vector_store %arg11[%c12_103, %c93_104], %105 {strides = array<i32>} : memref<16x444xbf16, #tpu.memory_space<vmem>>, vector<4x16xbf16>,
    %c0_105 = arith.constant 0 : index
    %c0_106 = arith.constant 0 : index
    %c3_107 = arith.constant 3 : index
    %c0_108 = arith.constant 0 : index
    %107 = vector.load %arg1[%c0_105, %c0_106, %c3_107, %c0_108] : memref<1x4x16x16xf32, #tpu.memory_space<vmem>>, vector<1x4x1x16xf32>
    %108 = vector.shape_cast %107 : vector<1x4x1x16xf32> to vector<4x16xf32>
    %109 = arith.truncf %108 : vector<4x16xf32> to vector<4x16xbf16>
    %c0_109 = arith.constant 0 : index
    %c115 = arith.constant 115 : index
    %110 = vector.load %arg11[%c0_109, %c115] : memref<16x444xbf16, #tpu.memory_space<vmem>>, vector<4x16xbf16>
    tpu.vector_store %arg11[%c0_109, %c115], %109 {strides = array<i32>} : memref<16x444xbf16, #tpu.memory_space<vmem>>, vector<4x16xbf16>,
    %c0_110 = arith.constant 0 : index
    %c0_111 = arith.constant 0 : index
    %c3_112 = arith.constant 3 : index
    %c0_113 = arith.constant 0 : index
    %111 = vector.load %arg2[%c0_110, %c0_111, %c3_112, %c0_113] : memref<1x4x16x16xf32, #tpu.memory_space<vmem>>, vector<1x4x1x16xf32>
    %112 = vector.shape_cast %111 : vector<1x4x1x16xf32> to vector<4x16xf32>
    %113 = arith.truncf %112 : vector<4x16xf32> to vector<4x16xbf16>
    %c4_114 = arith.constant 4 : index
    %c115_115 = arith.constant 115 : index
    %114 = vector.load %arg11[%c4_114, %c115_115] : memref<16x444xbf16, #tpu.memory_space<vmem>>, vector<4x16xbf16>
    tpu.vector_store %arg11[%c4_114, %c115_115], %113 {strides = array<i32>} : memref<16x444xbf16, #tpu.memory_space<vmem>>, vector<4x16xbf16>,
    %c0_116 = arith.constant 0 : index
    %c0_117 = arith.constant 0 : index
    %c3_118 = arith.constant 3 : index
    %c0_119 = arith.constant 0 : index
    %115 = vector.load %arg3[%c0_116, %c0_117, %c3_118, %c0_119] : memref<1x4x16x16xf32, #tpu.memory_space<vmem>>, vector<1x4x1x16xf32>
    %116 = vector.shape_cast %115 : vector<1x4x1x16xf32> to vector<4x16xf32>
    %117 = arith.truncf %116 : vector<4x16xf32> to vector<4x16xbf16>
    %c8_120 = arith.constant 8 : index
    %c115_121 = arith.constant 115 : index
    %118 = vector.load %arg11[%c8_120, %c115_121] : memref<16x444xbf16, #tpu.memory_space<vmem>>, vector<4x16xbf16>
    tpu.vector_store %arg11[%c8_120, %c115_121], %117 {strides = array<i32>} : memref<16x444xbf16, #tpu.memory_space<vmem>>, vector<4x16xbf16>,
    %c0_122 = arith.constant 0 : index
    %c3_123 = arith.constant 3 : index
    %c0_124 = arith.constant 0 : index
    %119 = vector.load %arg12[%c0_122, %c3_123, %c0_124] : memref<4x16x16xbf16, #tpu.memory_space<vmem>>, vector<4x1x16xbf16>
    %120 = vector.shape_cast %119 : vector<4x1x16xbf16> to vector<4x16xbf16>
    %c12_125 = arith.constant 12 : index
    %c115_126 = arith.constant 115 : index
    %121 = vector.load %arg11[%c12_125, %c115_126] : memref<16x444xbf16, #tpu.memory_space<vmem>>, vector<4x16xbf16>
    tpu.vector_store %arg11[%c12_125, %c115_126], %120 {strides = array<i32>} : memref<16x444xbf16, #tpu.memory_space<vmem>>, vector<4x16xbf16>,
    %c0_127 = arith.constant 0 : index
    %c0_128 = arith.constant 0 : index
    %c4_129 = arith.constant 4 : index
    %c0_130 = arith.constant 0 : index
    %122 = vector.load %arg1[%c0_127, %c0_128, %c4_129, %c0_130] : memref<1x4x16x16xf32, #tpu.memory_space<vmem>>, vector<1x4x1x16xf32>
    %123 = vector.shape_cast %122 : vector<1x4x1x16xf32> to vector<4x16xf32>
    %124 = arith.truncf %123 : vector<4x16xf32> to vector<4x16xbf16>
    %c0_131 = arith.constant 0 : index
    %c137 = arith.constant 137 : index
    %125 = vector.load %arg11[%c0_131, %c137] : memref<16x444xbf16, #tpu.memory_space<vmem>>, vector<4x16xbf16>
    tpu.vector_store %arg11[%c0_131, %c137], %124 {strides = array<i32>} : memref<16x444xbf16, #tpu.memory_space<vmem>>, vector<4x16xbf16>,
    %c0_132 = arith.constant 0 : index
    %c0_133 = arith.constant 0 : index
    %c4_134 = arith.constant 4 : index
    %c0_135 = arith.constant 0 : index
    %126 = vector.load %arg2[%c0_132, %c0_133, %c4_134, %c0_135] : memref<1x4x16x16xf32, #tpu.memory_space<vmem>>, vector<1x4x1x16xf32>
    %127 = vector.shape_cast %126 : vector<1x4x1x16xf32> to vector<4x16xf32>
    %128 = arith.truncf %127 : vector<4x16xf32> to vector<4x16xbf16>
    %c4_136 = arith.constant 4 : index
    %c137_137 = arith.constant 137 : index
    %129 = vector.load %arg11[%c4_136, %c137_137] : memref<16x444xbf16, #tpu.memory_space<vmem>>, vector<4x16xbf16>
    tpu.vector_store %arg11[%c4_136, %c137_137], %128 {strides = array<i32>} : memref<16x444xbf16, #tpu.memory_space<vmem>>, vector<4x16xbf16>,
    %c0_138 = arith.constant 0 : index
    %c0_139 = arith.constant 0 : index
    %c4_140 = arith.constant 4 : index
    %c0_141 = arith.constant 0 : index
    %130 = vector.load %arg3[%c0_138, %c0_139, %c4_140, %c0_141] : memref<1x4x16x16xf32, #tpu.memory_space<vmem>>, vector<1x4x1x16xf32>
    %131 = vector.shape_cast %130 : vector<1x4x1x16xf32> to vector<4x16xf32>
    %132 = arith.truncf %131 : vector<4x16xf32> to vector<4x16xbf16>
    %c8_142 = arith.constant 8 : index
    %c137_143 = arith.constant 137 : index
    %133 = vector.load %arg11[%c8_142, %c137_143] : memref<16x444xbf16, #tpu.memory_space<vmem>>, vector<4x16xbf16>
    tpu.vector_store %arg11[%c8_142, %c137_143], %132 {strides = array<i32>} : memref<16x444xbf16, #tpu.memory_space<vmem>>, vector<4x16xbf16>,
    %c0_144 = arith.constant 0 : index
    %c4_145 = arith.constant 4 : index
    %c0_146 = arith.constant 0 : index
    %134 = vector.load %arg12[%c0_144, %c4_145, %c0_146] : memref<4x16x16xbf16, #tpu.memory_space<vmem>>, vector<4x1x16xbf16>
    %135 = vector.shape_cast %134 : vector<4x1x16xbf16> to vector<4x16xbf16>
    %c12_147 = arith.constant 12 : index
    %c137_148 = arith.constant 137 : index
    %136 = vector.load %arg11[%c12_147, %c137_148] : memref<16x444xbf16, #tpu.memory_space<vmem>>, vector<4x16xbf16>
    tpu.vector_store %arg11[%c12_147, %c137_148], %135 {strides = array<i32>} : memref<16x444xbf16, #tpu.memory_space<vmem>>, vector<4x16xbf16>,
    %c0_149 = arith.constant 0 : index
    %c0_150 = arith.constant 0 : index
    %c5 = arith.constant 5 : index
    %c0_151 = arith.constant 0 : index
    %137 = vector.load %arg1[%c0_149, %c0_150, %c5, %c0_151] : memref<1x4x16x16xf32, #tpu.memory_space<vmem>>, vector<1x4x1x16xf32>
    %138 = vector.shape_cast %137 : vector<1x4x1x16xf32> to vector<4x16xf32>
    %139 = arith.truncf %138 : vector<4x16xf32> to vector<4x16xbf16>
    %c0_152 = arith.constant 0 : index
    %c159 = arith.constant 159 : index
    %140 = vector.load %arg11[%c0_152, %c159] : memref<16x444xbf16, #tpu.memory_space<vmem>>, vector<4x16xbf16>
    tpu.vector_store %arg11[%c0_152, %c159], %139 {strides = array<i32>} : memref<16x444xbf16, #tpu.memory_space<vmem>>, vector<4x16xbf16>,
    %c0_153 = arith.constant 0 : index
    %c0_154 = arith.constant 0 : index
    %c5_155 = arith.constant 5 : index
    %c0_156 = arith.constant 0 : index
    %141 = vector.load %arg2[%c0_153, %c0_154, %c5_155, %c0_156] : memref<1x4x16x16xf32, #tpu.memory_space<vmem>>, vector<1x4x1x16xf32>
    %142 = vector.shape_cast %141 : vector<1x4x1x16xf32> to vector<4x16xf32>
    %143 = arith.truncf %142 : vector<4x16xf32> to vector<4x16xbf16>
    %c4_157 = arith.constant 4 : index
    %c159_158 = arith.constant 159 : index
    %144 = vector.load %arg11[%c4_157, %c159_158] : memref<16x444xbf16, #tpu.memory_space<vmem>>, vector<4x16xbf16>
    tpu.vector_store %arg11[%c4_157, %c159_158], %143 {strides = array<i32>} : memref<16x444xbf16, #tpu.memory_space<vmem>>, vector<4x16xbf16>,
    %c0_159 = arith.constant 0 : index
    %c0_160 = arith.constant 0 : index
    %c5_161 = arith.constant 5 : index
    %c0_162 = arith.constant 0 : index
    %145 = vector.load %arg3[%c0_159, %c0_160, %c5_161, %c0_162] : memref<1x4x16x16xf32, #tpu.memory_space<vmem>>, vector<1x4x1x16xf32>
    %146 = vector.shape_cast %145 : vector<1x4x1x16xf32> to vector<4x16xf32>
    %147 = arith.truncf %146 : vector<4x16xf32> to vector<4x16xbf16>
    %c8_163 = arith.constant 8 : index
    %c159_164 = arith.constant 159 : index
    %148 = vector.load %arg11[%c8_163, %c159_164] : memref<16x444xbf16, #tpu.memory_space<vmem>>, vector<4x16xbf16>
    tpu.vector_store %arg11[%c8_163, %c159_164], %147 {strides = array<i32>} : memref<16x444xbf16, #tpu.memory_space<vmem>>, vector<4x16xbf16>,
    %c0_165 = arith.constant 0 : index
    %c5_166 = arith.constant 5 : index
    %c0_167 = arith.constant 0 : index
    %149 = vector.load %arg12[%c0_165, %c5_166, %c0_167] : memref<4x16x16xbf16, #tpu.memory_space<vmem>>, vector<4x1x16xbf16>
    %150 = vector.shape_cast %149 : vector<4x1x16xbf16> to vector<4x16xbf16>
    %c12_168 = arith.constant 12 : index
    %c159_169 = arith.constant 159 : index
    %151 = vector.load %arg11[%c12_168, %c159_169] : memref<16x444xbf16, #tpu.memory_space<vmem>>, vector<4x16xbf16>
    tpu.vector_store %arg11[%c12_168, %c159_169], %150 {strides = array<i32>} : memref<16x444xbf16, #tpu.memory_space<vmem>>, vector<4x16xbf16>,
    %c0_170 = arith.constant 0 : index
    %c0_171 = arith.constant 0 : index
    %c6 = arith.constant 6 : index
    %c0_172 = arith.constant 0 : index
    %152 = vector.load %arg1[%c0_170, %c0_171, %c6, %c0_172] : memref<1x4x16x16xf32, #tpu.memory_space<vmem>>, vector<1x4x1x16xf32>
    %153 = vector.shape_cast %152 : vector<1x4x1x16xf32> to vector<4x16xf32>
    %154 = arith.truncf %153 : vector<4x16xf32> to vector<4x16xbf16>
    %c0_173 = arith.constant 0 : index
    %c181 = arith.constant 181 : index
    %155 = vector.load %arg11[%c0_173, %c181] : memref<16x444xbf16, #tpu.memory_space<vmem>>, vector<4x16xbf16>
    tpu.vector_store %arg11[%c0_173, %c181], %154 {strides = array<i32>} : memref<16x444xbf16, #tpu.memory_space<vmem>>, vector<4x16xbf16>,
    %c0_174 = arith.constant 0 : index
    %c0_175 = arith.constant 0 : index
    %c6_176 = arith.constant 6 : index
    %c0_177 = arith.constant 0 : index
    %156 = vector.load %arg2[%c0_174, %c0_175, %c6_176, %c0_177] : memref<1x4x16x16xf32, #tpu.memory_space<vmem>>, vector<1x4x1x16xf32>
    %157 = vector.shape_cast %156 : vector<1x4x1x16xf32> to vector<4x16xf32>
    %158 = arith.truncf %157 : vector<4x16xf32> to vector<4x16xbf16>
    %c4_178 = arith.constant 4 : index
    %c181_179 = arith.constant 181 : index
    %159 = vector.load %arg11[%c4_178, %c181_179] : memref<16x444xbf16, #tpu.memory_space<vmem>>, vector<4x16xbf16>
    tpu.vector_store %arg11[%c4_178, %c181_179], %158 {strides = array<i32>} : memref<16x444xbf16, #tpu.memory_space<vmem>>, vector<4x16xbf16>,
    %c0_180 = arith.constant 0 : index
    %c0_181 = arith.constant 0 : index
    %c6_182 = arith.constant 6 : index
    %c0_183 = arith.constant 0 : index
    %160 = vector.load %arg3[%c0_180, %c0_181, %c6_182, %c0_183] : memref<1x4x16x16xf32, #tpu.memory_space<vmem>>, vector<1x4x1x16xf32>
    %161 = vector.shape_cast %160 : vector<1x4x1x16xf32> to vector<4x16xf32>
    %162 = arith.truncf %161 : vector<4x16xf32> to vector<4x16xbf16>
    %c8_184 = arith.constant 8 : index
    %c181_185 = arith.constant 181 : index
    %163 = vector.load %arg11[%c8_184, %c181_185] : memref<16x444xbf16, #tpu.memory_space<vmem>>, vector<4x16xbf16>
    tpu.vector_store %arg11[%c8_184, %c181_185], %162 {strides = array<i32>} : memref<16x444xbf16, #tpu.memory_space<vmem>>, vector<4x16xbf16>,
    %c0_186 = arith.constant 0 : index
    %c6_187 = arith.constant 6 : index
    %c0_188 = arith.constant 0 : index
    %164 = vector.load %arg12[%c0_186, %c6_187, %c0_188] : memref<4x16x16xbf16, #tpu.memory_space<vmem>>, vector<4x1x16xbf16>
    %165 = vector.shape_cast %164 : vector<4x1x16xbf16> to vector<4x16xbf16>
    %c12_189 = arith.constant 12 : index
    %c181_190 = arith.constant 181 : index
    %166 = vector.load %arg11[%c12_189, %c181_190] : memref<16x444xbf16, #tpu.memory_space<vmem>>, vector<4x16xbf16>
    tpu.vector_store %arg11[%c12_189, %c181_190], %165 {strides = array<i32>} : memref<16x444xbf16, #tpu.memory_space<vmem>>, vector<4x16xbf16>,
    %c0_191 = arith.constant 0 : index
    %c0_192 = arith.constant 0 : index
    %c7 = arith.constant 7 : index
    %c0_193 = arith.constant 0 : index
    %167 = vector.load %arg1[%c0_191, %c0_192, %c7, %c0_193] : memref<1x4x16x16xf32, #tpu.memory_space<vmem>>, vector<1x4x1x16xf32>
    %168 = vector.shape_cast %167 : vector<1x4x1x16xf32> to vector<4x16xf32>
    %169 = arith.truncf %168 : vector<4x16xf32> to vector<4x16xbf16>
    %c0_194 = arith.constant 0 : index
    %c203 = arith.constant 203 : index
    %170 = vector.load %arg11[%c0_194, %c203] : memref<16x444xbf16, #tpu.memory_space<vmem>>, vector<4x16xbf16>
    tpu.vector_store %arg11[%c0_194, %c203], %169 {strides = array<i32>} : memref<16x444xbf16, #tpu.memory_space<vmem>>, vector<4x16xbf16>,
    %c0_195 = arith.constant 0 : index
    %c0_196 = arith.constant 0 : index
    %c7_197 = arith.constant 7 : index
    %c0_198 = arith.constant 0 : index
    %171 = vector.load %arg2[%c0_195, %c0_196, %c7_197, %c0_198] : memref<1x4x16x16xf32, #tpu.memory_space<vmem>>, vector<1x4x1x16xf32>
    %172 = vector.shape_cast %171 : vector<1x4x1x16xf32> to vector<4x16xf32>
    %173 = arith.truncf %172 : vector<4x16xf32> to vector<4x16xbf16>
    %c4_199 = arith.constant 4 : index
    %c203_200 = arith.constant 203 : index
    %174 = vector.load %arg11[%c4_199, %c203_200] : memref<16x444xbf16, #tpu.memory_space<vmem>>, vector<4x16xbf16>
    tpu.vector_store %arg11[%c4_199, %c203_200], %173 {strides = array<i32>} : memref<16x444xbf16, #tpu.memory_space<vmem>>, vector<4x16xbf16>,
    %c0_201 = arith.constant 0 : index
    %c0_202 = arith.constant 0 : index
    %c7_203 = arith.constant 7 : index
    %c0_204 = arith.constant 0 : index
    %175 = vector.load %arg3[%c0_201, %c0_202, %c7_203, %c0_204] : memref<1x4x16x16xf32, #tpu.memory_space<vmem>>, vector<1x4x1x16xf32>
    %176 = vector.shape_cast %175 : vector<1x4x1x16xf32> to vector<4x16xf32>
    %177 = arith.truncf %176 : vector<4x16xf32> to vector<4x16xbf16>
    %c8_205 = arith.constant 8 : index
    %c203_206 = arith.constant 203 : index
    %178 = vector.load %arg11[%c8_205, %c203_206] : memref<16x444xbf16, #tpu.memory_space<vmem>>, vector<4x16xbf16>
    tpu.vector_store %arg11[%c8_205, %c203_206], %177 {strides = array<i32>} : memref<16x444xbf16, #tpu.memory_space<vmem>>, vector<4x16xbf16>,
    %c0_207 = arith.constant 0 : index
    %c7_208 = arith.constant 7 : index
    %c0_209 = arith.constant 0 : index
    %179 = vector.load %arg12[%c0_207, %c7_208, %c0_209] : memref<4x16x16xbf16, #tpu.memory_space<vmem>>, vector<4x1x16xbf16>
    %180 = vector.shape_cast %179 : vector<4x1x16xbf16> to vector<4x16xbf16>
    %c12_210 = arith.constant 12 : index
    %c203_211 = arith.constant 203 : index
    %181 = vector.load %arg11[%c12_210, %c203_211] : memref<16x444xbf16, #tpu.memory_space<vmem>>, vector<4x16xbf16>
    tpu.vector_store %arg11[%c12_210, %c203_211], %180 {strides = array<i32>} : memref<16x444xbf16, #tpu.memory_space<vmem>>, vector<4x16xbf16>,
    %c0_212 = arith.constant 0 : index
    %c0_213 = arith.constant 0 : index
    %c8_214 = arith.constant 8 : index
    %c0_215 = arith.constant 0 : index
    %182 = vector.load %arg1[%c0_212, %c0_213, %c8_214, %c0_215] : memref<1x4x16x16xf32, #tpu.memory_space<vmem>>, vector<1x4x1x16xf32>
    %183 = vector.shape_cast %182 : vector<1x4x1x16xf32> to vector<4x16xf32>
    %184 = arith.truncf %183 : vector<4x16xf32> to vector<4x16xbf16>
    %c0_216 = arith.constant 0 : index
    %c225 = arith.constant 225 : index
    %185 = vector.load %arg11[%c0_216, %c225] : memref<16x444xbf16, #tpu.memory_space<vmem>>, vector<4x16xbf16>
    tpu.vector_store %arg11[%c0_216, %c225], %184 {strides = array<i32>} : memref<16x444xbf16, #tpu.memory_space<vmem>>, vector<4x16xbf16>,
    %c0_217 = arith.constant 0 : index
    %c0_218 = arith.constant 0 : index
    %c8_219 = arith.constant 8 : index
    %c0_220 = arith.constant 0 : index
    %186 = vector.load %arg2[%c0_217, %c0_218, %c8_219, %c0_220] : memref<1x4x16x16xf32, #tpu.memory_space<vmem>>, vector<1x4x1x16xf32>
    %187 = vector.shape_cast %186 : vector<1x4x1x16xf32> to vector<4x16xf32>
    %188 = arith.truncf %187 : vector<4x16xf32> to vector<4x16xbf16>
    %c4_221 = arith.constant 4 : index
    %c225_222 = arith.constant 225 : index
    %189 = vector.load %arg11[%c4_221, %c225_222] : memref<16x444xbf16, #tpu.memory_space<vmem>>, vector<4x16xbf16>
    tpu.vector_store %arg11[%c4_221, %c225_222], %188 {strides = array<i32>} : memref<16x444xbf16, #tpu.memory_space<vmem>>, vector<4x16xbf16>,
    %c0_223 = arith.constant 0 : index
    %c0_224 = arith.constant 0 : index
    %c8_225 = arith.constant 8 : index
    %c0_226 = arith.constant 0 : index
    %190 = vector.load %arg3[%c0_223, %c0_224, %c8_225, %c0_226] : memref<1x4x16x16xf32, #tpu.memory_space<vmem>>, vector<1x4x1x16xf32>
    %191 = vector.shape_cast %190 : vector<1x4x1x16xf32> to vector<4x16xf32>
    %192 = arith.truncf %191 : vector<4x16xf32> to vector<4x16xbf16>
    %c8_227 = arith.constant 8 : index
    %c225_228 = arith.constant 225 : index
    %193 = vector.load %arg11[%c8_227, %c225_228] : memref<16x444xbf16, #tpu.memory_space<vmem>>, vector<4x16xbf16>
    tpu.vector_store %arg11[%c8_227, %c225_228], %192 {strides = array<i32>} : memref<16x444xbf16, #tpu.memory_space<vmem>>, vector<4x16xbf16>,
    %c0_229 = arith.constant 0 : index
    %c8_230 = arith.constant 8 : index
    %c0_231 = arith.constant 0 : index
    %194 = vector.load %arg12[%c0_229, %c8_230, %c0_231] : memref<4x16x16xbf16, #tpu.memory_space<vmem>>, vector<4x1x16xbf16>
    %195 = vector.shape_cast %194 : vector<4x1x16xbf16> to vector<4x16xbf16>
    %c12_232 = arith.constant 12 : index
    %c225_233 = arith.constant 225 : index
    %196 = vector.load %arg11[%c12_232, %c225_233] : memref<16x444xbf16, #tpu.memory_space<vmem>>, vector<4x16xbf16>
    tpu.vector_store %arg11[%c12_232, %c225_233], %195 {strides = array<i32>} : memref<16x444xbf16, #tpu.memory_space<vmem>>, vector<4x16xbf16>,
    %c0_234 = arith.constant 0 : index
    %c0_235 = arith.constant 0 : index
    %c9 = arith.constant 9 : index
    %c0_236 = arith.constant 0 : index
    %197 = vector.load %arg1[%c0_234, %c0_235, %c9, %c0_236] : memref<1x4x16x16xf32, #tpu.memory_space<vmem>>, vector<1x4x1x16xf32>
    %198 = vector.shape_cast %197 : vector<1x4x1x16xf32> to vector<4x16xf32>
    %199 = arith.truncf %198 : vector<4x16xf32> to vector<4x16xbf16>
    %c0_237 = arith.constant 0 : index
    %c247 = arith.constant 247 : index
    %200 = vector.load %arg11[%c0_237, %c247] : memref<16x444xbf16, #tpu.memory_space<vmem>>, vector<4x16xbf16>
    tpu.vector_store %arg11[%c0_237, %c247], %199 {strides = array<i32>} : memref<16x444xbf16, #tpu.memory_space<vmem>>, vector<4x16xbf16>,
    %c0_238 = arith.constant 0 : index
    %c0_239 = arith.constant 0 : index
    %c9_240 = arith.constant 9 : index
    %c0_241 = arith.constant 0 : index
    %201 = vector.load %arg2[%c0_238, %c0_239, %c9_240, %c0_241] : memref<1x4x16x16xf32, #tpu.memory_space<vmem>>, vector<1x4x1x16xf32>
    %202 = vector.shape_cast %201 : vector<1x4x1x16xf32> to vector<4x16xf32>
    %203 = arith.truncf %202 : vector<4x16xf32> to vector<4x16xbf16>
    %c4_242 = arith.constant 4 : index
    %c247_243 = arith.constant 247 : index
    %204 = vector.load %arg11[%c4_242, %c247_243] : memref<16x444xbf16, #tpu.memory_space<vmem>>, vector<4x16xbf16>
    tpu.vector_store %arg11[%c4_242, %c247_243], %203 {strides = array<i32>} : memref<16x444xbf16, #tpu.memory_space<vmem>>, vector<4x16xbf16>,
    %c0_244 = arith.constant 0 : index
    %c0_245 = arith.constant 0 : index
    %c9_246 = arith.constant 9 : index
    %c0_247 = arith.constant 0 : index
    %205 = vector.load %arg3[%c0_244, %c0_245, %c9_246, %c0_247] : memref<1x4x16x16xf32, #tpu.memory_space<vmem>>, vector<1x4x1x16xf32>
    %206 = vector.shape_cast %205 : vector<1x4x1x16xf32> to vector<4x16xf32>
    %207 = arith.truncf %206 : vector<4x16xf32> to vector<4x16xbf16>
    %c8_248 = arith.constant 8 : index
    %c247_249 = arith.constant 247 : index
    %208 = vector.load %arg11[%c8_248, %c247_249] : memref<16x444xbf16, #tpu.memory_space<vmem>>, vector<4x16xbf16>
    tpu.vector_store %arg11[%c8_248, %c247_249], %207 {strides = array<i32>} : memref<16x444xbf16, #tpu.memory_space<vmem>>, vector<4x16xbf16>,
    %c0_250 = arith.constant 0 : index
    %c9_251 = arith.constant 9 : index
    %c0_252 = arith.constant 0 : index
    %209 = vector.load %arg12[%c0_250, %c9_251, %c0_252] : memref<4x16x16xbf16, #tpu.memory_space<vmem>>, vector<4x1x16xbf16>
    %210 = vector.shape_cast %209 : vector<4x1x16xbf16> to vector<4x16xbf16>
    %c12_253 = arith.constant 12 : index
    %c247_254 = arith.constant 247 : index
    %211 = vector.load %arg11[%c12_253, %c247_254] : memref<16x444xbf16, #tpu.memory_space<vmem>>, vector<4x16xbf16>
    tpu.vector_store %arg11[%c12_253, %c247_254], %210 {strides = array<i32>} : memref<16x444xbf16, #tpu.memory_space<vmem>>, vector<4x16xbf16>,
    %c0_255 = arith.constant 0 : index
    %c0_256 = arith.constant 0 : index
    %c10 = arith.constant 10 : index
    %c0_257 = arith.constant 0 : index
    %212 = vector.load %arg1[%c0_255, %c0_256, %c10, %c0_257] : memref<1x4x16x16xf32, #tpu.memory_space<vmem>>, vector<1x4x1x16xf32>
    %213 = vector.shape_cast %212 : vector<1x4x1x16xf32> to vector<4x16xf32>
    %214 = arith.truncf %213 : vector<4x16xf32> to vector<4x16xbf16>
    %c0_258 = arith.constant 0 : index
    %c269 = arith.constant 269 : index
    %215 = vector.load %arg11[%c0_258, %c269] : memref<16x444xbf16, #tpu.memory_space<vmem>>, vector<4x16xbf16>
    tpu.vector_store %arg11[%c0_258, %c269], %214 {strides = array<i32>} : memref<16x444xbf16, #tpu.memory_space<vmem>>, vector<4x16xbf16>,
    %c0_259 = arith.constant 0 : index
    %c0_260 = arith.constant 0 : index
    %c10_261 = arith.constant 10 : index
    %c0_262 = arith.constant 0 : index
    %216 = vector.load %arg2[%c0_259, %c0_260, %c10_261, %c0_262] : memref<1x4x16x16xf32, #tpu.memory_space<vmem>>, vector<1x4x1x16xf32>
    %217 = vector.shape_cast %216 : vector<1x4x1x16xf32> to vector<4x16xf32>
    %218 = arith.truncf %217 : vector<4x16xf32> to vector<4x16xbf16>
    %c4_263 = arith.constant 4 : index
    %c269_264 = arith.constant 269 : index
    %219 = vector.load %arg11[%c4_263, %c269_264] : memref<16x444xbf16, #tpu.memory_space<vmem>>, vector<4x16xbf16>
    tpu.vector_store %arg11[%c4_263, %c269_264], %218 {strides = array<i32>} : memref<16x444xbf16, #tpu.memory_space<vmem>>, vector<4x16xbf16>,
    %c0_265 = arith.constant 0 : index
    %c0_266 = arith.constant 0 : index
    %c10_267 = arith.constant 10 : index
    %c0_268 = arith.constant 0 : index
    %220 = vector.load %arg3[%c0_265, %c0_266, %c10_267, %c0_268] : memref<1x4x16x16xf32, #tpu.memory_space<vmem>>, vector<1x4x1x16xf32>
    %221 = vector.shape_cast %220 : vector<1x4x1x16xf32> to vector<4x16xf32>
    %222 = arith.truncf %221 : vector<4x16xf32> to vector<4x16xbf16>
    %c8_269 = arith.constant 8 : index
    %c269_270 = arith.constant 269 : index
    %223 = vector.load %arg11[%c8_269, %c269_270] : memref<16x444xbf16, #tpu.memory_space<vmem>>, vector<4x16xbf16>
    tpu.vector_store %arg11[%c8_269, %c269_270], %222 {strides = array<i32>} : memref<16x444xbf16, #tpu.memory_space<vmem>>, vector<4x16xbf16>,
    %c0_271 = arith.constant 0 : index
    %c10_272 = arith.constant 10 : index
    %c0_273 = arith.constant 0 : index
    %224 = vector.load %arg12[%c0_271, %c10_272, %c0_273] : memref<4x16x16xbf16, #tpu.memory_space<vmem>>, vector<4x1x16xbf16>
    %225 = vector.shape_cast %224 : vector<4x1x16xbf16> to vector<4x16xbf16>
    %c12_274 = arith.constant 12 : index
    %c269_275 = arith.constant 269 : index
    %226 = vector.load %arg11[%c12_274, %c269_275] : memref<16x444xbf16, #tpu.memory_space<vmem>>, vector<4x16xbf16>
    tpu.vector_store %arg11[%c12_274, %c269_275], %225 {strides = array<i32>} : memref<16x444xbf16, #tpu.memory_space<vmem>>, vector<4x16xbf16>,
    %c0_276 = arith.constant 0 : index
    %c0_277 = arith.constant 0 : index
    %c11 = arith.constant 11 : index
    %c0_278 = arith.constant 0 : index
    %227 = vector.load %arg1[%c0_276, %c0_277, %c11, %c0_278] : memref<1x4x16x16xf32, #tpu.memory_space<vmem>>, vector<1x4x1x16xf32>
    %228 = vector.shape_cast %227 : vector<1x4x1x16xf32> to vector<4x16xf32>
    %229 = arith.truncf %228 : vector<4x16xf32> to vector<4x16xbf16>
    %c0_279 = arith.constant 0 : index
    %c291 = arith.constant 291 : index
    %230 = vector.load %arg11[%c0_279, %c291] : memref<16x444xbf16, #tpu.memory_space<vmem>>, vector<4x16xbf16>
    tpu.vector_store %arg11[%c0_279, %c291], %229 {strides = array<i32>} : memref<16x444xbf16, #tpu.memory_space<vmem>>, vector<4x16xbf16>,
    %c0_280 = arith.constant 0 : index
    %c0_281 = arith.constant 0 : index
    %c11_282 = arith.constant 11 : index
    %c0_283 = arith.constant 0 : index
    %231 = vector.load %arg2[%c0_280, %c0_281, %c11_282, %c0_283] : memref<1x4x16x16xf32, #tpu.memory_space<vmem>>, vector<1x4x1x16xf32>
    %232 = vector.shape_cast %231 : vector<1x4x1x16xf32> to vector<4x16xf32>
    %233 = arith.truncf %232 : vector<4x16xf32> to vector<4x16xbf16>
    %c4_284 = arith.constant 4 : index
    %c291_285 = arith.constant 291 : index
    %234 = vector.load %arg11[%c4_284, %c291_285] : memref<16x444xbf16, #tpu.memory_space<vmem>>, vector<4x16xbf16>
    tpu.vector_store %arg11[%c4_284, %c291_285], %233 {strides = array<i32>} : memref<16x444xbf16, #tpu.memory_space<vmem>>, vector<4x16xbf16>,
    %c0_286 = arith.constant 0 : index
    %c0_287 = arith.constant 0 : index
    %c11_288 = arith.constant 11 : index
    %c0_289 = arith.constant 0 : index
    %235 = vector.load %arg3[%c0_286, %c0_287, %c11_288, %c0_289] : memref<1x4x16x16xf32, #tpu.memory_space<vmem>>, vector<1x4x1x16xf32>
    %236 = vector.shape_cast %235 : vector<1x4x1x16xf32> to vector<4x16xf32>
    %237 = arith.truncf %236 : vector<4x16xf32> to vector<4x16xbf16>
    %c8_290 = arith.constant 8 : index
    %c291_291 = arith.constant 291 : index
    %238 = vector.load %arg11[%c8_290, %c291_291] : memref<16x444xbf16, #tpu.memory_space<vmem>>, vector<4x16xbf16>
    tpu.vector_store %arg11[%c8_290, %c291_291], %237 {strides = array<i32>} : memref<16x444xbf16, #tpu.memory_space<vmem>>, vector<4x16xbf16>,
    %c0_292 = arith.constant 0 : index
    %c11_293 = arith.constant 11 : index
    %c0_294 = arith.constant 0 : index
    %239 = vector.load %arg12[%c0_292, %c11_293, %c0_294] : memref<4x16x16xbf16, #tpu.memory_space<vmem>>, vector<4x1x16xbf16>
    %240 = vector.shape_cast %239 : vector<4x1x16xbf16> to vector<4x16xbf16>
    %c12_295 = arith.constant 12 : index
    %c291_296 = arith.constant 291 : index
    %241 = vector.load %arg11[%c12_295, %c291_296] : memref<16x444xbf16, #tpu.memory_space<vmem>>, vector<4x16xbf16>
    tpu.vector_store %arg11[%c12_295, %c291_296], %240 {strides = array<i32>} : memref<16x444xbf16, #tpu.memory_space<vmem>>, vector<4x16xbf16>,
    %c0_297 = arith.constant 0 : index
    %c0_298 = arith.constant 0 : index
    %c12_299 = arith.constant 12 : index
    %c0_300 = arith.constant 0 : index
    %242 = vector.load %arg1[%c0_297, %c0_298, %c12_299, %c0_300] : memref<1x4x16x16xf32, #tpu.memory_space<vmem>>, vector<1x4x1x16xf32>
    %243 = vector.shape_cast %242 : vector<1x4x1x16xf32> to vector<4x16xf32>
    %244 = arith.truncf %243 : vector<4x16xf32> to vector<4x16xbf16>
    %c0_301 = arith.constant 0 : index
    %c313 = arith.constant 313 : index
    %245 = vector.load %arg11[%c0_301, %c313] : memref<16x444xbf16, #tpu.memory_space<vmem>>, vector<4x16xbf16>
    tpu.vector_store %arg11[%c0_301, %c313], %244 {strides = array<i32>} : memref<16x444xbf16, #tpu.memory_space<vmem>>, vector<4x16xbf16>,
    %c0_302 = arith.constant 0 : index
    %c0_303 = arith.constant 0 : index
    %c12_304 = arith.constant 12 : index
    %c0_305 = arith.constant 0 : index
    %246 = vector.load %arg2[%c0_302, %c0_303, %c12_304, %c0_305] : memref<1x4x16x16xf32, #tpu.memory_space<vmem>>, vector<1x4x1x16xf32>
    %247 = vector.shape_cast %246 : vector<1x4x1x16xf32> to vector<4x16xf32>
    %248 = arith.truncf %247 : vector<4x16xf32> to vector<4x16xbf16>
    %c4_306 = arith.constant 4 : index
    %c313_307 = arith.constant 313 : index
    %249 = vector.load %arg11[%c4_306, %c313_307] : memref<16x444xbf16, #tpu.memory_space<vmem>>, vector<4x16xbf16>
    tpu.vector_store %arg11[%c4_306, %c313_307], %248 {strides = array<i32>} : memref<16x444xbf16, #tpu.memory_space<vmem>>, vector<4x16xbf16>,
    %c0_308 = arith.constant 0 : index
    %c0_309 = arith.constant 0 : index
    %c12_310 = arith.constant 12 : index
    %c0_311 = arith.constant 0 : index
    %250 = vector.load %arg3[%c0_308, %c0_309, %c12_310, %c0_311] : memref<1x4x16x16xf32, #tpu.memory_space<vmem>>, vector<1x4x1x16xf32>
    %251 = vector.shape_cast %250 : vector<1x4x1x16xf32> to vector<4x16xf32>
    %252 = arith.truncf %251 : vector<4x16xf32> to vector<4x16xbf16>
    %c8_312 = arith.constant 8 : index
    %c313_313 = arith.constant 313 : index
    %253 = vector.load %arg11[%c8_312, %c313_313] : memref<16x444xbf16, #tpu.memory_space<vmem>>, vector<4x16xbf16>
    tpu.vector_store %arg11[%c8_312, %c313_313], %252 {strides = array<i32>} : memref<16x444xbf16, #tpu.memory_space<vmem>>, vector<4x16xbf16>,
    %c0_314 = arith.constant 0 : index
    %c12_315 = arith.constant 12 : index
    %c0_316 = arith.constant 0 : index
    %254 = vector.load %arg12[%c0_314, %c12_315, %c0_316] : memref<4x16x16xbf16, #tpu.memory_space<vmem>>, vector<4x1x16xbf16>
    %255 = vector.shape_cast %254 : vector<4x1x16xbf16> to vector<4x16xbf16>
    %c12_317 = arith.constant 12 : index
    %c313_318 = arith.constant 313 : index
    %256 = vector.load %arg11[%c12_317, %c313_318] : memref<16x444xbf16, #tpu.memory_space<vmem>>, vector<4x16xbf16>
    tpu.vector_store %arg11[%c12_317, %c313_318], %255 {strides = array<i32>} : memref<16x444xbf16, #tpu.memory_space<vmem>>, vector<4x16xbf16>,
    %c0_319 = arith.constant 0 : index
    %c0_320 = arith.constant 0 : index
    %c13 = arith.constant 13 : index
    %c0_321 = arith.constant 0 : index
    %257 = vector.load %arg1[%c0_319, %c0_320, %c13, %c0_321] : memref<1x4x16x16xf32, #tpu.memory_space<vmem>>, vector<1x4x1x16xf32>
    %258 = vector.shape_cast %257 : vector<1x4x1x16xf32> to vector<4x16xf32>
    %259 = arith.truncf %258 : vector<4x16xf32> to vector<4x16xbf16>
    %c0_322 = arith.constant 0 : index
    %c335 = arith.constant 335 : index
    %260 = vector.load %arg11[%c0_322, %c335] : memref<16x444xbf16, #tpu.memory_space<vmem>>, vector<4x16xbf16>
    tpu.vector_store %arg11[%c0_322, %c335], %259 {strides = array<i32>} : memref<16x444xbf16, #tpu.memory_space<vmem>>, vector<4x16xbf16>,
    %c0_323 = arith.constant 0 : index
    %c0_324 = arith.constant 0 : index
    %c13_325 = arith.constant 13 : index
    %c0_326 = arith.constant 0 : index
    %261 = vector.load %arg2[%c0_323, %c0_324, %c13_325, %c0_326] : memref<1x4x16x16xf32, #tpu.memory_space<vmem>>, vector<1x4x1x16xf32>
    %262 = vector.shape_cast %261 : vector<1x4x1x16xf32> to vector<4x16xf32>
    %263 = arith.truncf %262 : vector<4x16xf32> to vector<4x16xbf16>
    %c4_327 = arith.constant 4 : index
    %c335_328 = arith.constant 335 : index
    %264 = vector.load %arg11[%c4_327, %c335_328] : memref<16x444xbf16, #tpu.memory_space<vmem>>, vector<4x16xbf16>
    tpu.vector_store %arg11[%c4_327, %c335_328], %263 {strides = array<i32>} : memref<16x444xbf16, #tpu.memory_space<vmem>>, vector<4x16xbf16>,
    %c0_329 = arith.constant 0 : index
    %c0_330 = arith.constant 0 : index
    %c13_331 = arith.constant 13 : index
    %c0_332 = arith.constant 0 : index
    %265 = vector.load %arg3[%c0_329, %c0_330, %c13_331, %c0_332] : memref<1x4x16x16xf32, #tpu.memory_space<vmem>>, vector<1x4x1x16xf32>
    %266 = vector.shape_cast %265 : vector<1x4x1x16xf32> to vector<4x16xf32>
    %267 = arith.truncf %266 : vector<4x16xf32> to vector<4x16xbf16>
    %c8_333 = arith.constant 8 : index
    %c335_334 = arith.constant 335 : index
    %268 = vector.load %arg11[%c8_333, %c335_334] : memref<16x444xbf16, #tpu.memory_space<vmem>>, vector<4x16xbf16>
    tpu.vector_store %arg11[%c8_333, %c335_334], %267 {strides = array<i32>} : memref<16x444xbf16, #tpu.memory_space<vmem>>, vector<4x16xbf16>,
    %c0_335 = arith.constant 0 : index
    %c13_336 = arith.constant 13 : index
    %c0_337 = arith.constant 0 : index
    %269 = vector.load %arg12[%c0_335, %c13_336, %c0_337] : memref<4x16x16xbf16, #tpu.memory_space<vmem>>, vector<4x1x16xbf16>
    %270 = vector.shape_cast %269 : vector<4x1x16xbf16> to vector<4x16xbf16>
    %c12_338 = arith.constant 12 : index
    %c335_339 = arith.constant 335 : index
    %271 = vector.load %arg11[%c12_338, %c335_339] : memref<16x444xbf16, #tpu.memory_space<vmem>>, vector<4x16xbf16>
    tpu.vector_store %arg11[%c12_338, %c335_339], %270 {strides = array<i32>} : memref<16x444xbf16, #tpu.memory_space<vmem>>, vector<4x16xbf16>,
    %c0_340 = arith.constant 0 : index
    %c0_341 = arith.constant 0 : index
    %c14 = arith.constant 14 : index
    %c0_342 = arith.constant 0 : index
    %272 = vector.load %arg1[%c0_340, %c0_341, %c14, %c0_342] : memref<1x4x16x16xf32, #tpu.memory_space<vmem>>, vector<1x4x1x16xf32>
    %273 = vector.shape_cast %272 : vector<1x4x1x16xf32> to vector<4x16xf32>
    %274 = arith.truncf %273 : vector<4x16xf32> to vector<4x16xbf16>
    %c0_343 = arith.constant 0 : index
    %c357 = arith.constant 357 : index
    %275 = vector.load %arg11[%c0_343, %c357] : memref<16x444xbf16, #tpu.memory_space<vmem>>, vector<4x16xbf16>
    tpu.vector_store %arg11[%c0_343, %c357], %274 {strides = array<i32>} : memref<16x444xbf16, #tpu.memory_space<vmem>>, vector<4x16xbf16>,
    %c0_344 = arith.constant 0 : index
    %c0_345 = arith.constant 0 : index
    %c14_346 = arith.constant 14 : index
    %c0_347 = arith.constant 0 : index
    %276 = vector.load %arg2[%c0_344, %c0_345, %c14_346, %c0_347] : memref<1x4x16x16xf32, #tpu.memory_space<vmem>>, vector<1x4x1x16xf32>
    %277 = vector.shape_cast %276 : vector<1x4x1x16xf32> to vector<4x16xf32>
    %278 = arith.truncf %277 : vector<4x16xf32> to vector<4x16xbf16>
    %c4_348 = arith.constant 4 : index
    %c357_349 = arith.constant 357 : index
    %279 = vector.load %arg11[%c4_348, %c357_349] : memref<16x444xbf16, #tpu.memory_space<vmem>>, vector<4x16xbf16>
    tpu.vector_store %arg11[%c4_348, %c357_349], %278 {strides = array<i32>} : memref<16x444xbf16, #tpu.memory_space<vmem>>, vector<4x16xbf16>,
    %c0_350 = arith.constant 0 : index
    %c0_351 = arith.constant 0 : index
    %c14_352 = arith.constant 14 : index
    %c0_353 = arith.constant 0 : index
    %280 = vector.load %arg3[%c0_350, %c0_351, %c14_352, %c0_353] : memref<1x4x16x16xf32, #tpu.memory_space<vmem>>, vector<1x4x1x16xf32>
    %281 = vector.shape_cast %280 : vector<1x4x1x16xf32> to vector<4x16xf32>
    %282 = arith.truncf %281 : vector<4x16xf32> to vector<4x16xbf16>
    %c8_354 = arith.constant 8 : index
    %c357_355 = arith.constant 357 : index
    %283 = vector.load %arg11[%c8_354, %c357_355] : memref<16x444xbf16, #tpu.memory_space<vmem>>, vector<4x16xbf16>
    tpu.vector_store %arg11[%c8_354, %c357_355], %282 {strides = array<i32>} : memref<16x444xbf16, #tpu.memory_space<vmem>>, vector<4x16xbf16>,
    %c0_356 = arith.constant 0 : index
    %c14_357 = arith.constant 14 : index
    %c0_358 = arith.constant 0 : index
    %284 = vector.load %arg12[%c0_356, %c14_357, %c0_358] : memref<4x16x16xbf16, #tpu.memory_space<vmem>>, vector<4x1x16xbf16>
    %285 = vector.shape_cast %284 : vector<4x1x16xbf16> to vector<4x16xbf16>
    %c12_359 = arith.constant 12 : index
    %c357_360 = arith.constant 357 : index
    %286 = vector.load %arg11[%c12_359, %c357_360] : memref<16x444xbf16, #tpu.memory_space<vmem>>, vector<4x16xbf16>
    tpu.vector_store %arg11[%c12_359, %c357_360], %285 {strides = array<i32>} : memref<16x444xbf16, #tpu.memory_space<vmem>>, vector<4x16xbf16>,
    %c0_361 = arith.constant 0 : index
    %c0_362 = arith.constant 0 : index
    %c15 = arith.constant 15 : index
    %c0_363 = arith.constant 0 : index
    %287 = vector.load %arg1[%c0_361, %c0_362, %c15, %c0_363] : memref<1x4x16x16xf32, #tpu.memory_space<vmem>>, vector<1x4x1x16xf32>
    %288 = vector.shape_cast %287 : vector<1x4x1x16xf32> to vector<4x16xf32>
    %289 = arith.truncf %288 : vector<4x16xf32> to vector<4x16xbf16>
    %c0_364 = arith.constant 0 : index
    %c379 = arith.constant 379 : index
    %290 = vector.load %arg11[%c0_364, %c379] : memref<16x444xbf16, #tpu.memory_space<vmem>>, vector<4x16xbf16>
    tpu.vector_store %arg11[%c0_364, %c379], %289 {strides = array<i32>} : memref<16x444xbf16, #tpu.memory_space<vmem>>, vector<4x16xbf16>,
    %c0_365 = arith.constant 0 : index
    %c0_366 = arith.constant 0 : index
    %c15_367 = arith.constant 15 : index
    %c0_368 = arith.constant 0 : index
    %291 = vector.load %arg2[%c0_365, %c0_366, %c15_367, %c0_368] : memref<1x4x16x16xf32, #tpu.memory_space<vmem>>, vector<1x4x1x16xf32>
    %292 = vector.shape_cast %291 : vector<1x4x1x16xf32> to vector<4x16xf32>
    %293 = arith.truncf %292 : vector<4x16xf32> to vector<4x16xbf16>
    %c4_369 = arith.constant 4 : index
    %c379_370 = arith.constant 379 : index
    %294 = vector.load %arg11[%c4_369, %c379_370] : memref<16x444xbf16, #tpu.memory_space<vmem>>, vector<4x16xbf16>
    tpu.vector_store %arg11[%c4_369, %c379_370], %293 {strides = array<i32>} : memref<16x444xbf16, #tpu.memory_space<vmem>>, vector<4x16xbf16>,
    %c0_371 = arith.constant 0 : index
    %c0_372 = arith.constant 0 : index
    %c15_373 = arith.constant 15 : index
    %c0_374 = arith.constant 0 : index
    %295 = vector.load %arg3[%c0_371, %c0_372, %c15_373, %c0_374] : memref<1x4x16x16xf32, #tpu.memory_space<vmem>>, vector<1x4x1x16xf32>
    %296 = vector.shape_cast %295 : vector<1x4x1x16xf32> to vector<4x16xf32>
    %297 = arith.truncf %296 : vector<4x16xf32> to vector<4x16xbf16>
    %c8_375 = arith.constant 8 : index
    %c379_376 = arith.constant 379 : index
    %298 = vector.load %arg11[%c8_375, %c379_376] : memref<16x444xbf16, #tpu.memory_space<vmem>>, vector<4x16xbf16>
    tpu.vector_store %arg11[%c8_375, %c379_376], %297 {strides = array<i32>} : memref<16x444xbf16, #tpu.memory_space<vmem>>, vector<4x16xbf16>,
    %c0_377 = arith.constant 0 : index
    %c15_378 = arith.constant 15 : index
    %c0_379 = arith.constant 0 : index
    %299 = vector.load %arg12[%c0_377, %c15_378, %c0_379] : memref<4x16x16xbf16, #tpu.memory_space<vmem>>, vector<4x1x16xbf16>
    %300 = vector.shape_cast %299 : vector<4x1x16xbf16> to vector<4x16xbf16>
    %c12_380 = arith.constant 12 : index
    %c379_381 = arith.constant 379 : index
    %301 = vector.load %arg11[%c12_380, %c379_381] : memref<16x444xbf16, #tpu.memory_space<vmem>>, vector<4x16xbf16>
    tpu.vector_store %arg11[%c12_380, %c379_381], %300 {strides = array<i32>} : memref<16x444xbf16, #tpu.memory_space<vmem>>, vector<4x16xbf16>,
    %c0_382 = arith.constant 0 : index
    %c0_383 = arith.constant 0 : index
    %302 = vector.load %arg11[%c0_382, %c0_383] : memref<16x444xbf16, #tpu.memory_space<vmem>>, vector<16x444xbf16>
    %303 = vector.extract_strided_slice %302 {offsets = [0, 0], sizes = [16, 352], strides = [1, 1]} : vector<16x444xbf16> to vector<16x352xbf16>
    %304 = vector.extract_strided_slice %302 {offsets = [0, 2], sizes = [16, 352], strides = [1, 1]} : vector<16x444xbf16> to vector<16x352xbf16>
    %305 = vector.extract_strided_slice %302 {offsets = [0, 4], sizes = [16, 352], strides = [1, 1]} : vector<16x444xbf16> to vector<16x352xbf16>
    %306 = vector.extract_strided_slice %302 {offsets = [0, 44], sizes = [16, 352], strides = [1, 1]} : vector<16x444xbf16> to vector<16x352xbf16>
    %307 = vector.extract_strided_slice %302 {offsets = [0, 46], sizes = [16, 352], strides = [1, 1]} : vector<16x444xbf16> to vector<16x352xbf16>
    %308 = vector.extract_strided_slice %302 {offsets = [0, 48], sizes = [16, 352], strides = [1, 1]} : vector<16x444xbf16> to vector<16x352xbf16>
    %309 = vector.extract_strided_slice %302 {offsets = [0, 88], sizes = [16, 352], strides = [1, 1]} : vector<16x444xbf16> to vector<16x352xbf16>
    %310 = vector.extract_strided_slice %302 {offsets = [0, 90], sizes = [16, 352], strides = [1, 1]} : vector<16x444xbf16> to vector<16x352xbf16>
    %311 = vector.extract_strided_slice %302 {offsets = [0, 92], sizes = [16, 352], strides = [1, 1]} : vector<16x444xbf16> to vector<16x352xbf16>
    %312 = tpu.concatenate %303, %304, %305, %306, %307, %308, %309, %310, %311 in 0 : vector<16x352xbf16>, vector<16x352xbf16>, vector<16x352xbf16>, vector<16x352xbf16>, vector<16x352xbf16>, vector<16x352xbf16>, vector<16x352xbf16>, vector<16x352xbf16>, vector<16x352xbf16> -> vector<144x352xbf16>
    %c0_384 = arith.constant 0 : index
    %c0_385 = arith.constant 0 : index
    %313 = vector.load %arg5[%c0_384, %c0_385] : memref<8x144xbf16, #tpu.memory_space<vmem>>, vector<8x144xbf16>
    %cst_386 = arith.constant dense<0.000000e+00> : vector<8x352xf32>
    %314 = tpu.matmul %313, %312, %cst_386 {dimension_numbers = #tpu.dot_dimension_numbers<[1], [0], [0], [1], [0, 0, 1, 1], [], []>} : vector<8x144xbf16>, vector<144x352xbf16>, vector<8x352xf32> -> vector<8x352xf32>
    %c0_387 = arith.constant 0 : index
    %c0_388 = arith.constant 0 : index
    %315 = vector.load %arg6[%c0_387, %c0_388] : memref<8x1xf32, #tpu.memory_space<vmem>>, vector<8x1xf32>
    %316 = vector.broadcast %315 : vector<8x1xf32> to vector<8x352xf32>
    %317 = arith.addf %314, %316 : vector<8x352xf32>
    %cst_389 = arith.constant 0.000000e+00 : f32
    %318 = vector.broadcast %cst_389 : f32 to vector<8x352xf32>
    %319 = arith.maximumf %317, %318 : vector<8x352xf32>
    %c0_390 = arith.constant 0 : index
    %c0_391 = arith.constant 0 : index
    %320 = vector.load %arg9[%c0_390, %c0_391] : memref<1x352xf32, #tpu.memory_space<vmem>>, vector<1x352xf32>
    %321 = vector.broadcast %320 : vector<1x352xf32> to vector<8x352xf32>
    %322 = arith.mulf %319, %321 : vector<8x352xf32>
    %cst_392 = arith.constant 0.000000e+00 : f32
    %323 = vector.broadcast %cst_392 : f32 to vector<8x69xf32>
    %324 = tpu.concatenate %323, %322, %323 in 1 : vector<8x69xf32>, vector<8x352xf32>, vector<8x69xf32> -> vector<8x490xf32>
    %325 = vector.extract_strided_slice %324 {offsets = [0, 0], sizes = [8, 352], strides = [1, 1]} : vector<8x490xf32> to vector<8x352xf32>
    %326 = vector.extract_strided_slice %324 {offsets = [0, 3], sizes = [8, 352], strides = [1, 1]} : vector<8x490xf32> to vector<8x352xf32>
    %327 = vector.extract_strided_slice %324 {offsets = [0, 6], sizes = [8, 352], strides = [1, 1]} : vector<8x490xf32> to vector<8x352xf32>
    %328 = vector.extract_strided_slice %324 {offsets = [0, 66], sizes = [8, 352], strides = [1, 1]} : vector<8x490xf32> to vector<8x352xf32>
    %329 = vector.extract_strided_slice %324 {offsets = [0, 69], sizes = [8, 352], strides = [1, 1]} : vector<8x490xf32> to vector<8x352xf32>
    %330 = vector.extract_strided_slice %324 {offsets = [0, 72], sizes = [8, 352], strides = [1, 1]} : vector<8x490xf32> to vector<8x352xf32>
    %331 = vector.extract_strided_slice %324 {offsets = [0, 132], sizes = [8, 352], strides = [1, 1]} : vector<8x490xf32> to vector<8x352xf32>
    %332 = vector.extract_strided_slice %324 {offsets = [0, 135], sizes = [8, 352], strides = [1, 1]} : vector<8x490xf32> to vector<8x352xf32>
    %333 = vector.extract_strided_slice %324 {offsets = [0, 138], sizes = [8, 352], strides = [1, 1]} : vector<8x490xf32> to vector<8x352xf32>
    %334 = tpu.concatenate %325, %326, %327, %328, %329, %330, %331, %332, %333 in 0 : vector<8x352xf32>, vector<8x352xf32>, vector<8x352xf32>, vector<8x352xf32>, vector<8x352xf32>, vector<8x352xf32>, vector<8x352xf32>, vector<8x352xf32>, vector<8x352xf32> -> vector<72x352xf32>
    %335 = arith.truncf %334 : vector<72x352xf32> to vector<72x352xbf16>
    %c0_393 = arith.constant 0 : index
    %c0_394 = arith.constant 0 : index
    %336 = vector.load %arg7[%c0_393, %c0_394] : memref<8x72xbf16, #tpu.memory_space<vmem>>, vector<8x72xbf16>
    %cst_395 = arith.constant dense<0.000000e+00> : vector<8x352xf32>
    %337 = tpu.matmul %336, %335, %cst_395 {dimension_numbers = #tpu.dot_dimension_numbers<[1], [0], [0], [1], [0, 0, 1, 1], [], []>} : vector<8x72xbf16>, vector<72x352xbf16>, vector<8x352xf32> -> vector<8x352xf32>
    %c0_396 = arith.constant 0 : index
    %c0_397 = arith.constant 0 : index
    %338 = vector.load %arg8[%c0_396, %c0_397] : memref<8x1xf32, #tpu.memory_space<vmem>>, vector<8x1xf32>
    %339 = vector.broadcast %338 : vector<8x1xf32> to vector<8x352xf32>
    %340 = arith.addf %337, %339 : vector<8x352xf32>
    %cst_398 = arith.constant 0.000000e+00 : f32
    %341 = vector.broadcast %cst_398 : f32 to vector<8x352xf32>
    %342 = arith.maximumf %340, %341 : vector<8x352xf32>
    %343 = vector.extract_strided_slice %342 {offsets = [0, 3], sizes = [8, 16], strides = [1, 1]} : vector<8x352xf32> to vector<8x16xf32>
    %344 = vector.extract_strided_slice %342 {offsets = [0, 25], sizes = [8, 16], strides = [1, 1]} : vector<8x352xf32> to vector<8x16xf32>
    %345 = vector.extract_strided_slice %342 {offsets = [0, 47], sizes = [8, 16], strides = [1, 1]} : vector<8x352xf32> to vector<8x16xf32>
    %346 = vector.extract_strided_slice %342 {offsets = [0, 69], sizes = [8, 16], strides = [1, 1]} : vector<8x352xf32> to vector<8x16xf32>
    %347 = vector.extract_strided_slice %342 {offsets = [0, 91], sizes = [8, 16], strides = [1, 1]} : vector<8x352xf32> to vector<8x16xf32>
    %348 = vector.extract_strided_slice %342 {offsets = [0, 113], sizes = [8, 16], strides = [1, 1]} : vector<8x352xf32> to vector<8x16xf32>
    %349 = vector.extract_strided_slice %342 {offsets = [0, 135], sizes = [8, 16], strides = [1, 1]} : vector<8x352xf32> to vector<8x16xf32>
    %350 = vector.extract_strided_slice %342 {offsets = [0, 157], sizes = [8, 16], strides = [1, 1]} : vector<8x352xf32> to vector<8x16xf32>
    %351 = vector.extract_strided_slice %342 {offsets = [0, 179], sizes = [8, 16], strides = [1, 1]} : vector<8x352xf32> to vector<8x16xf32>
    %352 = vector.extract_strided_slice %342 {offsets = [0, 201], sizes = [8, 16], strides = [1, 1]} : vector<8x352xf32> to vector<8x16xf32>
    %353 = vector.extract_strided_slice %342 {offsets = [0, 223], sizes = [8, 16], strides = [1, 1]} : vector<8x352xf32> to vector<8x16xf32>
    %354 = vector.extract_strided_slice %342 {offsets = [0, 245], sizes = [8, 16], strides = [1, 1]} : vector<8x352xf32> to vector<8x16xf32>
    %355 = vector.extract_strided_slice %342 {offsets = [0, 267], sizes = [8, 16], strides = [1, 1]} : vector<8x352xf32> to vector<8x16xf32>
    %356 = vector.extract_strided_slice %342 {offsets = [0, 289], sizes = [8, 16], strides = [1, 1]} : vector<8x352xf32> to vector<8x16xf32>
    %357 = vector.extract_strided_slice %342 {offsets = [0, 311], sizes = [8, 16], strides = [1, 1]} : vector<8x352xf32> to vector<8x16xf32>
    %358 = vector.extract_strided_slice %342 {offsets = [0, 333], sizes = [8, 16], strides = [1, 1]} : vector<8x352xf32> to vector<8x16xf32>
    %359 = tpu.concatenate %343, %344, %345, %346, %347, %348, %349, %350, %351, %352, %353, %354, %355, %356, %357, %358 in 1 : vector<8x16xf32>, vector<8x16xf32>, vector<8x16xf32>, vector<8x16xf32>, vector<8x16xf32>, vector<8x16xf32>, vector<8x16xf32>, vector<8x16xf32>, vector<8x16xf32>, vector<8x16xf32>, vector<8x16xf32>, vector<8x16xf32>, vector<8x16xf32>, vector<8x16xf32>, vector<8x16xf32>, vector<8x16xf32> -> vector<8x256xf32>
    %c0_399 = arith.constant 0 : index
    %c0_400 = arith.constant 0 : index
    %c0_401 = arith.constant 0 : index
    %360 = vector.load %arg10[%c0_399, %c0_400, %c0_401] : memref<1x8x256xf32, #tpu.memory_space<vmem>>, vector<1x8x256xf32>
    %361 = vector.shape_cast %360 : vector<1x8x256xf32> to vector<8x256xf32>
    %362 = vector.shape_cast %359 : vector<8x256xf32> to vector<1x8x256xf32>
    tpu.vector_store %arg10[%c0_399, %c0_400, %c0_401], %362 {strides = array<i32>} : memref<1x8x256xf32, #tpu.memory_space<vmem>>, vector<1x8x256xf32>,
    return
  }
  func.func @transform_0(%arg0: i32) -> (i32, i32, i32, i32) {
    %c0_i32 = arith.constant 0 : i32
    %c0_i32_0 = arith.constant 0 : i32
    %c0_i32_1 = arith.constant 0 : i32
    %c0_i32_2 = arith.constant 0 : i32
    return %arg0, %c0_i32, %c0_i32_0, %c0_i32_1 : i32, i32, i32, i32
  }
  func.func @transform_1(%arg0: i32) -> (i32, i32, i32, i32) {
    %c0_i32 = arith.constant 0 : i32
    %c0_i32_0 = arith.constant 0 : i32
    %c0_i32_1 = arith.constant 0 : i32
    %c0_i32_2 = arith.constant 0 : i32
    return %arg0, %c0_i32, %c0_i32_0, %c0_i32_1 : i32, i32, i32, i32
  }
  func.func @transform_2(%arg0: i32) -> (i32, i32, i32, i32) {
    %c0_i32 = arith.constant 0 : i32
    %c0_i32_0 = arith.constant 0 : i32
    %c0_i32_1 = arith.constant 0 : i32
    %c0_i32_2 = arith.constant 0 : i32
    return %arg0, %c0_i32, %c0_i32_0, %c0_i32_1 : i32, i32, i32, i32
  }
  func.func @transform_3(%arg0: i32) -> (i32, i32, i32, i32) {
    %c0_i32 = arith.constant 0 : i32
    %c0_i32_0 = arith.constant 0 : i32
    %c0_i32_1 = arith.constant 0 : i32
    %c0_i32_2 = arith.constant 0 : i32
    return %arg0, %c0_i32, %c0_i32_0, %c0_i32_1 : i32, i32, i32, i32
  }
  func.func @transform_4(%arg0: i32) -> (i32, i32) {
    %c0_i32 = arith.constant 0 : i32
    %c0_i32_0 = arith.constant 0 : i32
    %c0_i32_1 = arith.constant 0 : i32
    return %c0_i32, %c0_i32_0 : i32, i32
  }
  func.func @transform_5(%arg0: i32) -> (i32, i32) {
    %c0_i32 = arith.constant 0 : i32
    %c0_i32_0 = arith.constant 0 : i32
    %c0_i32_1 = arith.constant 0 : i32
    return %c0_i32, %c0_i32_0 : i32, i32
  }
  func.func @transform_6(%arg0: i32) -> (i32, i32) {
    %c0_i32 = arith.constant 0 : i32
    %c0_i32_0 = arith.constant 0 : i32
    %c0_i32_1 = arith.constant 0 : i32
    return %c0_i32, %c0_i32_0 : i32, i32
  }
  func.func @transform_7(%arg0: i32) -> (i32, i32) {
    %c0_i32 = arith.constant 0 : i32
    %c0_i32_0 = arith.constant 0 : i32
    %c0_i32_1 = arith.constant 0 : i32
    return %c0_i32, %c0_i32_0 : i32, i32
  }
  func.func @transform_8(%arg0: i32) -> (i32, i32) {
    %c0_i32 = arith.constant 0 : i32
    %c0_i32_0 = arith.constant 0 : i32
    %c0_i32_1 = arith.constant 0 : i32
    return %c0_i32, %c0_i32_0 : i32, i32
  }
  func.func @transform_9(%arg0: i32) -> (i32, i32, i32) {
    %c0_i32 = arith.constant 0 : i32
    %c0_i32_0 = arith.constant 0 : i32
    %c0_i32_1 = arith.constant 0 : i32
    return %arg0, %c0_i32, %c0_i32_0 : i32, i32, i32
  }
}

</mosaic_0001>

<llo_original>
// kernel: _up4_forward.1
$region0: #{_up4_forward.1}
  #allocation0 [shape = 'u32[]', space=smem, size = 0x4, offset = 0x4, fixed_abs, tag = 'smem constant byte address 0x4 - core index']
  #allocation1 [shape = 'u32[144,128]{1,0:T(1,128)}', space=vmem, size = 0x12000, scoped, tag = 'internal scratch']
  #allocation2 [shape = 'bf16[16,444]{1,0:T(8,128)(2,1)}', space=vmem, size = 0x4000, scoped, tag = 'scratch operand']
  #allocation3 [shape = 'bf16[4,16,16]{2,1,0:T(8,128)(2,1)}', space=vmem, size = 0x4000, scoped, tag = 'scratch operand']
  %s0 = inlined_call_operand.hbm [shape: f32[2,4,16,16], index: 0, kind: input, shape index: {}]
  %s1 = inlined_call_operand.hbm [shape: f32[2,4,16,16], index: 1, kind: input, shape index: {}]
  %s2 = inlined_call_operand.hbm [shape: f32[2,4,16,16], index: 2, kind: input, shape index: {}]
  %s3 = inlined_call_operand.hbm [shape: f32[2,4,8,8], index: 3, kind: input, shape index: {}]
  %s4 = inlined_call_operand.vmem [shape: bf16[8,144], index: 4, kind: input, shape index: {}]
  %s5 = inlined_call_operand.vmem [shape: f32[8,1], index: 5, kind: input, shape index: {}]
  %s6 = inlined_call_operand.vmem [shape: bf16[8,72], index: 6, kind: input, shape index: {}]
  %s7 = inlined_call_operand.vmem [shape: f32[8,1], index: 7, kind: input, shape index: {}]
  %s8 = inlined_call_operand.vmem [shape: f32[1,352], index: 8, kind: input, shape index: {}]
  %s9 = inlined_call_operand.vmem [shape: f32[2,8,256], index: 9, kind: output, shape index: {}]
  %s10 = sld [smem:[#allocation0]]
  $region85: #{_up4_forward.1} parent=0
    _
  %s12 = ssub.s32 1, %s10
  %s13 = scalar_select 0, %s12, %s10
  $region1: #{_up4_forward.1} parent=0
    #allocation4 [shape = 'u8[65536]{0}', space=vmem, size = 0x10000, scoped, tag = 'input window, operand 0']
    #allocation5 [shape = 's32[2]{0}', space=sflag, size = 0x8, scoped, tag = 'scoped memory for _up4_forward.1']
    #allocation6 [shape = 'u8[65536]{0}', space=vmem, size = 0x10000, scoped, tag = 'input window, operand 1']
    #allocation7 [shape = 's32[2]{0}', space=sflag, size = 0x8, scoped, tag = 'scoped memory for _up4_forward.1']
    #allocation8 [shape = 'u8[65536]{0}', space=vmem, size = 0x10000, scoped, tag = 'input window, operand 2']
    #allocation9 [shape = 'u8[32768]{0}', space=vmem, size = 0x8000, scoped, tag = 'input window, operand 3']
    #allocation10 [shape = 's32[2]{0}', space=sflag, size = 0x8, scoped, tag = 'scoped memory for _up4_forward.1']
    %14 = vsyncpa [#allocation5], 0
    %s15 = scalar_lea.sflag [#allocation5], 1
    %16 = vsyncpa %s15, 0
    %17 = vsyncpa [#allocation7], 0
    %s18 = scalar_lea.sflag [#allocation7], 1
    %19 = vsyncpa %s18, 0
    %20 = vsyncpa [#allocation10], 0
    %s21 = scalar_lea.sflag [#allocation10], 1
    %22 = vsyncpa %s21, 0
    loop: start=0, step=1, limit=4
    $region2: #{_up4_forward.1} parent=1 // loop_pre_header
      _
    $region3: #{_up4_forward.1} parent=1 // loop_header
      %s24 = sphi 0, %s28
      %p25 = scmp.ge.s32.totalorder %s24, 4
      %s34 = sphi 0, %s36
      %s37 = sphi 0, %s34
      %s38 = sphi 0, %s37
      %s54 = sphi 0, %s38
      %s60 = sphi 0, %s62
      %s63 = sphi 0, %s60
      %s64 = sphi 0, %s63
      %s80 = sphi 0, %s64
      %s86 = sphi 0, %s88
      %s89 = sphi 0, %s86
      %s90 = sphi 0, %s89
      %s106 = sphi 0, %s90
      %s112 = sphi 0, %s114
      %s115 = sphi 0, %s112
      %s116 = sphi 0, %s115
      %s132 = sphi 0, %s116
      %s136 = sphi 0, %s136
      %s138 = sphi 0, %s136
      %s139 = sphi 0, %s138
      %s153 = sphi 0, %s139
      %s157 = sphi 0, %s157
      %s159 = sphi 0, %s157
      %s160 = sphi 0, %s159
      %s174 = sphi 0, %s160
      %s178 = sphi 0, %s178
      %s180 = sphi 0, %s178
      %s181 = sphi 0, %s180
      %s195 = sphi 0, %s181
      %s199 = sphi 0, %s199
      %s201 = sphi 0, %s199
      %s202 = sphi 0, %s201
      %s216 = sphi 0, %s202
      %s220 = sphi 0, %s220
      %s222 = sphi 0, %s220
      %s223 = sphi 0, %s222
      %s237 = sphi 0, %s223
      %s243 = sphi 0, %s245
      %s246 = sphi 0, %s243
      %s247 = sphi 0, %s246
      %s263 = sphi 0, %s247
    $region4: #{_up4_forward.1} parent=1 // loop_header_branch
      %27 = sbr.rel (%p25) target = $region8
    $region5: #{_up4_forward.1} parent=1 // loop_body
      %s29 = ssub.s32 %s24, 1
      %s30 = ssub.s32 %s24, 2
      %s31 = sadd.s32 %s24, 1
      %s32 = ssub.s32 %s24, %s31
      %p33 = scmp.eq.s32.totalorder %s32, 0
      %s35 = sadd.s32 %s34, 1
      %s36 = scalar_select %p33, %s34, %s35
      %p39 = pneg %p33
      %p40 = scmp.eq.s32.totalorder %s24, 1
      %p41 = por %p39, %p40
      %p42 = scmp.ne.s32.totalorder %s34, %s37
      %p43 = scmp.eq.s32.totalorder %s24, 0
      %p44 = por %p42, %p43
      %p45 = scmp.ne.s32.totalorder %s34, %s37
      %p46 = scmp.eq.s32.totalorder %s29, 1
      %p47 = por %p45, %p46
      %p48 = scmp.ne.s32.totalorder %s37, %s38
      %p49 = scmp.eq.s32.totalorder %s29, 0
      %p50 = por %p48, %p49
      %p51 = scmp.ne.s32.totalorder %s37, %s38
      %p52 = scmp.eq.s32.totalorder %s30, 1
      %p53 = por %p51, %p52
      %p55 = scmp.ne.s32.totalorder %s38, %s54
      %p56 = scmp.eq.s32.totalorder %s30, 0
      %p57 = por %p55, %p56
      %s58 = ssub.s32 %s24, %s31
      %p59 = scmp.eq.s32.totalorder %s58, 0
      %s61 = sadd.s32 %s60, 1
      %s62 = scalar_select %p59, %s60, %s61
      %p65 = pneg %p59
      %p66 = scmp.eq.s32.totalorder %s24, 1
      %p67 = por %p65, %p66
      %p68 = scmp.ne.s32.totalorder %s60, %s63
      %p69 = scmp.eq.s32.totalorder %s24, 0
      %p70 = por %p68, %p69
      %p71 = scmp.ne.s32.totalorder %s60, %s63
      %p72 = scmp.eq.s32.totalorder %s29, 1
      %p73 = por %p71, %p72
      %p74 = scmp.ne.s32.totalorder %s63, %s64
      %p75 = scmp.eq.s32.totalorder %s29, 0
      %p76 = por %p74, %p75
      %p77 = scmp.ne.s32.totalorder %s63, %s64
      %p78 = scmp.eq.s32.totalorder %s30, 1
      %p79 = por %p77, %p78
      %p81 = scmp.ne.s32.totalorder %s64, %s80
      %p82 = scmp.eq.s32.totalorder %s30, 0
      %p83 = por %p81, %p82
      %s84 = ssub.s32 %s24, %s31
      %p85 = scmp.eq.s32.totalorder %s84, 0
      %s87 = sadd.s32 %s86, 1
      %s88 = scalar_select %p85, %s86, %s87
      %p91 = pneg %p85
      %p92 = scmp.eq.s32.totalorder %s24, 1
      %p93 = por %p91, %p92
      %p94 = scmp.ne.s32.totalorder %s86, %s89
      %p95 = scmp.eq.s32.totalorder %s24, 0
      %p96 = por %p94, %p95
      %p97 = scmp.ne.s32.totalorder %s86, %s89
      %p98 = scmp.eq.s32.totalorder %s29, 1
      %p99 = por %p97, %p98
      %p100 = scmp.ne.s32.totalorder %s89, %s90
      %p101 = scmp.eq.s32.totalorder %s29, 0
      %p102 = por %p100, %p101
      %p103 = scmp.ne.s32.totalorder %s89, %s90
      %p104 = scmp.eq.s32.totalorder %s30, 1
      %p105 = por %p103, %p104
      %p107 = scmp.ne.s32.totalorder %s90, %s106
      %p108 = scmp.eq.s32.totalorder %s30, 0
      %p109 = por %p107, %p108
      %s110 = ssub.s32 %s24, %s31
      %p111 = scmp.eq.s32.totalorder %s110, 0
      %s113 = sadd.s32 %s112, 1
      %s114 = scalar_select %p111, %s112, %s113
      %p117 = pneg %p111
      %p118 = scmp.eq.s32.totalorder %s24, 1
      %p119 = por %p117, %p118
      %p120 = scmp.ne.s32.totalorder %s112, %s115
      %p121 = scmp.eq.s32.totalorder %s24, 0
      %p122 = por %p120, %p121
      %p123 = scmp.ne.s32.totalorder %s112, %s115
      %p124 = scmp.eq.s32.totalorder %s29, 1
      %p125 = por %p123, %p124
      %p126 = scmp.ne.s32.totalorder %s115, %s116
      %p127 = scmp.eq.s32.totalorder %s29, 0
      %p128 = por %p126, %p127
      %p129 = scmp.ne.s32.totalorder %s115, %s116
      %p130 = scmp.eq.s32.totalorder %s30, 1
      %p131 = por %p129, %p130
      %p133 = scmp.ne.s32.totalorder %s116, %s132
      %p134 = scmp.eq.s32.totalorder %s30, 0
      %p135 = por %p133, %p134
      %s137 = sadd.s32 %s136, 1
      %p140 = scmp.eq.s32.totalorder %s24, 1
      %p141 = scmp.ne.s32.totalorder %s136, %s138
      %p142 = scmp.eq.s32.totalorder %s24, 0
      %p143 = por %p141, %p142
      %p144 = scmp.ne.s32.totalorder %s136, %s138
      %p145 = scmp.eq.s32.totalorder %s29, 1
      %p146 = por %p144, %p145
      %p147 = scmp.ne.s32.totalorder %s138, %s139
      %p148 = scmp.eq.s32.totalorder %s29, 0
      %p149 = por %p147, %p148
      %p150 = scmp.ne.s32.totalorder %s138, %s139
      %p151 = scmp.eq.s32.totalorder %s30, 1
      %p152 = por %p150, %p151
      %p154 = scmp.ne.s32.totalorder %s139, %s153
      %p155 = scmp.eq.s32.totalorder %s30, 0
      %p156 = por %p154, %p155
      %s158 = sadd.s32 %s157, 1
      %p161 = scmp.eq.s32.totalorder %s24, 1
      %p162 = scmp.ne.s32.totalorder %s157, %s159
      %p163 = scmp.eq.s32.totalorder %s24, 0
      %p164 = por %p162, %p163
      %p165 = scmp.ne.s32.totalorder %s157, %s159
      %p166 = scmp.eq.s32.totalorder %s29, 1
      %p167 = por %p165, %p166
      %p168 = scmp.ne.s32.totalorder %s159, %s160
      %p169 = scmp.eq.s32.totalorder %s29, 0
      %p170 = por %p168, %p169
      %p171 = scmp.ne.s32.totalorder %s159, %s160
      %p172 = scmp.eq.s32.totalorder %s30, 1
      %p173 = por %p171, %p172
      %p175 = scmp.ne.s32.totalorder %s160, %s174
      %p176 = scmp.eq.s32.totalorder %s30, 0
      %p177 = por %p175, %p176
      %s179 = sadd.s32 %s178, 1
      %p182 = scmp.eq.s32.totalorder %s24, 1
      %p183 = scmp.ne.s32.totalorder %s178, %s180
      %p184 = scmp.eq.s32.totalorder %s24, 0
      %p185 = por %p183, %p184
      %p186 = scmp.ne.s32.totalorder %s178, %s180
      %p187 = scmp.eq.s32.totalorder %s29, 1
      %p188 = por %p186, %p187
      %p189 = scmp.ne.s32.totalorder %s180, %s181
      %p190 = scmp.eq.s32.totalorder %s29, 0
      %p191 = por %p189, %p190
      %p192 = scmp.ne.s32.totalorder %s180, %s181
      %p193 = scmp.eq.s32.totalorder %s30, 1
      %p194 = por %p192, %p193
      %p196 = scmp.ne.s32.totalorder %s181, %s195
      %p197 = scmp.eq.s32.totalorder %s30, 0
      %p198 = por %p196, %p197
      %s200 = sadd.s32 %s199, 1
      %p203 = scmp.eq.s32.totalorder %s24, 1
      %p204 = scmp.ne.s32.totalorder %s199, %s201
      %p205 = scmp.eq.s32.totalorder %s24, 0
      %p206 = por %p204, %p205
      %p207 = scmp.ne.s32.totalorder %s199, %s201
      %p208 = scmp.eq.s32.totalorder %s29, 1
      %p209 = por %p207, %p208
      %p210 = scmp.ne.s32.totalorder %s201, %s202
      %p211 = scmp.eq.s32.totalorder %s29, 0
      %p212 = por %p210, %p211
      %p213 = scmp.ne.s32.totalorder %s201, %s202
      %p214 = scmp.eq.s32.totalorder %s30, 1
      %p215 = por %p213, %p214
      %p217 = scmp.ne.s32.totalorder %s202, %s216
      %p218 = scmp.eq.s32.totalorder %s30, 0
      %p219 = por %p217, %p218
      %s221 = sadd.s32 %s220, 1
      %p224 = scmp.eq.s32.totalorder %s24, 1
      %p225 = scmp.ne.s32.totalorder %s220, %s222
      %p226 = scmp.eq.s32.totalorder %s24, 0
      %p227 = por %p225, %p226
      %p228 = scmp.ne.s32.totalorder %s220, %s222
      %p229 = scmp.eq.s32.totalorder %s29, 1
      %p230 = por %p228, %p229
      %p231 = scmp.ne.s32.totalorder %s222, %s223
      %p232 = scmp.eq.s32.totalorder %s29, 0
      %p233 = por %p231, %p232
      %p234 = scmp.ne.s32.totalorder %s222, %s223
      %p235 = scmp.eq.s32.totalorder %s30, 1
      %p236 = por %p234, %p235
      %p238 = scmp.ne.s32.totalorder %s223, %s237
      %p239 = scmp.eq.s32.totalorder %s30, 0
      %p240 = por %p238, %p239
      %s241 = ssub.s32 %s24, %s31
      %p242 = scmp.eq.s32.totalorder %s241, 0
      %s244 = sadd.s32 %s243, 1
      %s245 = scalar_select %p242, %s243, %s244
      %p248 = pneg %p242
      %p249 = scmp.eq.s32.totalorder %s24, 1
      %p250 = por %p248, %p249
      %p251 = scmp.ne.s32.totalorder %s243, %s246
      %p252 = scmp.eq.s32.totalorder %s24, 0
      %p253 = por %p251, %p252
      %p254 = scmp.ne.s32.totalorder %s243, %s246
      %p255 = scmp.eq.s32.totalorder %s29, 1
      %p256 = por %p254, %p255
      %p257 = scmp.ne.s32.totalorder %s246, %s247
      %p258 = scmp.eq.s32.totalorder %s29, 0
      %p259 = por %p257, %p258
      %p260 = scmp.ne.s32.totalorder %s246, %s247
      %p261 = scmp.eq.s32.totalorder %s30, 1
      %p262 = por %p260, %p261
      %p264 = scmp.ne.s32.totalorder %s247, %s263
      %p265 = scmp.eq.s32.totalorder %s30, 0
      %p266 = por %p264, %p265
      %p267 = scmp.le.s32.totalorder 1, %s24
      %p268 = scmp.lt.s32.totalorder %s24, 3
      %p269 = pnand %p267, %p268
      %p270 = pneg %p269
      // Predicated region
      $region9: #{_up4_forward.1} parent=5 // pred_check
        _
      $region10: #{_up4_forward.1} parent=5 // pred_check_branch
        %272 = sbr.rel (%p269) target = $region12
      $region11: #{_up4_forward.1} parent=5 // pred_region
        %s273 = ssub.s32 %s24, 1
        // Predicated region
        $region13: #{_up4_forward.1} parent=11 // pred_check
          %p274 = pneg %p149
        $region14: #{_up4_forward.1} parent=11 // pred_check_branch
          %276 = sbr.rel (%p274) target = $region16
        $region15: #{_up4_forward.1} parent=11 // pred_region
          _
        $region16: #{_up4_forward.1} parent=11 // pred_fallthru
          _
        // Predicated region
        $region17: #{_up4_forward.1} parent=11 // pred_check
          %p277 = pneg %p170
        $region18: #{_up4_forward.1} parent=11 // pred_check_branch
          %279 = sbr.rel (%p277) target = $region20
        $region19: #{_up4_forward.1} parent=11 // pred_region
          _
        $region20: #{_up4_forward.1} parent=11 // pred_fallthru
          _
        // Predicated region
        $region21: #{_up4_forward.1} parent=11 // pred_check
          %p280 = pneg %p191
        $region22: #{_up4_forward.1} parent=11 // pred_check_branch
          %282 = sbr.rel (%p280) target = $region24
        $region23: #{_up4_forward.1} parent=11 // pred_region
          _
        $region24: #{_up4_forward.1} parent=11 // pred_fallthru
          _
        // Predicated region
        $region25: #{_up4_forward.1} parent=11 // pred_check
          %p283 = pneg %p212
        $region26: #{_up4_forward.1} parent=11 // pred_check_branch
          %285 = sbr.rel (%p283) target = $region28
        $region27: #{_up4_forward.1} parent=11 // pred_region
          _
        $region28: #{_up4_forward.1} parent=11 // pred_fallthru
          _
        // Predicated region
        $region29: #{_up4_forward.1} parent=11 // pred_check
          %p286 = pneg %p233
        $region30: #{_up4_forward.1} parent=11 // pred_check_branch
          %288 = sbr.rel (%p286) target = $region32
        $region31: #{_up4_forward.1} parent=11 // pred_region
          _
        $region32: #{_up4_forward.1} parent=11 // pred_fallthru
          _
      $region12: #{_up4_forward.1} parent=5 // pred_fallthru
        _
      %p289 = scmp.lt.s32.totalorder %s24, 2
      // Predicated region
      $region33: #{_up4_forward.1} parent=5 // pred_check
        %p290 = pneg %p289
      $region34: #{_up4_forward.1} parent=5 // pred_check_branch
        %292 = sbr.rel (%p290) target = $region36
      $region35: #{_up4_forward.1} parent=5 // pred_region
        // Predicated region
        $region37: #{_up4_forward.1} parent=35 // pred_check
          %p293 = pneg %p44
        $region38: #{_up4_forward.1} parent=35 // pred_check_branch
          %295 = sbr.rel (%p293) target = $region40
        $region39: #{_up4_forward.1} parent=35 // pred_region
          %s296 = sand.u32 %s34, 1
          %s297 = scalar_lea.sflag [#allocation5], %s296
          %s298 = sand.u32 %s34, 1
          %s299 = smul.addr %s298, 64
          %s300 = scalar_lea.vmem [#allocation4], %s299
          %s302 = ssub.s32 1024, 1024
          %303 = vsyncadd %s297, %s302
          %s304 = smul.addr %s24, 8
          %s305 = smul.addr %s304, 128
          %s306 = scalar_lea.hbm %s0, %s305
          %s307 = sshll.u32 %s300, 4
          %s308 = int_to_ptr.vmem [resolvable:$true] %s307
          %313 = dma.hbm_to_vmem [thread:$0]  %s306, 1024, %s308, %s297, 128, 128, 8
        $region40: #{_up4_forward.1} parent=35 // pred_fallthru
          _
        // Predicated region
        $region41: #{_up4_forward.1} parent=35 // pred_check
          %p314 = pneg %p70
        $region42: #{_up4_forward.1} parent=35 // pred_check_branch
          %316 = sbr.rel (%p314) target = $region44
        $region43: #{_up4_forward.1} parent=35 // pred_region
          %s317 = sand.u32 %s24, 1
          %s318 = scalar_lea.sflag [#allocation7], %s317
          %s319 = sand.u32 %s60, 1
          %s320 = smul.addr %s319, 64
          %s321 = scalar_lea.vmem [#allocation6], %s320
          %s323 = ssub.s32 1024, 1024
          %324 = vsyncadd %s318, %s323
          %s325 = smul.addr %s24, 8
          %s326 = smul.addr %s325, 128
          %s327 = scalar_lea.hbm %s1, %s326
          %s328 = sshll.u32 %s321, 4
          %s329 = int_to_ptr.vmem [resolvable:$true] %s328
          %334 = dma.hbm_to_vmem [thread:$0]  %s327, 1024, %s329, %s318, 128, 128, 8
        $region44: #{_up4_forward.1} parent=35 // pred_fallthru
          _
        // Predicated region
        $region45: #{_up4_forward.1} parent=35 // pred_check
          %p335 = pneg %p96
        $region46: #{_up4_forward.1} parent=35 // pred_check_branch
          %337 = sbr.rel (%p335) target = $region48
        $region47: #{_up4_forward.1} parent=35 // pred_region
          %s338 = sand.u32 %s24, 1
          %s339 = scalar_lea.sflag [#allocation7], %s338
          %s340 = sand.u32 %s86, 1
          %s341 = smul.addr %s340, 64
          %s342 = scalar_lea.vmem [#allocation8], %s341
          %s344 = ssub.s32 1024, 1024
          %345 = vsyncadd %s339, %s344
          %s346 = smul.addr %s24, 8
          %s347 = smul.addr %s346, 128
          %s348 = scalar_lea.hbm %s2, %s347
          %s349 = sshll.u32 %s342, 4
          %s350 = int_to_ptr.vmem [resolvable:$true] %s349
          %355 = dma.hbm_to_vmem [thread:$0]  %s348, 1024, %s350, %s339, 128, 128, 8
        $region48: #{_up4_forward.1} parent=35 // pred_fallthru
          _
        // Predicated region
        $region49: #{_up4_forward.1} parent=35 // pred_check
          %p356 = pneg %p122
        $region50: #{_up4_forward.1} parent=35 // pred_check_branch
          %358 = sbr.rel (%p356) target = $region52
        $region51: #{_up4_forward.1} parent=35 // pred_region
          %s359 = sand.u32 %s112, 1
          %s360 = scalar_lea.sflag [#allocation10], %s359
          %s361 = sand.u32 %s112, 1
          %s362 = smul.addr %s361, 32
          %s363 = scalar_lea.vmem [#allocation9], %s362
          %s365 = ssub.s32 512, 512
          %366 = vsyncadd %s360, %s365
          %s367 = smul.addr %s24, 4
          %s368 = smul.addr %s367, 128
          %s369 = scalar_lea.hbm %s3, %s368
          %s370 = sshll.u32 %s363, 4
          %s371 = int_to_ptr.vmem [resolvable:$true] %s370
          %376 = dma.hbm_to_vmem [thread:$0]  %s369, 512, %s371, %s360, 128, 128, 8
        $region52: #{_up4_forward.1} parent=35 // pred_fallthru
          _
      $region36: #{_up4_forward.1} parent=5 // pred_fallthru
        _
      %p377 = scmp.le.s32.totalorder 1, %s24
      %p378 = scmp.lt.s32.totalorder %s24, 3
      %p379 = pnand %p377, %p378
      %p380 = pneg %p379
      // Predicated region
      $region53: #{_up4_forward.1} parent=5 // pred_check
        _
      $region54: #{_up4_forward.1} parent=5 // pred_check_branch
        %382 = sbr.rel (%p379) target = $region56
      $region55: #{_up4_forward.1} parent=5 // pred_region
        %s383 = ssub.s32 %s24, 1
        %s384 = sand.u32 %s37, 1
        %s385 = scalar_lea.sflag [#allocation5], %s384
        %s386 = sand.u32 %s37, 1
        %s387 = smul.addr %s386, 64
        %s388 = scalar_lea.vmem [#allocation4], %s387
        // Predicated region
        $region57: #{_up4_forward.1} parent=55 // pred_check
          %p389 = pneg %p50
        $region58: #{_up4_forward.1} parent=55 // pred_check_branch
          %391 = sbr.rel (%p389) target = $region60
        $region59: #{_up4_forward.1} parent=55 // pred_region
          %392 = dma.done %s385, 1024
        $region60: #{_up4_forward.1} parent=55 // pred_fallthru
          _
        %s393 = sand.u32 %s29, 1
        %s394 = scalar_lea.sflag [#allocation7], %s393
        %s395 = sand.u32 %s63, 1
        %s396 = smul.addr %s395, 64
        %s397 = scalar_lea.vmem [#allocation6], %s396
        // Predicated region
        $region61: #{_up4_forward.1} parent=55 // pred_check
          %p398 = pneg %p76
        $region62: #{_up4_forward.1} parent=55 // pred_check_branch
          %400 = sbr.rel (%p398) target = $region64
        $region63: #{_up4_forward.1} parent=55 // pred_region
          %401 = dma.done %s394, 1024
        $region64: #{_up4_forward.1} parent=55 // pred_fallthru
          _
        %s402 = sand.u32 %s29, 1
        %s403 = scalar_lea.sflag [#allocation7], %s402
        %s404 = sand.u32 %s89, 1
        %s405 = smul.addr %s404, 64
        %s406 = scalar_lea.vmem [#allocation8], %s405
        // Predicated region
        $region65: #{_up4_forward.1} parent=55 // pred_check
          %p407 = pneg %p102
        $region66: #{_up4_forward.1} parent=55 // pred_check_branch
          %409 = sbr.rel (%p407) target = $region68
        $region67: #{_up4_forward.1} parent=55 // pred_region
          %410 = dma.done %s403, 1024
        $region68: #{_up4_forward.1} parent=55 // pred_fallthru
          _
        %s411 = sand.u32 %s115, 1
        %s412 = scalar_lea.sflag [#allocation10], %s411
        %s413 = sand.u32 %s115, 1
        %s414 = smul.addr %s413, 32
        %s415 = scalar_lea.vmem [#allocation9], %s414
        // Predicated region
        $region69: #{_up4_forward.1} parent=55 // pred_check
          %p416 = pneg %p128
        $region70: #{_up4_forward.1} parent=55 // pred_check_branch
          %418 = sbr.rel (%p416) target = $region72
        $region71: #{_up4_forward.1} parent=55 // pred_region
          %419 = dma.done %s412, 512
        $region72: #{_up4_forward.1} parent=55 // pred_fallthru
          _
        %s420 = sand.u32 %s37, 1
        %s421 = scalar_lea.sflag [#allocation5], %s420
        %s422 = sand.u32 %s37, 1
        %s423 = smul.addr %s422, 64
        %s424 = scalar_lea.vmem [#allocation4], %s423
        %p425 = pneg %p50
        %p426 = pneg %p47
        %s427 = sand.u32 %s29, 1
        %s428 = scalar_lea.sflag [#allocation7], %s427
        %s429 = sand.u32 %s63, 1
        %s430 = smul.addr %s429, 64
        %s431 = scalar_lea.vmem [#allocation6], %s430
        %p432 = pneg %p76
        %p433 = pneg %p73
        %s434 = sand.u32 %s29, 1
        %s435 = scalar_lea.sflag [#allocation7], %s434
        %s436 = sand.u32 %s89, 1
        %s437 = smul.addr %s436, 64
        %s438 = scalar_lea.vmem [#allocation8], %s437
        %p439 = pneg %p102
        %p440 = pneg %p99
        %s441 = sand.u32 %s115, 1
        %s442 = scalar_lea.sflag [#allocation10], %s441
        %s443 = sand.u32 %s115, 1
        %s444 = smul.addr %s443, 32
        %s445 = scalar_lea.vmem [#allocation9], %s444
        %p446 = pneg %p128
        %p447 = pneg %p125
        %p448 = pneg %p149
        %p449 = pneg %p146
        %p450 = pneg %p170
        %p451 = pneg %p167
        %p452 = pneg %p191
        %p453 = pneg %p188
        %p454 = pneg %p212
        %p455 = pneg %p209
        %p456 = pneg %p233
        %p457 = pneg %p230
        %p458 = pneg %p259
        %p459 = pneg %p256
        %p460 = scmp.lt.s32.totalorder %s29, 1
        %s461 = scalar_select %p460, %s29, 1
        %s462 = smul.addr %s461, 2
        %s463 = smul.addr %s462, 8
        %s464 = scalar_lea.vmem %s9, %s463
        %p465 = scmp.lt.s32.totalorder %s29, 1
        %s466 = scalar_select %p465, %s29, 1
        %s467 = smul.addr %s466, 2
        %s468 = smul.addr %s467, 8
        %s469 = scalar_lea.vmem %s9, %s468
        %v471 = vlaneseq
        %v472 = vshrl.u32 %v471, 7
        %v473 = vadd.s32 %v472, 8
        %v474 = vlaneseq
        %v475 = vand.u32 %v474, 127
        %v476 = vmul.u32 %v475, 2
        %vm477 = vcmp.eq.s32.totalorder %v476, %v472
        %vm478 = vcmp.eq.s32.totalorder %v476, %v473
        %v479 = vadd.s32 %v476, 1
        %vm480 = vcmp.eq.s32.totalorder %v479, %v472
        %vm481 = vcmp.eq.s32.totalorder %v479, %v473
        %vm482 = vmor %vm477, %vm480
        %vm483 = vmor %vm478, %vm481
        %v484 = vsel %vm482, 1.0, 0.0
        %v485 = vsel %vm483, 1.0, 0.0
        %v486 = vmul.u32 %v472, 2
        %vm487 = vcmp.eq.s32.totalorder %v486, %v475
        %v488 = vadd.s32 %v486, 1
        %vm489 = vcmp.eq.s32.totalorder %v488, %v475
        %vm490 = vmor %vm487, %vm489
        %v491 = vsel %vm490, 1.0, 0.0
        %v492 = vld [vmem:[%s415] sm:$0xff]
        %vm493 = vcmask 64512
        %v495 = vsel %vm493, %v484, 0
        %v498 = vsel %vm493, %v485, 0
        %500 = vmatprep.subr.mxu0 0.0
        %501 = vmatpush1.msra.mxu0 0.0
        %502 = vmatprep.subr.mxu0 0.0
        %503 = vmatpush1.msra.mxu0 0.0
        %504 = vmatprep.subr.mxu0 0.0
        %505 = vmatpush1.msra.mxu0 0.0
        %506 = vmatprep.subr.mxu0 0.0
        %507 = vmatpush1.msra.mxu0 0.0
        %508 = vmatprep.subr.mxu0 0.0
        %509 = vmatpush1.msra.mxu0 0.0
        %510 = vmatprep.subr.mxu0 0.0
        %511 = vmatpush1.msra.mxu0 0.0
        %512 = vmatprep.subr.mxu0 0.0
        %513 = vmatpush1.msra.mxu0 0.0
        %514 = vmatprep.subr.mxu0 0.0
        %515 = vmatpush1.msra.mxu0 0.0
        %516 = vmatprep.subr.mxu0 0.0
        %517 = vmatpush1.msra.mxu0 0.0
        %518 = vmatprep.subr.mxu0 0.0
        %519 = vmatpush1.msra.mxu0 0.0
        %520 = vmatprep.subr.mxu0 0.0
        %521 = vmatpush1.msra.mxu0 0.0
        %522 = vmatprep.subr.mxu0 0.0
        %523 = vmatpush1.msra.mxu0 0.0
        %524 = vmatprep.subr.mxu0 0.0
        %525 = vmatpush1.msra.mxu0 0.0
        %526 = vmatprep.subr.mxu0 0.0
        %527 = vmatpush1.msra.mxu0 0.0
        %528 = vmatprep.subr.mxu0 0.0
        %529 = vmatpush1.msra.mxu0 0.0
        %530 = vmatprep.subr.mxu0 0.0
        %531 = vmatpush1.msra.mxu0 %v492
        %532 = vmatprep.subr.mxu0 0.0
        %533 = vmatpush2.msra.mxu0 0.0
        %534 = vmatprep.subr.mxu0 0.0
        %535 = vmatpush2.msra.mxu0 0.0
        %536 = vmatprep.subr.mxu0 0.0
        %537 = vmatpush2.msra.mxu0 0.0
        %538 = vmatprep.subr.mxu0 0.0
        %539 = vmatpush2.msra.mxu0 0.0
        %540 = vmatprep.subr.mxu0 0.0
        %541 = vmatpush2.msra.mxu0 0.0
        %542 = vmatprep.subr.mxu0 0.0
        %543 = vmatpush2.msra.mxu0 0.0
        %544 = vmatprep.subr.mxu0 0.0
        %545 = vmatpush2.msra.mxu0 0.0
        %546 = vmatprep.subr.mxu0 0.0
        %547 = vmatpush2.msra.mxu0 0.0
        %548 = vmatprep.subr.mxu0 0.0
        %549 = vmatpush2.msra.mxu0 0.0
        %550 = vmatprep.subr.mxu0 0.0
        %551 = vmatpush2.msra.mxu0 0.0
        %552 = vmatprep.subr.mxu0 0.0
        %553 = vmatpush2.msra.mxu0 0.0
        %554 = vmatprep.subr.mxu0 0.0
        %555 = vmatpush2.msra.mxu0 0.0
        %556 = vmatprep.subr.mxu0 0.0
        %557 = vmatpush2.msra.mxu0 0.0
        %558 = vmatprep.subr.mxu0 0.0
        %559 = vmatpush2.msra.mxu0 0.0
        %560 = vmatprep.subr.mxu0 0.0
        %561 = vmatpush2.msra.mxu0 0.0
        %562 = vmatprep.subr.mxu0 0.0
        %563 = vmatpush2.msra.mxu0 0.0
        %564 = vmatprep.mubr.f32.mxu0 0.0
        %565 = vmatmul.mubr.f32.gmra.mxu0 %v495
        %v566 = vpop.f32.mrf.mxu0
        %v567 = vadd.f32 0.0, %v566
        %v568 = vpop.f32.mrf.mxu0
        %569 = vmatprep.mubr.f32.mxu0 0.0
        %570 = vmatmul.mubr.f32.gmra.mxu0 %v498
        %v571 = vpop.f32.mrf.mxu0
        %v572 = vadd.f32 0.0, %v571
        %v573 = vpop.f32.mrf.mxu0
        %574 = vdwg.mxu0
        %v576 = vsel %vm493, %v567, 0
        %v579 = vsel %vm493, %v572, 0
        %581 = vmatprep.subr.mxu0 0.0
        %582 = vmatpush1.msra.mxu0 0.0
        %583 = vmatprep.subr.mxu0 0.0
        %584 = vmatpush1.msra.mxu0 0.0
        %585 = vmatprep.subr.mxu0 0.0
        %586 = vmatpush1.msra.mxu0 0.0
        %587 = vmatprep.subr.mxu0 0.0
        %588 = vmatpush1.msra.mxu0 0.0
        %589 = vmatprep.subr.mxu0 0.0
        %590 = vmatpush1.msra.mxu0 0.0
        %591 = vmatprep.subr.mxu0 0.0
        %592 = vmatpush1.msra.mxu0 0.0
        %593 = vmatprep.subr.mxu0 0.0
        %594 = vmatpush1.msra.mxu0 0.0
        %595 = vmatprep.subr.mxu0 0.0
        %596 = vmatpush1.msra.mxu0 0.0
        %597 = vmatprep.subr.mxu0 0.0
        %598 = vmatpush1.msra.mxu0 0.0
        %599 = vmatprep.subr.mxu0 0.0
        %600 = vmatpush1.msra.mxu0 0.0
        %601 = vmatprep.subr.mxu0 0.0
        %602 = vmatpush1.msra.mxu0 0.0
        %603 = vmatprep.subr.mxu0 0.0
        %604 = vmatpush1.msra.mxu0 0.0
        %605 = vmatprep.subr.mxu0 0.0
        %606 = vmatpush1.msra.mxu0 0.0
        %607 = vmatprep.subr.mxu0 0.0
        %608 = vmatpush1.msra.mxu0 0.0
        %609 = vmatprep.subr.mxu0 0.0
        %610 = vmatpush1.msra.mxu0 0.0
        %611 = vmatprep.subr.mxu0 0.0
        %612 = vmatpush1.msra.mxu0 %v491
        %613 = vmatprep.subr.mxu0 0.0
        %614 = vmatpush2.msra.mxu0 0.0
        %615 = vmatprep.subr.mxu0 0.0
        %616 = vmatpush2.msra.mxu0 0.0
        %617 = vmatprep.subr.mxu0 0.0
        %618 = vmatpush2.msra.mxu0 0.0
        %619 = vmatprep.subr.mxu0 0.0
        %620 = vmatpush2.msra.mxu0 0.0
        %621 = vmatprep.subr.mxu0 0.0
        %622 = vmatpush2.msra.mxu0 0.0
        %623 = vmatprep.subr.mxu0 0.0
        %624 = vmatpush2.msra.mxu0 0.0
        %625 = vmatprep.subr.mxu0 0.0
        %626 = vmatpush2.msra.mxu0 0.0
        %627 = vmatprep.subr.mxu0 0.0
        %628 = vmatpush2.msra.mxu0 0.0
        %629 = vmatprep.subr.mxu0 0.0
        %630 = vmatpush2.msra.mxu0 0.0
        %631 = vmatprep.subr.mxu0 0.0
        %632 = vmatpush2.msra.mxu0 0.0
        %633 = vmatprep.subr.mxu0 0.0
        %634 = vmatpush2.msra.mxu0 0.0
        %635 = vmatprep.subr.mxu0 0.0
        %636 = vmatpush2.msra.mxu0 0.0
        %637 = vmatprep.subr.mxu0 0.0
        %638 = vmatpush2.msra.mxu0 0.0
        %639 = vmatprep.subr.mxu0 0.0
        %640 = vmatpush2.msra.mxu0 0.0
        %641 = vmatprep.subr.mxu0 0.0
        %642 = vmatpush2.msra.mxu0 0.0
        %643 = vmatprep.subr.mxu0 0.0
        %644 = vmatpush2.msra.mxu0 0.0
        %645 = vmatprep.mubr.f32.mxu0 0.0
        %646 = vmatmul.mubr.f32.gmra.mxu0 %v576
        %v647 = vpop.f32.mrf.mxu0
        %v648 = vadd.f32 0.0, %v647
        %v649 = vpop.f32.mrf.mxu0
        %650 = vmatprep.mubr.f32.mxu0 0.0
        %651 = vmatmul.mubr.f32.gmra.mxu0 %v579
        %v652 = vpop.f32.mrf.mxu0
        %v653 = vadd.f32 0.0, %v652
        %v654 = vpop.f32.mrf.mxu0
        %655 = vdwg.mxu0
        %v656 = vpack.c.bf16 %v653, %v648
        %v658 = vunpack.c.l.b16 %v656
        %v659 = vunpack.c.h.b16 %v656
        %v660 = vpack.c.b16 %v658, %v658
        %v661 = vpack.c.b16 %v659, %v659
        %vm664 = vcmask 125952
        %665 = vst.msk [vmem:[#allocation3] sm:$0xf] %vm664, %v660
        %666 = vst.msk [vmem:[#allocation3 + $0x4] sm:$0xf] %vm664, %v661
        %s667 = scalar_lea.vmem %s415, 8 [#allocation9]
        %v668 = vld [vmem:[%s667] sm:$0xff]
        %669 = vmatprep.subr.mxu0 0.0
        %670 = vmatpush1.msra.mxu0 0.0
        %671 = vmatprep.subr.mxu0 0.0
        %672 = vmatpush1.msra.mxu0 0.0
        %673 = vmatprep.subr.mxu0 0.0
        %674 = vmatpush1.msra.mxu0 0.0
        %675 = vmatprep.subr.mxu0 0.0
        %676 = vmatpush1.msra.mxu0 0.0
        %677 = vmatprep.subr.mxu0 0.0
        %678 = vmatpush1.msra.mxu0 0.0
        %679 = vmatprep.subr.mxu0 0.0
        %680 = vmatpush1.msra.mxu0 0.0
        %681 = vmatprep.subr.mxu0 0.0
        %682 = vmatpush1.msra.mxu0 0.0
        %683 = vmatprep.subr.mxu0 0.0
        %684 = vmatpush1.msra.mxu0 0.0
        %685 = vmatprep.subr.mxu0 0.0
        %686 = vmatpush1.msra.mxu0 0.0
        %687 = vmatprep.subr.mxu0 0.0
        %688 = vmatpush1.msra.mxu0 0.0
        %689 = vmatprep.subr.mxu0 0.0
        %690 = vmatpush1.msra.mxu0 0.0
        %691 = vmatprep.subr.mxu0 0.0
        %692 = vmatpush1.msra.mxu0 0.0
        %693 = vmatprep.subr.mxu0 0.0
        %694 = vmatpush1.msra.mxu0 0.0
        %695 = vmatprep.subr.mxu0 0.0
        %696 = vmatpush1.msra.mxu0 0.0
        %697 = vmatprep.subr.mxu0 0.0
        %698 = vmatpush1.msra.mxu0 0.0
        %699 = vmatprep.subr.mxu0 0.0
        %700 = vmatpush1.msra.mxu0 %v668
        %701 = vmatprep.subr.mxu0 0.0
        %702 = vmatpush2.msra.mxu0 0.0
        %703 = vmatprep.subr.mxu0 0.0
        %704 = vmatpush2.msra.mxu0 0.0
        %705 = vmatprep.subr.mxu0 0.0
        %706 = vmatpush2.msra.mxu0 0.0
        %707 = vmatprep.subr.mxu0 0.0
        %708 = vmatpush2.msra.mxu0 0.0
        %709 = vmatprep.subr.mxu0 0.0
        %710 = vmatpush2.msra.mxu0 0.0
        %711 = vmatprep.subr.mxu0 0.0
        %712 = vmatpush2.msra.mxu0 0.0
        %713 = vmatprep.subr.mxu0 0.0
        %714 = vmatpush2.msra.mxu0 0.0
        %715 = vmatprep.subr.mxu0 0.0
        %716 = vmatpush2.msra.mxu0 0.0
        %717 = vmatprep.subr.mxu0 0.0
        %718 = vmatpush2.msra.mxu0 0.0
        %719 = vmatprep.subr.mxu0 0.0
        %720 = vmatpush2.msra.mxu0 0.0
        %721 = vmatprep.subr.mxu0 0.0
        %722 = vmatpush2.msra.mxu0 0.0
        %723 = vmatprep.subr.mxu0 0.0
        %724 = vmatpush2.msra.mxu0 0.0
        %725 = vmatprep.subr.mxu0 0.0
        %726 = vmatpush2.msra.mxu0 0.0
        %727 = vmatprep.subr.mxu0 0.0
        %728 = vmatpush2.msra.mxu0 0.0
        %729 = vmatprep.subr.mxu0 0.0
        %730 = vmatpush2.msra.mxu0 0.0
        %731 = vmatprep.subr.mxu0 0.0
        %732 = vmatpush2.msra.mxu0 0.0
        %733 = vmatprep.mubr.f32.mxu0 0.0
        %734 = vmatmul.mubr.f32.gmra.mxu0 %v495
        %v735 = vpop.f32.mrf.mxu0
        %v736 = vadd.f32 0.0, %v735
        %v737 = vpop.f32.mrf.mxu0
        %738 = vmatprep.mubr.f32.mxu0 0.0
        %739 = vmatmul.mubr.f32.gmra.mxu0 %v498
        %v740 = vpop.f32.mrf.mxu0
        %v741 = vadd.f32 0.0, %v740
        %v742 = vpop.f32.mrf.mxu0
        %743 = vdwg.mxu0
        %v745 = vsel %vm493, %v736, 0
        %v748 = vsel %vm493, %v741, 0
        %750 = vmatprep.subr.mxu0 0.0
        %751 = vmatpush1.msra.mxu0 0.0
        %752 = vmatprep.subr.mxu0 0.0
        %753 = vmatpush1.msra.mxu0 0.0
        %754 = vmatprep.subr.mxu0 0.0
        %755 = vmatpush1.msra.mxu0 0.0
        %756 = vmatprep.subr.mxu0 0.0
        %757 = vmatpush1.msra.mxu0 0.0
        %758 = vmatprep.subr.mxu0 0.0
        %759 = vmatpush1.msra.mxu0 0.0
        %760 = vmatprep.subr.mxu0 0.0
        %761 = vmatpush1.msra.mxu0 0.0
        %762 = vmatprep.subr.mxu0 0.0
        %763 = vmatpush1.msra.mxu0 0.0
        %764 = vmatprep.subr.mxu0 0.0
        %765 = vmatpush1.msra.mxu0 0.0
        %766 = vmatprep.subr.mxu0 0.0
        %767 = vmatpush1.msra.mxu0 0.0
        %768 = vmatprep.subr.mxu0 0.0
        %769 = vmatpush1.msra.mxu0 0.0
        %770 = vmatprep.subr.mxu0 0.0
        %771 = vmatpush1.msra.mxu0 0.0
        %772 = vmatprep.subr.mxu0 0.0
        %773 = vmatpush1.msra.mxu0 0.0
        %774 = vmatprep.subr.mxu0 0.0
        %775 = vmatpush1.msra.mxu0 0.0
        %776 = vmatprep.subr.mxu0 0.0
        %777 = vmatpush1.msra.mxu0 0.0
        %778 = vmatprep.subr.mxu0 0.0
        %779 = vmatpush1.msra.mxu0 0.0
        %780 = vmatprep.subr.mxu0 0.0
        %781 = vmatpush1.msra.mxu0 %v491
        %782 = vmatprep.subr.mxu0 0.0
        %783 = vmatpush2.msra.mxu0 0.0
        %784 = vmatprep.subr.mxu0 0.0
        %785 = vmatpush2.msra.mxu0 0.0
        %786 = vmatprep.subr.mxu0 0.0
        %787 = vmatpush2.msra.mxu0 0.0
        %788 = vmatprep.subr.mxu0 0.0
        %789 = vmatpush2.msra.mxu0 0.0
        %790 = vmatprep.subr.mxu0 0.0
        %791 = vmatpush2.msra.mxu0 0.0
        %792 = vmatprep.subr.mxu0 0.0
        %793 = vmatpush2.msra.mxu0 0.0
        %794 = vmatprep.subr.mxu0 0.0
        %795 = vmatpush2.msra.mxu0 0.0
        %796 = vmatprep.subr.mxu0 0.0
        %797 = vmatpush2.msra.mxu0 0.0
        %798 = vmatprep.subr.mxu0 0.0
        %799 = vmatpush2.msra.mxu0 0.0
        %800 = vmatprep.subr.mxu0 0.0
        %801 = vmatpush2.msra.mxu0 0.0
        %802 = vmatprep.subr.mxu0 0.0
        %803 = vmatpush2.msra.mxu0 0.0
        %804 = vmatprep.subr.mxu0 0.0
        %805 = vmatpush2.msra.mxu0 0.0
        %806 = vmatprep.subr.mxu0 0.0
        %807 = vmatpush2.msra.mxu0 0.0
        %808 = vmatprep.subr.mxu0 0.0
        %809 = vmatpush2.msra.mxu0 0.0
        %810 = vmatprep.subr.mxu0 0.0
        %811 = vmatpush2.msra.mxu0 0.0
        %812 = vmatprep.subr.mxu0 0.0
        %813 = vmatpush2.msra.mxu0 0.0
        %814 = vmatprep.mubr.f32.mxu0 0.0
        %815 = vmatmul.mubr.f32.gmra.mxu0 %v745
        %v816 = vpop.f32.mrf.mxu0
        %v817 = vadd.f32 0.0, %v816
        %v818 = vpop.f32.mrf.mxu0
        %819 = vmatprep.mubr.f32.mxu0 0.0
        %820 = vmatmul.mubr.f32.gmra.mxu0 %v748
        %v821 = vpop.f32.mrf.mxu0
        %v822 = vadd.f32 0.0, %v821
        %v823 = vpop.f32.mrf.mxu0
        %824 = vdwg.mxu0
        %v825 = vpack.c.bf16 %v822, %v817
        %v827 = vunpack.c.l.b16 %v825
        %v828 = vunpack.c.h.b16 %v825
        %v829 = vpack.c.b16 %v827, %v827
        %v830 = vpack.c.b16 %v828, %v828
        %s833 = scalar_lea.vmem [#allocation3], 8
        %834 = vst.msk [vmem:[%s833] sm:$0xf] %vm664, %v829
        %835 = vst.msk [vmem:[%s833 + $0x4] sm:$0xf] %vm664, %v830
        %s836 = scalar_lea.vmem %s415, 16 [#allocation9]
        %v837 = vld [vmem:[%s836] sm:$0xff]
        %838 = vmatprep.subr.mxu0 0.0
        %839 = vmatpush1.msra.mxu0 0.0
        %840 = vmatprep.subr.mxu0 0.0
        %841 = vmatpush1.msra.mxu0 0.0
        %842 = vmatprep.subr.mxu0 0.0
        %843 = vmatpush1.msra.mxu0 0.0
        %844 = vmatprep.subr.mxu0 0.0
        %845 = vmatpush1.msra.mxu0 0.0
        %846 = vmatprep.subr.mxu0 0.0
        %847 = vmatpush1.msra.mxu0 0.0
        %848 = vmatprep.subr.mxu0 0.0
        %849 = vmatpush1.msra.mxu0 0.0
        %850 = vmatprep.subr.mxu0 0.0
        %851 = vmatpush1.msra.mxu0 0.0
        %852 = vmatprep.subr.mxu0 0.0
        %853 = vmatpush1.msra.mxu0 0.0
        %854 = vmatprep.subr.mxu0 0.0
        %855 = vmatpush1.msra.mxu0 0.0
        %856 = vmatprep.subr.mxu0 0.0
        %857 = vmatpush1.msra.mxu0 0.0
        %858 = vmatprep.subr.mxu0 0.0
        %859 = vmatpush1.msra.mxu0 0.0
        %860 = vmatprep.subr.mxu0 0.0
        %861 = vmatpush1.msra.mxu0 0.0
        %862 = vmatprep.subr.mxu0 0.0
        %863 = vmatpush1.msra.mxu0 0.0
        %864 = vmatprep.subr.mxu0 0.0
        %865 = vmatpush1.msra.mxu0 0.0
        %866 = vmatprep.subr.mxu0 0.0
        %867 = vmatpush1.msra.mxu0 0.0
        %868 = vmatprep.subr.mxu0 0.0
        %869 = vmatpush1.msra.mxu0 %v837
        %870 = vmatprep.subr.mxu0 0.0
        %871 = vmatpush2.msra.mxu0 0.0
        %872 = vmatprep.subr.mxu0 0.0
        %873 = vmatpush2.msra.mxu0 0.0
        %874 = vmatprep.subr.mxu0 0.0
        %875 = vmatpush2.msra.mxu0 0.0
        %876 = vmatprep.subr.mxu0 0.0
        %877 = vmatpush2.msra.mxu0 0.0
        %878 = vmatprep.subr.mxu0 0.0
        %879 = vmatpush2.msra.mxu0 0.0
        %880 = vmatprep.subr.mxu0 0.0
        %881 = vmatpush2.msra.mxu0 0.0
        %882 = vmatprep.subr.mxu0 0.0
        %883 = vmatpush2.msra.mxu0 0.0
        %884 = vmatprep.subr.mxu0 0.0
        %885 = vmatpush2.msra.mxu0 0.0
        %886 = vmatprep.subr.mxu0 0.0
        %887 = vmatpush2.msra.mxu0 0.0
        %888 = vmatprep.subr.mxu0 0.0
        %889 = vmatpush2.msra.mxu0 0.0
        %890 = vmatprep.subr.mxu0 0.0
        %891 = vmatpush2.msra.mxu0 0.0
        %892 = vmatprep.subr.mxu0 0.0
        %893 = vmatpush2.msra.mxu0 0.0
        %894 = vmatprep.subr.mxu0 0.0
        %895 = vmatpush2.msra.mxu0 0.0
        %896 = vmatprep.subr.mxu0 0.0
        %897 = vmatpush2.msra.mxu0 0.0
        %898 = vmatprep.subr.mxu0 0.0
        %899 = vmatpush2.msra.mxu0 0.0
        %900 = vmatprep.subr.mxu0 0.0
        %901 = vmatpush2.msra.mxu0 0.0
        %902 = vmatprep.mubr.f32.mxu0 0.0
        %903 = vmatmul.mubr.f32.gmra.mxu0 %v495
        %v904 = vpop.f32.mrf.mxu0
        %v905 = vadd.f32 0.0, %v904
        %v906 = vpop.f32.mrf.mxu0
        %907 = vmatprep.mubr.f32.mxu0 0.0
        %908 = vmatmul.mubr.f32.gmra.mxu0 %v498
        %v909 = vpop.f32.mrf.mxu0
        %v910 = vadd.f32 0.0, %v909
        %v911 = vpop.f32.mrf.mxu0
        %912 = vdwg.mxu0
        %v914 = vsel %vm493, %v905, 0
        %v917 = vsel %vm493, %v910, 0
        %919 = vmatprep.subr.mxu0 0.0
        %920 = vmatpush1.msra.mxu0 0.0
        %921 = vmatprep.subr.mxu0 0.0
        %922 = vmatpush1.msra.mxu0 0.0
        %923 = vmatprep.subr.mxu0 0.0
        %924 = vmatpush1.msra.mxu0 0.0
        %925 = vmatprep.subr.mxu0 0.0
        %926 = vmatpush1.msra.mxu0 0.0
        %927 = vmatprep.subr.mxu0 0.0
        %928 = vmatpush1.msra.mxu0 0.0
        %929 = vmatprep.subr.mxu0 0.0
        %930 = vmatpush1.msra.mxu0 0.0
        %931 = vmatprep.subr.mxu0 0.0
        %932 = vmatpush1.msra.mxu0 0.0
        %933 = vmatprep.subr.mxu0 0.0
        %934 = vmatpush1.msra.mxu0 0.0
        %935 = vmatprep.subr.mxu0 0.0
        %936 = vmatpush1.msra.mxu0 0.0
        %937 = vmatprep.subr.mxu0 0.0
        %938 = vmatpush1.msra.mxu0 0.0
        %939 = vmatprep.subr.mxu0 0.0
        %940 = vmatpush1.msra.mxu0 0.0
        %941 = vmatprep.subr.mxu0 0.0
        %942 = vmatpush1.msra.mxu0 0.0
        %943 = vmatprep.subr.mxu0 0.0
        %944 = vmatpush1.msra.mxu0 0.0
        %945 = vmatprep.subr.mxu0 0.0
        %946 = vmatpush1.msra.mxu0 0.0
        %947 = vmatprep.subr.mxu0 0.0
        %948 = vmatpush1.msra.mxu0 0.0
        %949 = vmatprep.subr.mxu0 0.0
        %950 = vmatpush1.msra.mxu0 %v491
        %951 = vmatprep.subr.mxu0 0.0
        %952 = vmatpush2.msra.mxu0 0.0
        %953 = vmatprep.subr.mxu0 0.0
        %954 = vmatpush2.msra.mxu0 0.0
        %955 = vmatprep.subr.mxu0 0.0
        %956 = vmatpush2.msra.mxu0 0.0
        %957 = vmatprep.subr.mxu0 0.0
        %958 = vmatpush2.msra.mxu0 0.0
        %959 = vmatprep.subr.mxu0 0.0
        %960 = vmatpush2.msra.mxu0 0.0
        %961 = vmatprep.subr.mxu0 0.0
        %962 = vmatpush2.msra.mxu0 0.0
        %963 = vmatprep.subr.mxu0 0.0
        %964 = vmatpush2.msra.mxu0 0.0
        %965 = vmatprep.subr.mxu0 0.0
        %966 = vmatpush2.msra.mxu0 0.0
        %967 = vmatprep.subr.mxu0 0.0
        %968 = vmatpush2.msra.mxu0 0.0
        %969 = vmatprep.subr.mxu0 0.0
        %970 = vmatpush2.msra.mxu0 0.0
        %971 = vmatprep.subr.mxu0 0.0
        %972 = vmatpush2.msra.mxu0 0.0
        %973 = vmatprep.subr.mxu0 0.0
        %974 = vmatpush2.msra.mxu0 0.0
        %975 = vmatprep.subr.mxu0 0.0
        %976 = vmatpush2.msra.mxu0 0.0
        %977 = vmatprep.subr.mxu0 0.0
        %978 = vmatpush2.msra.mxu0 0.0
        %979 = vmatprep.subr.mxu0 0.0
        %980 = vmatpush2.msra.mxu0 0.0
        %981 = vmatprep.subr.mxu0 0.0
        %982 = vmatpush2.msra.mxu0 0.0
        %983 = vmatprep.mubr.f32.mxu0 0.0
        %984 = vmatmul.mubr.f32.gmra.mxu0 %v914
        %v985 = vpop.f32.mrf.mxu0
        %v986 = vadd.f32 0.0, %v985
        %v987 = vpop.f32.mrf.mxu0
        %988 = vmatprep.mubr.f32.mxu0 0.0
        %989 = vmatmul.mubr.f32.gmra.mxu0 %v917
        %v990 = vpop.f32.mrf.mxu0
        %v991 = vadd.f32 0.0, %v990
        %v992 = vpop.f32.mrf.mxu0
        %993 = vdwg.mxu0
        %v994 = vpack.c.bf16 %v991, %v986
        %v996 = vunpack.c.l.b16 %v994
        %v997 = vunpack.c.h.b16 %v994
        %v998 = vpack.c.b16 %v996, %v996
        %v999 = vpack.c.b16 %v997, %v997
        %s1002 = scalar_lea.vmem [#allocation3], 16
        %1003 = vst.msk [vmem:[%s1002] sm:$0xf] %vm664, %v998
        %1004 = vst.msk [vmem:[%s1002 + $0x4] sm:$0xf] %vm664, %v999
        %s1005 = scalar_lea.vmem %s415, 24 [#allocation9]
        %v1006 = vld [vmem:[%s1005] sm:$0xff]
        %1007 = vmatprep.subr.mxu0 0.0
        %1008 = vmatpush1.msra.mxu0 0.0
        %1009 = vmatprep.subr.mxu0 0.0
        %1010 = vmatpush1.msra.mxu0 0.0
        %1011 = vmatprep.subr.mxu0 0.0
        %1012 = vmatpush1.msra.mxu0 0.0
        %1013 = vmatprep.subr.mxu0 0.0
        %1014 = vmatpush1.msra.mxu0 0.0
        %1015 = vmatprep.subr.mxu0 0.0
        %1016 = vmatpush1.msra.mxu0 0.0
        %1017 = vmatprep.subr.mxu0 0.0
        %1018 = vmatpush1.msra.mxu0 0.0
        %1019 = vmatprep.subr.mxu0 0.0
        %1020 = vmatpush1.msra.mxu0 0.0
        %1021 = vmatprep.subr.mxu0 0.0
        %1022 = vmatpush1.msra.mxu0 0.0
        %1023 = vmatprep.subr.mxu0 0.0
        %1024 = vmatpush1.msra.mxu0 0.0
        %1025 = vmatprep.subr.mxu0 0.0
        %1026 = vmatpush1.msra.mxu0 0.0
        %1027 = vmatprep.subr.mxu0 0.0
        %1028 = vmatpush1.msra.mxu0 0.0
        %1029 = vmatprep.subr.mxu0 0.0
        %1030 = vmatpush1.msra.mxu0 0.0
        %1031 = vmatprep.subr.mxu0 0.0
        %1032 = vmatpush1.msra.mxu0 0.0
        %1033 = vmatprep.subr.mxu0 0.0
        %1034 = vmatpush1.msra.mxu0 0.0
        %1035 = vmatprep.subr.mxu0 0.0
        %1036 = vmatpush1.msra.mxu0 0.0
        %1037 = vmatprep.subr.mxu0 0.0
        %1038 = vmatpush1.msra.mxu0 %v1006
        %1039 = vmatprep.subr.mxu0 0.0
        %1040 = vmatpush2.msra.mxu0 0.0
        %1041 = vmatprep.subr.mxu0 0.0
        %1042 = vmatpush2.msra.mxu0 0.0
        %1043 = vmatprep.subr.mxu0 0.0
        %1044 = vmatpush2.msra.mxu0 0.0
        %1045 = vmatprep.subr.mxu0 0.0
        %1046 = vmatpush2.msra.mxu0 0.0
        %1047 = vmatprep.subr.mxu0 0.0
        %1048 = vmatpush2.msra.mxu0 0.0
        %1049 = vmatprep.subr.mxu0 0.0
        %1050 = vmatpush2.msra.mxu0 0.0
        %1051 = vmatprep.subr.mxu0 0.0
        %1052 = vmatpush2.msra.mxu0 0.0
        %1053 = vmatprep.subr.mxu0 0.0
        %1054 = vmatpush2.msra.mxu0 0.0
        %1055 = vmatprep.subr.mxu0 0.0
        %1056 = vmatpush2.msra.mxu0 0.0
        %1057 = vmatprep.subr.mxu0 0.0
        %1058 = vmatpush2.msra.mxu0 0.0
        %1059 = vmatprep.subr.mxu0 0.0
        %1060 = vmatpush2.msra.mxu0 0.0
        %1061 = vmatprep.subr.mxu0 0.0
        %1062 = vmatpush2.msra.mxu0 0.0
        %1063 = vmatprep.subr.mxu0 0.0
        %1064 = vmatpush2.msra.mxu0 0.0
        %1065 = vmatprep.subr.mxu0 0.0
        %1066 = vmatpush2.msra.mxu0 0.0
        %1067 = vmatprep.subr.mxu0 0.0
        %1068 = vmatpush2.msra.mxu0 0.0
        %1069 = vmatprep.subr.mxu0 0.0
        %1070 = vmatpush2.msra.mxu0 0.0
        %1071 = vmatprep.mubr.f32.mxu0 0.0
        %1072 = vmatmul.mubr.f32.gmra.mxu0 %v495
        %v1073 = vpop.f32.mrf.mxu0
        %v1074 = vadd.f32 0.0, %v1073
        %v1075 = vpop.f32.mrf.mxu0
        %1076 = vmatprep.mubr.f32.mxu0 0.0
        %1077 = vmatmul.mubr.f32.gmra.mxu0 %v498
        %v1078 = vpop.f32.mrf.mxu0
        %v1079 = vadd.f32 0.0, %v1078
        %v1080 = vpop.f32.mrf.mxu0
        %1081 = vdwg.mxu0
        %v1083 = vsel %vm493, %v1074, 0
        %v1086 = vsel %vm493, %v1079, 0
        %1088 = vmatprep.subr.mxu0 0.0
        %1089 = vmatpush1.msra.mxu0 0.0
        %1090 = vmatprep.subr.mxu0 0.0
        %1091 = vmatpush1.msra.mxu0 0.0
        %1092 = vmatprep.subr.mxu0 0.0
        %1093 = vmatpush1.msra.mxu0 0.0
        %1094 = vmatprep.subr.mxu0 0.0
        %1095 = vmatpush1.msra.mxu0 0.0
        %1096 = vmatprep.subr.mxu0 0.0
        %1097 = vmatpush1.msra.mxu0 0.0
        %1098 = vmatprep.subr.mxu0 0.0
        %1099 = vmatpush1.msra.mxu0 0.0
        %1100 = vmatprep.subr.mxu0 0.0
        %1101 = vmatpush1.msra.mxu0 0.0
        %1102 = vmatprep.subr.mxu0 0.0
        %1103 = vmatpush1.msra.mxu0 0.0
        %1104 = vmatprep.subr.mxu0 0.0
        %1105 = vmatpush1.msra.mxu0 0.0
        %1106 = vmatprep.subr.mxu0 0.0
        %1107 = vmatpush1.msra.mxu0 0.0
        %1108 = vmatprep.subr.mxu0 0.0
        %1109 = vmatpush1.msra.mxu0 0.0
        %1110 = vmatprep.subr.mxu0 0.0
        %1111 = vmatpush1.msra.mxu0 0.0
        %1112 = vmatprep.subr.mxu0 0.0
        %1113 = vmatpush1.msra.mxu0 0.0
        %1114 = vmatprep.subr.mxu0 0.0
        %1115 = vmatpush1.msra.mxu0 0.0
        %1116 = vmatprep.subr.mxu0 0.0
        %1117 = vmatpush1.msra.mxu0 0.0
        %1118 = vmatprep.subr.mxu0 0.0
        %1119 = vmatpush1.msra.mxu0 %v491
        %1120 = vmatprep.subr.mxu0 0.0
        %1121 = vmatpush2.msra.mxu0 0.0
        %1122 = vmatprep.subr.mxu0 0.0
        %1123 = vmatpush2.msra.mxu0 0.0
        %1124 = vmatprep.subr.mxu0 0.0
        %1125 = vmatpush2.msra.mxu0 0.0
        %1126 = vmatprep.subr.mxu0 0.0
        %1127 = vmatpush2.msra.mxu0 0.0
        %1128 = vmatprep.subr.mxu0 0.0
        %1129 = vmatpush2.msra.mxu0 0.0
        %1130 = vmatprep.subr.mxu0 0.0
        %1131 = vmatpush2.msra.mxu0 0.0
        %1132 = vmatprep.subr.mxu0 0.0
        %1133 = vmatpush2.msra.mxu0 0.0
        %1134 = vmatprep.subr.mxu0 0.0
        %1135 = vmatpush2.msra.mxu0 0.0
        %1136 = vmatprep.subr.mxu0 0.0
        %1137 = vmatpush2.msra.mxu0 0.0
        %1138 = vmatprep.subr.mxu0 0.0
        %1139 = vmatpush2.msra.mxu0 0.0
        %1140 = vmatprep.subr.mxu0 0.0
        %1141 = vmatpush2.msra.mxu0 0.0
        %1142 = vmatprep.subr.mxu0 0.0
        %1143 = vmatpush2.msra.mxu0 0.0
        %1144 = vmatprep.subr.mxu0 0.0
        %1145 = vmatpush2.msra.mxu0 0.0
        %1146 = vmatprep.subr.mxu0 0.0
        %1147 = vmatpush2.msra.mxu0 0.0
        %1148 = vmatprep.subr.mxu0 0.0
        %1149 = vmatpush2.msra.mxu0 0.0
        %1150 = vmatprep.subr.mxu0 0.0
        %1151 = vmatpush2.msra.mxu0 0.0
        %1152 = vmatprep.mubr.f32.mxu0 0.0
        %1153 = vmatmul.mubr.f32.gmra.mxu0 %v1083
        %v1154 = vpop.f32.mrf.mxu0
        %v1155 = vadd.f32 0.0, %v1154
        %v1156 = vpop.f32.mrf.mxu0
        %1157 = vmatprep.mubr.f32.mxu0 0.0
        %1158 = vmatmul.mubr.f32.gmra.mxu0 %v1086
        %v1159 = vpop.f32.mrf.mxu0
        %v1160 = vadd.f32 0.0, %v1159
        %v1161 = vpop.f32.mrf.mxu0
        %1162 = vdwg.mxu0
        %v1163 = vpack.c.bf16 %v1160, %v1155
        %v1165 = vunpack.c.l.b16 %v1163
        %v1166 = vunpack.c.h.b16 %v1163
        %v1167 = vpack.c.b16 %v1165, %v1165
        %v1168 = vpack.c.b16 %v1166, %v1166
        %s1171 = scalar_lea.vmem [#allocation3], 24
        %1172 = vst.msk [vmem:[%s1171] sm:$0xf] %vm664, %v1167
        %1173 = vst.msk [vmem:[%s1171 + $0x4] sm:$0xf] %vm664, %v1168
        %1174 = vst [vmem:[#allocation2] sm:$0xff] 0
        %vm1175 = vcmask 1043456
        %vm1176 = vcmask 490500
        %vm1177 = vmor %vm1176, %vm1175
        %1178 = vst.msk [vmem:[#allocation2 + $0x8] sm:$0xff] %vm1177, 0
        %1179 = vst [vmem:[#allocation2 + $0x10] sm:$0xff] 0
        %1180 = vst.msk [vmem:[#allocation2 + $0x18] sm:$0xff] %vm1177, 0
        %v1181 = vld [vmem:[%s388] sm:$0x1]
        %v1182 = vld [vmem:[%s388 + $0x10] sm:$0x1]
        %v1183 = vld [vmem:[%s388 + $0x20] sm:$0x1]
        %v1184 = vld [vmem:[%s388 + $0x30] sm:$0x1]
        %v1185 = vpack.c.bf16 %v1181, %v1181
        %v1186 = vpack.c.bf16 %v1182, %v1182
        %v1187 = vpack.c.bf16 %v1183, %v1183
        %v1188 = vpack.c.bf16 %v1184, %v1184
        %v1193 = vunpack.c.l.b16 %v1185
        %v1194 = vunpack.c.l.b16 %v1186
        %v1195 = vunpack.c.l.b16 %v1187
        %v1196 = vunpack.c.l.b16 %v1188
        %v1197 = vpack.c.b16 %v1193, %v1193
        %v1198 = vpack.c.b16 %v1194, %v1194
        %v1199 = vpack.c.b16 %v1195, %v1195
        %v1200 = vpack.c.b16 %v1196, %v1196
        %v1201 = vunpack.c.l.b16 %v1197
        %v1202 = vunpack.c.l.b16 %v1198
        %v1203 = vunpack.c.l.b16 %v1199
        %v1204 = vunpack.c.l.b16 %v1200
        %v1205 = vrot.slane %v1202, 7
        %vm1206 = vcmask 1041409
        %v1207 = vsel %vm1206, %v1205, %v1201
        %v1208 = vrot.slane %v1203, 6
        %vm1209 = vcmask 1042434
        %v1210 = vsel %vm1209, %v1208, %v1207
        %v1211 = vrot.slane %v1204, 5
        %vm1212 = vcmask 1043459
        %v1213 = vsel %vm1212, %v1211, %v1210
        %v1214 = vpack.c.b16 %v1213, %v1213
        %1215 = vrot.lane.b32.xlu0 %v1214, 49
        %v1216 = vpop.permute.xlu0 %1215
        %vm1218 = vcmask 525704
        %1219 = vst.msk [vmem:[#allocation2] sm:$0x3] %vm1218, %v1216
        %v1220 = vld [vmem:[%s397] sm:$0x1]
        %v1221 = vld [vmem:[%s397 + $0x10] sm:$0x1]
        %v1222 = vld [vmem:[%s397 + $0x20] sm:$0x1]
        %v1223 = vld [vmem:[%s397 + $0x30] sm:$0x1]
        %v1224 = vpack.c.bf16 %v1220, %v1220
        %v1225 = vpack.c.bf16 %v1221, %v1221
        %v1226 = vpack.c.bf16 %v1222, %v1222
        %v1227 = vpack.c.bf16 %v1223, %v1223
        %v1232 = vunpack.c.l.b16 %v1224
        %v1233 = vunpack.c.l.b16 %v1225
        %v1234 = vunpack.c.l.b16 %v1226
        %v1235 = vunpack.c.l.b16 %v1227
        %v1236 = vpack.c.b16 %v1232, %v1232
        %v1237 = vpack.c.b16 %v1233, %v1233
        %v1238 = vpack.c.b16 %v1234, %v1234
        %v1239 = vpack.c.b16 %v1235, %v1235
        %v1240 = vunpack.c.l.b16 %v1236
        %v1241 = vunpack.c.l.b16 %v1237
        %v1242 = vunpack.c.l.b16 %v1238
        %v1243 = vunpack.c.l.b16 %v1239
        %v1244 = vrot.slane %v1240, 4
        %v1245 = vrot.slane %v1241, 3
        %vm1246 = vcmask 1045509
        %v1247 = vsel %vm1246, %v1245, %v1244
        %v1248 = vrot.slane %v1242, 2
        %vm1249 = vcmask 1046534
        %v1250 = vsel %vm1249, %v1248, %v1247
        %v1251 = vrot.slane %v1243, 1
        %vm1252 = vcmask 1047559
        %v1253 = vsel %vm1252, %v1251, %v1250
        %v1254 = vpack.c.b16 %v1253, %v1253
        %1255 = vrot.lane.b32.xlu0 %v1254, 49
        %v1256 = vpop.permute.xlu0 %1255
        %vm1258 = vcmask 527754
        %1259 = vst.msk [vmem:[#allocation2] sm:$0xc] %vm1258, %v1256
        %v1260 = vld [vmem:[%s406] sm:$0x1]
        %v1261 = vld [vmem:[%s406 + $0x10] sm:$0x1]
        %v1262 = vld [vmem:[%s406 + $0x20] sm:$0x1]
        %v1263 = vld [vmem:[%s406 + $0x30] sm:$0x1]
        %v1264 = vpack.c.bf16 %v1260, %v1260
        %v1265 = vpack.c.bf16 %v1261, %v1261
        %v1266 = vpack.c.bf16 %v1262, %v1262
        %v1267 = vpack.c.bf16 %v1263, %v1263
        %v1272 = vunpack.c.l.b16 %v1264
        %v1273 = vunpack.c.l.b16 %v1265
        %v1274 = vunpack.c.l.b16 %v1266
        %v1275 = vunpack.c.l.b16 %v1267
        %v1276 = vpack.c.b16 %v1272, %v1272
        %v1277 = vpack.c.b16 %v1273, %v1273
        %v1278 = vpack.c.b16 %v1274, %v1274
        %v1279 = vpack.c.b16 %v1275, %v1275
        %v1280 = vunpack.c.l.b16 %v1276
        %v1281 = vunpack.c.l.b16 %v1277
        %v1282 = vunpack.c.l.b16 %v1278
        %v1283 = vunpack.c.l.b16 %v1279
        %v1284 = vrot.slane %v1281, 7
        %v1285 = vsel %vm1206, %v1284, %v1280
        %v1286 = vrot.slane %v1282, 6
        %v1287 = vsel %vm1209, %v1286, %v1285
        %v1288 = vrot.slane %v1283, 5
        %v1289 = vsel %vm1212, %v1288, %v1287
        %v1290 = vpack.c.b16 %v1289, %v1289
        %1291 = vrot.lane.b32.xlu0 %v1290, 49
        %v1292 = vpop.permute.xlu0 %1291
        %1294 = vst.msk [vmem:[#allocation2 + $0x10] sm:$0x3] %vm1218, %v1292
        %v1295 = vld [vmem:[#allocation3] sm:$0x1]
        %v1296 = vld [vmem:[#allocation3 + $0x8] sm:$0x1]
        %v1297 = vld [vmem:[#allocation3 + $0x10] sm:$0x1]
        %v1298 = vld [vmem:[#allocation3 + $0x18] sm:$0x1]
        %v1303 = vunpack.c.l.b16 %v1295
        %v1304 = vunpack.c.l.b16 %v1296
        %v1305 = vunpack.c.l.b16 %v1297
        %v1306 = vunpack.c.l.b16 %v1298
        %v1307 = vrot.slane %v1303, 4
        %v1308 = vrot.slane %v1304, 3
        %v1309 = vsel %vm1246, %v1308, %v1307
        %v1310 = vrot.slane %v1305, 2
        %v1311 = vsel %vm1249, %v1310, %v1309
        %v1312 = vrot.slane %v1306, 1
        %v1313 = vsel %vm1252, %v1312, %v1311
        %v1314 = vpack.c.b16 %v1313, %v1313
        %1315 = vrot.lane.b32.xlu0 %v1314, 49
        %v1316 = vpop.permute.xlu0 %1315
        %1318 = vst.msk [vmem:[#allocation2 + $0x10] sm:$0xc] %vm1258, %v1316
        %v1319 = vld [vmem:[%s388 + $0x1] sm:$0x1]
        %v1320 = vld [vmem:[%s388 + $0x11] sm:$0x1]
        %v1321 = vld [vmem:[%s388 + $0x21] sm:$0x1]
        %v1322 = vld [vmem:[%s388 + $0x31] sm:$0x1]
        %v1323 = vpack.c.bf16 %v1319, %v1319
        %v1324 = vpack.c.bf16 %v1320, %v1320
        %v1325 = vpack.c.bf16 %v1321, %v1321
        %v1326 = vpack.c.bf16 %v1322, %v1322
        %v1331 = vunpack.c.l.b16 %v1323
        %v1332 = vunpack.c.l.b16 %v1324
        %v1333 = vunpack.c.l.b16 %v1325
        %v1334 = vunpack.c.l.b16 %v1326
        %v1335 = vpack.c.b16 %v1331, %v1331
        %v1336 = vpack.c.b16 %v1332, %v1332
        %v1337 = vpack.c.b16 %v1333, %v1333
        %v1338 = vpack.c.b16 %v1334, %v1334
        %v1339 = vunpack.c.l.b16 %v1335
        %v1340 = vunpack.c.l.b16 %v1336
        %v1341 = vunpack.c.l.b16 %v1337
        %v1342 = vunpack.c.l.b16 %v1338
        %v1343 = vrot.slane %v1340, 7
        %v1344 = vsel %vm1206, %v1343, %v1339
        %v1345 = vrot.slane %v1341, 6
        %v1346 = vsel %vm1209, %v1345, %v1344
        %v1347 = vrot.slane %v1342, 5
        %v1348 = vsel %vm1212, %v1347, %v1346
        %v1349 = vpack.c.b16 %v1348, %v1348
        %1350 = vrot.lane.b32.xlu0 %v1349, 71
        %v1351 = vpop.permute.xlu0 %1350
        %vm1353 = vcmask 706104
        %1354 = vst.msk [vmem:[#allocation2] sm:$0x3] %vm1353, %v1351
        %v1355 = vld [vmem:[%s397 + $0x1] sm:$0x1]
        %v1356 = vld [vmem:[%s397 + $0x11] sm:$0x1]
        %v1357 = vld [vmem:[%s397 + $0x21] sm:$0x1]
        %v1358 = vld [vmem:[%s397 + $0x31] sm:$0x1]
        %v1359 = vpack.c.bf16 %v1355, %v1355
        %v1360 = vpack.c.bf16 %v1356, %v1356
        %v1361 = vpack.c.bf16 %v1357, %v1357
        %v1362 = vpack.c.bf16 %v1358, %v1358
        %v1367 = vunpack.c.l.b16 %v1359
        %v1368 = vunpack.c.l.b16 %v1360
        %v1369 = vunpack.c.l.b16 %v1361
        %v1370 = vunpack.c.l.b16 %v1362
        %v1371 = vpack.c.b16 %v1367, %v1367
        %v1372 = vpack.c.b16 %v1368, %v1368
        %v1373 = vpack.c.b16 %v1369, %v1369
        %v1374 = vpack.c.b16 %v1370, %v1370
        %v1375 = vunpack.c.l.b16 %v1371
        %v1376 = vunpack.c.l.b16 %v1372
        %v1377 = vunpack.c.l.b16 %v1373
        %v1378 = vunpack.c.l.b16 %v1374
        %v1379 = vrot.slane %v1375, 4
        %v1380 = vrot.slane %v1376, 3
        %v1381 = vsel %vm1246, %v1380, %v1379
        %v1382 = vrot.slane %v1377, 2
        %v1383 = vsel %vm1249, %v1382, %v1381
        %v1384 = vrot.slane %v1378, 1
        %v1385 = vsel %vm1252, %v1384, %v1383
        %v1386 = vpack.c.b16 %v1385, %v1385
        %1387 = vrot.lane.b32.xlu0 %v1386, 71
        %v1388 = vpop.permute.xlu0 %1387
        %vm1390 = vcmask 708154
        %1391 = vst.msk [vmem:[#allocation2] sm:$0xc] %vm1390, %v1388
        %v1392 = vld [vmem:[%s406 + $0x1] sm:$0x1]
        %v1393 = vld [vmem:[%s406 + $0x11] sm:$0x1]
        %v1394 = vld [vmem:[%s406 + $0x21] sm:$0x1]
        %v1395 = vld [vmem:[%s406 + $0x31] sm:$0x1]
        %v1396 = vpack.c.bf16 %v1392, %v1392
        %v1397 = vpack.c.bf16 %v1393, %v1393
        %v1398 = vpack.c.bf16 %v1394, %v1394
        %v1399 = vpack.c.bf16 %v1395, %v1395
        %v1404 = vunpack.c.l.b16 %v1396
        %v1405 = vunpack.c.l.b16 %v1397
        %v1406 = vunpack.c.l.b16 %v1398
        %v1407 = vunpack.c.l.b16 %v1399
        %v1408 = vpack.c.b16 %v1404, %v1404
        %v1409 = vpack.c.b16 %v1405, %v1405
        %v1410 = vpack.c.b16 %v1406, %v1406
        %v1411 = vpack.c.b16 %v1407, %v1407
        %v1412 = vunpack.c.l.b16 %v1408
        %v1413 = vunpack.c.l.b16 %v1409
        %v1414 = vunpack.c.l.b16 %v1410
        %v1415 = vunpack.c.l.b16 %v1411
        %v1416 = vrot.slane %v1413, 7
        %v1417 = vsel %vm1206, %v1416, %v1412
        %v1418 = vrot.slane %v1414, 6
        %v1419 = vsel %vm1209, %v1418, %v1417
        %v1420 = vrot.slane %v1415, 5
        %v1421 = vsel %vm1212, %v1420, %v1419
        %v1422 = vpack.c.b16 %v1421, %v1421
        %1423 = vrot.lane.b32.xlu0 %v1422, 71
        %v1424 = vpop.permute.xlu0 %1423
        %1426 = vst.msk [vmem:[#allocation2 + $0x10] sm:$0x3] %vm1353, %v1424
        %v1427 = vld [vmem:[#allocation3] sm:$0x1]
        %v1428 = vld [vmem:[#allocation3 + $0x8] sm:$0x1]
        %v1429 = vld [vmem:[#allocation3 + $0x10] sm:$0x1]
        %v1430 = vld [vmem:[#allocation3 + $0x18] sm:$0x1]
        %v1435 = vunpack.c.l.b16 %v1427
        %v1436 = vunpack.c.l.b16 %v1428
        %v1437 = vunpack.c.l.b16 %v1429
        %v1438 = vunpack.c.l.b16 %v1430
        %v1439 = vrot.slane %v1435, 5
        %v1440 = vrot.slane %v1436, 4
        %v1441 = vsel %vm1246, %v1440, %v1439
        %v1442 = vrot.slane %v1437, 3
        %v1443 = vsel %vm1249, %v1442, %v1441
        %v1444 = vrot.slane %v1438, 2
        %v1445 = vsel %vm1252, %v1444, %v1443
        %v1446 = vpack.c.b16 %v1445, %v1445
        %1447 = vrot.lane.b32.xlu0 %v1446, 71
        %v1448 = vpop.permute.xlu0 %1447
        %1450 = vst.msk [vmem:[#allocation2 + $0x10] sm:$0xc] %vm1390, %v1448
        %v1451 = vld [vmem:[%s388 + $0x2] sm:$0x1]
        %v1452 = vld [vmem:[%s388 + $0x12] sm:$0x1]
        %v1453 = vld [vmem:[%s388 + $0x22] sm:$0x1]
        %v1454 = vld [vmem:[%s388 + $0x32] sm:$0x1]
        %v1455 = vpack.c.bf16 %v1451, %v1451
        %v1456 = vpack.c.bf16 %v1452, %v1452
        %v1457 = vpack.c.bf16 %v1453, %v1453
        %v1458 = vpack.c.bf16 %v1454, %v1454
        %v1463 = vunpack.c.l.b16 %v1455
        %v1464 = vunpack.c.l.b16 %v1456
        %v1465 = vunpack.c.l.b16 %v1457
        %v1466 = vunpack.c.l.b16 %v1458
        %v1467 = vpack.c.b16 %v1463, %v1463
        %v1468 = vpack.c.b16 %v1464, %v1464
        %v1469 = vpack.c.b16 %v1465, %v1465
        %v1470 = vpack.c.b16 %v1466, %v1466
        %v1471 = vunpack.c.l.b16 %v1467
        %v1472 = vunpack.c.l.b16 %v1468
        %v1473 = vunpack.c.l.b16 %v1469
        %v1474 = vunpack.c.l.b16 %v1470
        %v1475 = vrot.slane %v1472, 7
        %v1476 = vsel %vm1206, %v1475, %v1471
        %v1477 = vrot.slane %v1473, 6
        %v1478 = vsel %vm1209, %v1477, %v1476
        %v1479 = vrot.slane %v1474, 5
        %v1480 = vsel %vm1212, %v1479, %v1478
        %v1481 = vpack.c.b16 %v1480, %v1480
        %1482 = vrot.lane.b32.xlu0 %v1481, 93
        %v1483 = vpop.permute.xlu0 %1482
        %vm1485 = vcmask 886504
        %1486 = vst.msk [vmem:[#allocation2] sm:$0x3] %vm1485, %v1483
        %v1487 = vld [vmem:[%s397 + $0x2] sm:$0x1]
        %v1488 = vld [vmem:[%s397 + $0x12] sm:$0x1]
        %v1489 = vld [vmem:[%s397 + $0x22] sm:$0x1]
        %v1490 = vld [vmem:[%s397 + $0x32] sm:$0x1]
        %v1491 = vpack.c.bf16 %v1487, %v1487
        %v1492 = vpack.c.bf16 %v1488, %v1488
        %v1493 = vpack.c.bf16 %v1489, %v1489
        %v1494 = vpack.c.bf16 %v1490, %v1490
        %v1499 = vunpack.c.l.b16 %v1491
        %v1500 = vunpack.c.l.b16 %v1492
        %v1501 = vunpack.c.l.b16 %v1493
        %v1502 = vunpack.c.l.b16 %v1494
        %v1503 = vpack.c.b16 %v1499, %v1499
        %v1504 = vpack.c.b16 %v1500, %v1500
        %v1505 = vpack.c.b16 %v1501, %v1501
        %v1506 = vpack.c.b16 %v1502, %v1502
        %v1507 = vunpack.c.l.b16 %v1503
        %v1508 = vunpack.c.l.b16 %v1504
        %v1509 = vunpack.c.l.b16 %v1505
        %v1510 = vunpack.c.l.b16 %v1506
        %v1511 = vrot.slane %v1507, 4
        %v1512 = vrot.slane %v1508, 3
        %v1513 = vsel %vm1246, %v1512, %v1511
        %v1514 = vrot.slane %v1509, 2
        %v1515 = vsel %vm1249, %v1514, %v1513
        %v1516 = vrot.slane %v1510, 1
        %v1517 = vsel %vm1252, %v1516, %v1515
        %v1518 = vpack.c.b16 %v1517, %v1517
        %1519 = vrot.lane.b32.xlu0 %v1518, 93
        %v1520 = vpop.permute.xlu0 %1519
        %vm1522 = vcmask 888554
        %1523 = vst.msk [vmem:[#allocation2] sm:$0xc] %vm1522, %v1520
        %v1524 = vld [vmem:[%s406 + $0x2] sm:$0x1]
        %v1525 = vld [vmem:[%s406 + $0x12] sm:$0x1]
        %v1526 = vld [vmem:[%s406 + $0x22] sm:$0x1]
        %v1527 = vld [vmem:[%s406 + $0x32] sm:$0x1]
        %v1528 = vpack.c.bf16 %v1524, %v1524
        %v1529 = vpack.c.bf16 %v1525, %v1525
        %v1530 = vpack.c.bf16 %v1526, %v1526
        %v1531 = vpack.c.bf16 %v1527, %v1527
        %v1536 = vunpack.c.l.b16 %v1528
        %v1537 = vunpack.c.l.b16 %v1529
        %v1538 = vunpack.c.l.b16 %v1530
        %v1539 = vunpack.c.l.b16 %v1531
        %v1540 = vpack.c.b16 %v1536, %v1536
        %v1541 = vpack.c.b16 %v1537, %v1537
        %v1542 = vpack.c.b16 %v1538, %v1538
        %v1543 = vpack.c.b16 %v1539, %v1539
        %v1544 = vunpack.c.l.b16 %v1540
        %v1545 = vunpack.c.l.b16 %v1541
        %v1546 = vunpack.c.l.b16 %v1542
        %v1547 = vunpack.c.l.b16 %v1543
        %v1548 = vrot.slane %v1545, 7
        %v1549 = vsel %vm1206, %v1548, %v1544
        %v1550 = vrot.slane %v1546, 6
        %v1551 = vsel %vm1209, %v1550, %v1549
        %v1552 = vrot.slane %v1547, 5
        %v1553 = vsel %vm1212, %v1552, %v1551
        %v1554 = vpack.c.b16 %v1553, %v1553
        %1555 = vrot.lane.b32.xlu0 %v1554, 93
        %v1556 = vpop.permute.xlu0 %1555
        %1558 = vst.msk [vmem:[#allocation2 + $0x10] sm:$0x3] %vm1485, %v1556
        %v1559 = vld [vmem:[#allocation3] sm:$0x2]
        %v1560 = vld [vmem:[#allocation3 + $0x8] sm:$0x2]
        %v1561 = vld [vmem:[#allocation3 + $0x10] sm:$0x2]
        %v1562 = vld [vmem:[#allocation3 + $0x18] sm:$0x2]
        %v1567 = vunpack.c.l.b16 %v1559
        %v1568 = vunpack.c.l.b16 %v1560
        %v1569 = vunpack.c.l.b16 %v1561
        %v1570 = vunpack.c.l.b16 %v1562
        %v1571 = vrot.slane %v1567, 6
        %v1572 = vrot.slane %v1568, 5
        %v1573 = vsel %vm1246, %v1572, %v1571
        %v1574 = vrot.slane %v1569, 4
        %v1575 = vsel %vm1249, %v1574, %v1573
        %v1576 = vrot.slane %v1570, 3
        %v1577 = vsel %vm1252, %v1576, %v1575
        %v1578 = vpack.c.b16 %v1577, %v1577
        %1579 = vrot.lane.b32.xlu0 %v1578, 93
        %v1580 = vpop.permute.xlu0 %1579
        %1582 = vst.msk [vmem:[#allocation2 + $0x10] sm:$0xc] %vm1522, %v1580
        %v1583 = vld [vmem:[%s388 + $0x3] sm:$0x1]
        %v1584 = vld [vmem:[%s388 + $0x13] sm:$0x1]
        %v1585 = vld [vmem:[%s388 + $0x23] sm:$0x1]
        %v1586 = vld [vmem:[%s388 + $0x33] sm:$0x1]
        %v1587 = vpack.c.bf16 %v1583, %v1583
        %v1588 = vpack.c.bf16 %v1584, %v1584
        %v1589 = vpack.c.bf16 %v1585, %v1585
        %v1590 = vpack.c.bf16 %v1586, %v1586
        %v1595 = vunpack.c.l.b16 %v1587
        %v1596 = vunpack.c.l.b16 %v1588
        %v1597 = vunpack.c.l.b16 %v1589
        %v1598 = vunpack.c.l.b16 %v1590
        %v1599 = vpack.c.b16 %v1595, %v1595
        %v1600 = vpack.c.b16 %v1596, %v1596
        %v1601 = vpack.c.b16 %v1597, %v1597
        %v1602 = vpack.c.b16 %v1598, %v1598
        %v1603 = vunpack.c.l.b16 %v1599
        %v1604 = vunpack.c.l.b16 %v1600
        %v1605 = vunpack.c.l.b16 %v1601
        %v1606 = vunpack.c.l.b16 %v1602
        %v1607 = vrot.slane %v1604, 7
        %v1608 = vsel %vm1206, %v1607, %v1603
        %v1609 = vrot.slane %v1605, 6
        %v1610 = vsel %vm1209, %v1609, %v1608
        %v1611 = vrot.slane %v1606, 5
        %v1612 = vsel %vm1212, %v1611, %v1610
        %v1613 = vpack.c.b16 %v1612, %v1612
        %1614 = vrot.lane.b32.xlu0 %v1613, 115
        %v1615 = vpop.permute.xlu0 %1614
        %v1616 = vrot.slane %v1615, 4
        %vm1617 = vcmask 941056
        %v1618 = vsel %vm1617, %v1616, %v1615
        %vm1620 = vcmask 1042328
        %vm1621 = vcmask 21508
        %vm1622 = vmor %vm1621, %vm1620
        %1623 = vst.msk [vmem:[#allocation2] sm:$0x33] %vm1622, %v1618
        %v1624 = vld [vmem:[%s397 + $0x3] sm:$0x1]
        %v1625 = vld [vmem:[%s397 + $0x13] sm:$0x1]
        %v1626 = vld [vmem:[%s397 + $0x23] sm:$0x1]
        %v1627 = vld [vmem:[%s397 + $0x33] sm:$0x1]
        %v1628 = vpack.c.bf16 %v1624, %v1624
        %v1629 = vpack.c.bf16 %v1625, %v1625
        %v1630 = vpack.c.bf16 %v1626, %v1626
        %v1631 = vpack.c.bf16 %v1627, %v1627
        %v1636 = vunpack.c.l.b16 %v1628
        %v1637 = vunpack.c.l.b16 %v1629
        %v1638 = vunpack.c.l.b16 %v1630
        %v1639 = vunpack.c.l.b16 %v1631
        %v1640 = vpack.c.b16 %v1636, %v1636
        %v1641 = vpack.c.b16 %v1637, %v1637
        %v1642 = vpack.c.b16 %v1638, %v1638
        %v1643 = vpack.c.b16 %v1639, %v1639
        %v1644 = vunpack.c.l.b16 %v1640
        %v1645 = vunpack.c.l.b16 %v1641
        %v1646 = vunpack.c.l.b16 %v1642
        %v1647 = vunpack.c.l.b16 %v1643
        %v1648 = vrot.slane %v1644, 4
        %v1649 = vrot.slane %v1645, 3
        %v1650 = vsel %vm1246, %v1649, %v1648
        %v1651 = vrot.slane %v1646, 2
        %v1652 = vsel %vm1249, %v1651, %v1650
        %v1653 = vrot.slane %v1647, 1
        %v1654 = vsel %vm1252, %v1653, %v1652
        %v1655 = vpack.c.b16 %v1654, %v1654
        %1656 = vrot.lane.b32.xlu0 %v1655, 115
        %v1657 = vpop.permute.xlu0 %1656
        %v1658 = vrot.slane %v1657, 4
        %v1659 = vsel %vm1617, %v1658, %v1657
        %vm1661 = vcmask 1044378
        %vm1662 = vcmask 23558
        %vm1663 = vmor %vm1662, %vm1661
        %1664 = vst.msk [vmem:[#allocation2] sm:$0xcc] %vm1663, %v1659
        %v1665 = vld [vmem:[%s406 + $0x3] sm:$0x1]
        %v1666 = vld [vmem:[%s406 + $0x13] sm:$0x1]
        %v1667 = vld [vmem:[%s406 + $0x23] sm:$0x1]
        %v1668 = vld [vmem:[%s406 + $0x33] sm:$0x1]
        %v1669 = vpack.c.bf16 %v1665, %v1665
        %v1670 = vpack.c.bf16 %v1666, %v1666
        %v1671 = vpack.c.bf16 %v1667, %v1667
        %v1672 = vpack.c.bf16 %v1668, %v1668
        %v1677 = vunpack.c.l.b16 %v1669
        %v1678 = vunpack.c.l.b16 %v1670
        %v1679 = vunpack.c.l.b16 %v1671
        %v1680 = vunpack.c.l.b16 %v1672
        %v1681 = vpack.c.b16 %v1677, %v1677
        %v1682 = vpack.c.b16 %v1678, %v1678
        %v1683 = vpack.c.b16 %v1679, %v1679
        %v1684 = vpack.c.b16 %v1680, %v1680
        %v1685 = vunpack.c.l.b16 %v1681
        %v1686 = vunpack.c.l.b16 %v1682
        %v1687 = vunpack.c.l.b16 %v1683
        %v1688 = vunpack.c.l.b16 %v1684
        %v1689 = vrot.slane %v1686, 7
        %v1690 = vsel %vm1206, %v1689, %v1685
        %v1691 = vrot.slane %v1687, 6
        %v1692 = vsel %vm1209, %v1691, %v1690
        %v1693 = vrot.slane %v1688, 5
        %v1694 = vsel %vm1212, %v1693, %v1692
        %v1695 = vpack.c.b16 %v1694, %v1694
        %1696 = vrot.lane.b32.xlu0 %v1695, 115
        %v1697 = vpop.permute.xlu0 %1696
        %v1698 = vrot.slane %v1697, 4
        %v1699 = vsel %vm1617, %v1698, %v1697
        %1701 = vst.msk [vmem:[#allocation2 + $0x10] sm:$0x33] %vm1622, %v1699
        %v1702 = vld [vmem:[#allocation3] sm:$0x2]
        %v1703 = vld [vmem:[#allocation3 + $0x8] sm:$0x2]
        %v1704 = vld [vmem:[#allocation3 + $0x10] sm:$0x2]
        %v1705 = vld [vmem:[#allocation3 + $0x18] sm:$0x2]
        %v1710 = vunpack.c.l.b16 %v1702
        %v1711 = vunpack.c.l.b16 %v1703
        %v1712 = vunpack.c.l.b16 %v1704
        %v1713 = vunpack.c.l.b16 %v1705
        %v1714 = vrot.slane %v1710, 7
        %v1715 = vrot.slane %v1711, 6
        %v1716 = vsel %vm1246, %v1715, %v1714
        %v1717 = vrot.slane %v1712, 5
        %v1718 = vsel %vm1249, %v1717, %v1716
        %v1719 = vrot.slane %v1713, 4
        %v1720 = vsel %vm1252, %v1719, %v1718
        %v1721 = vpack.c.b16 %v1720, %v1720
        %1722 = vrot.lane.b32.xlu0 %v1721, 115
        %v1723 = vpop.permute.xlu0 %1722
        %v1724 = vrot.slane %v1723, 4
        %v1725 = vsel %vm1617, %v1724, %v1723
        %1727 = vst.msk [vmem:[#allocation2 + $0x10] sm:$0xcc] %vm1663, %v1725
        %v1728 = vld [vmem:[%s388 + $0x4] sm:$0x1]
        %v1729 = vld [vmem:[%s388 + $0x14] sm:$0x1]
        %v1730 = vld [vmem:[%s388 + $0x24] sm:$0x1]
        %v1731 = vld [vmem:[%s388 + $0x34] sm:$0x1]
        %v1732 = vpack.c.bf16 %v1728, %v1728
        %v1733 = vpack.c.bf16 %v1729, %v1729
        %v1734 = vpack.c.bf16 %v1730, %v1730
        %v1735 = vpack.c.bf16 %v1731, %v1731
        %v1740 = vunpack.c.l.b16 %v1732
        %v1741 = vunpack.c.l.b16 %v1733
        %v1742 = vunpack.c.l.b16 %v1734
        %v1743 = vunpack.c.l.b16 %v1735
        %v1744 = vpack.c.b16 %v1740, %v1740
        %v1745 = vpack.c.b16 %v1741, %v1741
        %v1746 = vpack.c.b16 %v1742, %v1742
        %v1747 = vpack.c.b16 %v1743, %v1743
        %v1748 = vunpack.c.l.b16 %v1744
        %v1749 = vunpack.c.l.b16 %v1745
        %v1750 = vunpack.c.l.b16 %v1746
        %v1751 = vunpack.c.l.b16 %v1747
        %v1752 = vrot.slane %v1749, 7
        %v1753 = vsel %vm1206, %v1752, %v1748
        %v1754 = vrot.slane %v1750, 6
        %v1755 = vsel %vm1209, %v1754, %v1753
        %v1756 = vrot.slane %v1751, 5
        %v1757 = vsel %vm1212, %v1756, %v1755
        %v1758 = vpack.c.b16 %v1757, %v1757
        %1759 = vrot.lane.b32.xlu0 %v1758, 9
        %v1760 = vpop.permute.xlu0 %1759
        %vm1762 = vcmask 197704
        %1763 = vst.msk [vmem:[#allocation2 + $0x4] sm:$0x3] %vm1762, %v1760
        %v1764 = vld [vmem:[%s397 + $0x4] sm:$0x1]
        %v1765 = vld [vmem:[%s397 + $0x14] sm:$0x1]
        %v1766 = vld [vmem:[%s397 + $0x24] sm:$0x1]
        %v1767 = vld [vmem:[%s397 + $0x34] sm:$0x1]
        %v1768 = vpack.c.bf16 %v1764, %v1764
        %v1769 = vpack.c.bf16 %v1765, %v1765
        %v1770 = vpack.c.bf16 %v1766, %v1766
        %v1771 = vpack.c.bf16 %v1767, %v1767
        %v1776 = vunpack.c.l.b16 %v1768
        %v1777 = vunpack.c.l.b16 %v1769
        %v1778 = vunpack.c.l.b16 %v1770
        %v1779 = vunpack.c.l.b16 %v1771
        %v1780 = vpack.c.b16 %v1776, %v1776
        %v1781 = vpack.c.b16 %v1777, %v1777
        %v1782 = vpack.c.b16 %v1778, %v1778
        %v1783 = vpack.c.b16 %v1779, %v1779
        %v1784 = vunpack.c.l.b16 %v1780
        %v1785 = vunpack.c.l.b16 %v1781
        %v1786 = vunpack.c.l.b16 %v1782
        %v1787 = vunpack.c.l.b16 %v1783
        %v1788 = vrot.slane %v1784, 4
        %v1789 = vrot.slane %v1785, 3
        %v1790 = vsel %vm1246, %v1789, %v1788
        %v1791 = vrot.slane %v1786, 2
        %v1792 = vsel %vm1249, %v1791, %v1790
        %v1793 = vrot.slane %v1787, 1
        %v1794 = vsel %vm1252, %v1793, %v1792
        %v1795 = vpack.c.b16 %v1794, %v1794
        %1796 = vrot.lane.b32.xlu0 %v1795, 9
        %v1797 = vpop.permute.xlu0 %1796
        %vm1799 = vcmask 199754
        %1800 = vst.msk [vmem:[#allocation2 + $0x4] sm:$0xc] %vm1799, %v1797
        %v1801 = vld [vmem:[%s406 + $0x4] sm:$0x1]
        %v1802 = vld [vmem:[%s406 + $0x14] sm:$0x1]
        %v1803 = vld [vmem:[%s406 + $0x24] sm:$0x1]
        %v1804 = vld [vmem:[%s406 + $0x34] sm:$0x1]
        %v1805 = vpack.c.bf16 %v1801, %v1801
        %v1806 = vpack.c.bf16 %v1802, %v1802
        %v1807 = vpack.c.bf16 %v1803, %v1803
        %v1808 = vpack.c.bf16 %v1804, %v1804
        %v1813 = vunpack.c.l.b16 %v1805
        %v1814 = vunpack.c.l.b16 %v1806
        %v1815 = vunpack.c.l.b16 %v1807
        %v1816 = vunpack.c.l.b16 %v1808
        %v1817 = vpack.c.b16 %v1813, %v1813
        %v1818 = vpack.c.b16 %v1814, %v1814
        %v1819 = vpack.c.b16 %v1815, %v1815
        %v1820 = vpack.c.b16 %v1816, %v1816
        %v1821 = vunpack.c.l.b16 %v1817
        %v1822 = vunpack.c.l.b16 %v1818
        %v1823 = vunpack.c.l.b16 %v1819
        %v1824 = vunpack.c.l.b16 %v1820
        %v1825 = vrot.slane %v1822, 7
        %v1826 = vsel %vm1206, %v1825, %v1821
        %v1827 = vrot.slane %v1823, 6
        %v1828 = vsel %vm1209, %v1827, %v1826
        %v1829 = vrot.slane %v1824, 5
        %v1830 = vsel %vm1212, %v1829, %v1828
        %v1831 = vpack.c.b16 %v1830, %v1830
        %1832 = vrot.lane.b32.xlu0 %v1831, 9
        %v1833 = vpop.permute.xlu0 %1832
        %1835 = vst.msk [vmem:[#allocation2 + $0x14] sm:$0x3] %vm1762, %v1833
        %v1836 = vld [vmem:[#allocation3] sm:$0x4]
        %v1837 = vld [vmem:[#allocation3 + $0x8] sm:$0x4]
        %v1838 = vld [vmem:[#allocation3 + $0x10] sm:$0x4]
        %v1839 = vld [vmem:[#allocation3 + $0x18] sm:$0x4]
        %v1844 = vunpack.c.l.b16 %v1836
        %v1845 = vunpack.c.l.b16 %v1837
        %v1846 = vunpack.c.l.b16 %v1838
        %v1847 = vunpack.c.l.b16 %v1839
        %v1848 = vrot.slane %v1845, 7
        %v1849 = vsel %vm1246, %v1848, %v1844
        %v1850 = vrot.slane %v1846, 6
        %v1851 = vsel %vm1249, %v1850, %v1849
        %v1852 = vrot.slane %v1847, 5
        %v1853 = vsel %vm1252, %v1852, %v1851
        %v1854 = vpack.c.b16 %v1853, %v1853
        %1855 = vrot.lane.b32.xlu0 %v1854, 9
        %v1856 = vpop.permute.xlu0 %1855
        %1858 = vst.msk [vmem:[#allocation2 + $0x14] sm:$0xc] %vm1799, %v1856
        %v1859 = vld [vmem:[%s388 + $0x5] sm:$0x1]
        %v1860 = vld [vmem:[%s388 + $0x15] sm:$0x1]
        %v1861 = vld [vmem:[%s388 + $0x25] sm:$0x1]
        %v1862 = vld [vmem:[%s388 + $0x35] sm:$0x1]
        %v1863 = vpack.c.bf16 %v1859, %v1859
        %v1864 = vpack.c.bf16 %v1860, %v1860
        %v1865 = vpack.c.bf16 %v1861, %v1861
        %v1866 = vpack.c.bf16 %v1862, %v1862
        %v1871 = vunpack.c.l.b16 %v1863
        %v1872 = vunpack.c.l.b16 %v1864
        %v1873 = vunpack.c.l.b16 %v1865
        %v1874 = vunpack.c.l.b16 %v1866
        %v1875 = vpack.c.b16 %v1871, %v1871
        %v1876 = vpack.c.b16 %v1872, %v1872
        %v1877 = vpack.c.b16 %v1873, %v1873
        %v1878 = vpack.c.b16 %v1874, %v1874
        %v1879 = vunpack.c.l.b16 %v1875
        %v1880 = vunpack.c.l.b16 %v1876
        %v1881 = vunpack.c.l.b16 %v1877
        %v1882 = vunpack.c.l.b16 %v1878
        %v1883 = vrot.slane %v1880, 7
        %v1884 = vsel %vm1206, %v1883, %v1879
        %v1885 = vrot.slane %v1881, 6
        %v1886 = vsel %vm1209, %v1885, %v1884
        %v1887 = vrot.slane %v1882, 5
        %v1888 = vsel %vm1212, %v1887, %v1886
        %v1889 = vpack.c.b16 %v1888, %v1888
        %1890 = vrot.lane.b32.xlu0 %v1889, 31
        %v1891 = vpop.permute.xlu0 %1890
        %vm1893 = vcmask 378104
        %1894 = vst.msk [vmem:[#allocation2 + $0x4] sm:$0x3] %vm1893, %v1891
        %v1895 = vld [vmem:[%s397 + $0x5] sm:$0x1]
        %v1896 = vld [vmem:[%s397 + $0x15] sm:$0x1]
        %v1897 = vld [vmem:[%s397 + $0x25] sm:$0x1]
        %v1898 = vld [vmem:[%s397 + $0x35] sm:$0x1]
        %v1899 = vpack.c.bf16 %v1895, %v1895
        %v1900 = vpack.c.bf16 %v1896, %v1896
        %v1901 = vpack.c.bf16 %v1897, %v1897
        %v1902 = vpack.c.bf16 %v1898, %v1898
        %v1907 = vunpack.c.l.b16 %v1899
        %v1908 = vunpack.c.l.b16 %v1900
        %v1909 = vunpack.c.l.b16 %v1901
        %v1910 = vunpack.c.l.b16 %v1902
        %v1911 = vpack.c.b16 %v1907, %v1907
        %v1912 = vpack.c.b16 %v1908, %v1908
        %v1913 = vpack.c.b16 %v1909, %v1909
        %v1914 = vpack.c.b16 %v1910, %v1910
        %v1915 = vunpack.c.l.b16 %v1911
        %v1916 = vunpack.c.l.b16 %v1912
        %v1917 = vunpack.c.l.b16 %v1913
        %v1918 = vunpack.c.l.b16 %v1914
        %v1919 = vrot.slane %v1915, 4
        %v1920 = vrot.slane %v1916, 3
        %v1921 = vsel %vm1246, %v1920, %v1919
        %v1922 = vrot.slane %v1917, 2
        %v1923 = vsel %vm1249, %v1922, %v1921
        %v1924 = vrot.slane %v1918, 1
        %v1925 = vsel %vm1252, %v1924, %v1923
        %v1926 = vpack.c.b16 %v1925, %v1925
        %1927 = vrot.lane.b32.xlu0 %v1926, 31
        %v1928 = vpop.permute.xlu0 %1927
        %vm1930 = vcmask 380154
        %1931 = vst.msk [vmem:[#allocation2 + $0x4] sm:$0xc] %vm1930, %v1928
        %v1932 = vld [vmem:[%s406 + $0x5] sm:$0x1]
        %v1933 = vld [vmem:[%s406 + $0x15] sm:$0x1]
        %v1934 = vld [vmem:[%s406 + $0x25] sm:$0x1]
        %v1935 = vld [vmem:[%s406 + $0x35] sm:$0x1]
        %v1936 = vpack.c.bf16 %v1932, %v1932
        %v1937 = vpack.c.bf16 %v1933, %v1933
        %v1938 = vpack.c.bf16 %v1934, %v1934
        %v1939 = vpack.c.bf16 %v1935, %v1935
        %v1944 = vunpack.c.l.b16 %v1936
        %v1945 = vunpack.c.l.b16 %v1937
        %v1946 = vunpack.c.l.b16 %v1938
        %v1947 = vunpack.c.l.b16 %v1939
        %v1948 = vpack.c.b16 %v1944, %v1944
        %v1949 = vpack.c.b16 %v1945, %v1945
        %v1950 = vpack.c.b16 %v1946, %v1946
        %v1951 = vpack.c.b16 %v1947, %v1947
        %v1952 = vunpack.c.l.b16 %v1948
        %v1953 = vunpack.c.l.b16 %v1949
        %v1954 = vunpack.c.l.b16 %v1950
        %v1955 = vunpack.c.l.b16 %v1951
        %v1956 = vrot.slane %v1953, 7
        %v1957 = vsel %vm1206, %v1956, %v1952
        %v1958 = vrot.slane %v1954, 6
        %v1959 = vsel %vm1209, %v1958, %v1957
        %v1960 = vrot.slane %v1955, 5
        %v1961 = vsel %vm1212, %v1960, %v1959
        %v1962 = vpack.c.b16 %v1961, %v1961
        %1963 = vrot.lane.b32.xlu0 %v1962, 31
        %v1964 = vpop.permute.xlu0 %1963
        %1966 = vst.msk [vmem:[#allocation2 + $0x14] sm:$0x3] %vm1893, %v1964
        %v1967 = vld [vmem:[#allocation3] sm:$0x4]
        %v1968 = vld [vmem:[#allocation3 + $0x8] sm:$0x4]
        %v1969 = vld [vmem:[#allocation3 + $0x10] sm:$0x4]
        %v1970 = vld [vmem:[#allocation3 + $0x18] sm:$0x4]
        %v1975 = vunpack.c.l.b16 %v1967
        %v1976 = vunpack.c.l.b16 %v1968
        %v1977 = vunpack.c.l.b16 %v1969
        %v1978 = vunpack.c.l.b16 %v1970
        %v1979 = vrot.slane %v1975, 1
        %v1980 = vsel %vm1246, %v1976, %v1979
        %v1981 = vrot.slane %v1977, 7
        %v1982 = vsel %vm1249, %v1981, %v1980
        %v1983 = vrot.slane %v1978, 6
        %v1984 = vsel %vm1252, %v1983, %v1982
        %v1985 = vpack.c.b16 %v1984, %v1984
        %1986 = vrot.lane.b32.xlu0 %v1985, 31
        %v1987 = vpop.permute.xlu0 %1986
        %1989 = vst.msk [vmem:[#allocation2 + $0x14] sm:$0xc] %vm1930, %v1987
        %v1990 = vld [vmem:[%s388 + $0x6] sm:$0x1]
        %v1991 = vld [vmem:[%s388 + $0x16] sm:$0x1]
        %v1992 = vld [vmem:[%s388 + $0x26] sm:$0x1]
        %v1993 = vld [vmem:[%s388 + $0x36] sm:$0x1]
        %v1994 = vpack.c.bf16 %v1990, %v1990
        %v1995 = vpack.c.bf16 %v1991, %v1991
        %v1996 = vpack.c.bf16 %v1992, %v1992
        %v1997 = vpack.c.bf16 %v1993, %v1993
        %v2002 = vunpack.c.l.b16 %v1994
        %v2003 = vunpack.c.l.b16 %v1995
        %v2004 = vunpack.c.l.b16 %v1996
        %v2005 = vunpack.c.l.b16 %v1997
        %v2006 = vpack.c.b16 %v2002, %v2002
        %v2007 = vpack.c.b16 %v2003, %v2003
        %v2008 = vpack.c.b16 %v2004, %v2004
        %v2009 = vpack.c.b16 %v2005, %v2005
        %v2010 = vunpack.c.l.b16 %v2006
        %v2011 = vunpack.c.l.b16 %v2007
        %v2012 = vunpack.c.l.b16 %v2008
        %v2013 = vunpack.c.l.b16 %v2009
        %v2014 = vrot.slane %v2011, 7
        %v2015 = vsel %vm1206, %v2014, %v2010
        %v2016 = vrot.slane %v2012, 6
        %v2017 = vsel %vm1209, %v2016, %v2015
        %v2018 = vrot.slane %v2013, 5
        %v2019 = vsel %vm1212, %v2018, %v2017
        %v2020 = vpack.c.b16 %v2019, %v2019
        %2021 = vrot.lane.b32.xlu0 %v2020, 53
        %v2022 = vpop.permute.xlu0 %2021
        %vm2024 = vcmask 558504
        %2025 = vst.msk [vmem:[#allocation2 + $0x4] sm:$0x3] %vm2024, %v2022
        %v2026 = vld [vmem:[%s397 + $0x6] sm:$0x1]
        %v2027 = vld [vmem:[%s397 + $0x16] sm:$0x1]
        %v2028 = vld [vmem:[%s397 + $0x26] sm:$0x1]
        %v2029 = vld [vmem:[%s397 + $0x36] sm:$0x1]
        %v2030 = vpack.c.bf16 %v2026, %v2026
        %v2031 = vpack.c.bf16 %v2027, %v2027
        %v2032 = vpack.c.bf16 %v2028, %v2028
        %v2033 = vpack.c.bf16 %v2029, %v2029
        %v2038 = vunpack.c.l.b16 %v2030
        %v2039 = vunpack.c.l.b16 %v2031
        %v2040 = vunpack.c.l.b16 %v2032
        %v2041 = vunpack.c.l.b16 %v2033
        %v2042 = vpack.c.b16 %v2038, %v2038
        %v2043 = vpack.c.b16 %v2039, %v2039
        %v2044 = vpack.c.b16 %v2040, %v2040
        %v2045 = vpack.c.b16 %v2041, %v2041
        %v2046 = vunpack.c.l.b16 %v2042
        %v2047 = vunpack.c.l.b16 %v2043
        %v2048 = vunpack.c.l.b16 %v2044
        %v2049 = vunpack.c.l.b16 %v2045
        %v2050 = vrot.slane %v2046, 4
        %v2051 = vrot.slane %v2047, 3
        %v2052 = vsel %vm1246, %v2051, %v2050
        %v2053 = vrot.slane %v2048, 2
        %v2054 = vsel %vm1249, %v2053, %v2052
        %v2055 = vrot.slane %v2049, 1
        %v2056 = vsel %vm1252, %v2055, %v2054
        %v2057 = vpack.c.b16 %v2056, %v2056
        %2058 = vrot.lane.b32.xlu0 %v2057, 53
        %v2059 = vpop.permute.xlu0 %2058
        %vm2061 = vcmask 560554
        %2062 = vst.msk [vmem:[#allocation2 + $0x4] sm:$0xc] %vm2061, %v2059
        %v2063 = vld [vmem:[%s406 + $0x6] sm:$0x1]
        %v2064 = vld [vmem:[%s406 + $0x16] sm:$0x1]
        %v2065 = vld [vmem:[%s406 + $0x26] sm:$0x1]
        %v2066 = vld [vmem:[%s406 + $0x36] sm:$0x1]
        %v2067 = vpack.c.bf16 %v2063, %v2063
        %v2068 = vpack.c.bf16 %v2064, %v2064
        %v2069 = vpack.c.bf16 %v2065, %v2065
        %v2070 = vpack.c.bf16 %v2066, %v2066
        %v2075 = vunpack.c.l.b16 %v2067
        %v2076 = vunpack.c.l.b16 %v2068
        %v2077 = vunpack.c.l.b16 %v2069
        %v2078 = vunpack.c.l.b16 %v2070
        %v2079 = vpack.c.b16 %v2075, %v2075
        %v2080 = vpack.c.b16 %v2076, %v2076
        %v2081 = vpack.c.b16 %v2077, %v2077
        %v2082 = vpack.c.b16 %v2078, %v2078
        %v2083 = vunpack.c.l.b16 %v2079
        %v2084 = vunpack.c.l.b16 %v2080
        %v2085 = vunpack.c.l.b16 %v2081
        %v2086 = vunpack.c.l.b16 %v2082
        %v2087 = vrot.slane %v2084, 7
        %v2088 = vsel %vm1206, %v2087, %v2083
        %v2089 = vrot.slane %v2085, 6
        %v2090 = vsel %vm1209, %v2089, %v2088
        %v2091 = vrot.slane %v2086, 5
        %v2092 = vsel %vm1212, %v2091, %v2090
        %v2093 = vpack.c.b16 %v2092, %v2092
        %2094 = vrot.lane.b32.xlu0 %v2093, 53
        %v2095 = vpop.permute.xlu0 %2094
        %2097 = vst.msk [vmem:[#allocation2 + $0x14] sm:$0x3] %vm2024, %v2095
        %v2098 = vld [vmem:[#allocation3] sm:$0x8]
        %v2099 = vld [vmem:[#allocation3 + $0x8] sm:$0x8]
        %v2100 = vld [vmem:[#allocation3 + $0x10] sm:$0x8]
        %v2101 = vld [vmem:[#allocation3 + $0x18] sm:$0x8]
        %v2106 = vunpack.c.l.b16 %v2098
        %v2107 = vunpack.c.l.b16 %v2099
        %v2108 = vunpack.c.l.b16 %v2100
        %v2109 = vunpack.c.l.b16 %v2101
        %v2110 = vrot.slane %v2106, 2
        %v2111 = vrot.slane %v2107, 1
        %v2112 = vsel %vm1246, %v2111, %v2110
        %v2113 = vsel %vm1249, %v2108, %v2112
        %v2114 = vrot.slane %v2109, 7
        %v2115 = vsel %vm1252, %v2114, %v2113
        %v2116 = vpack.c.b16 %v2115, %v2115
        %2117 = vrot.lane.b32.xlu0 %v2116, 53
        %v2118 = vpop.permute.xlu0 %2117
        %2120 = vst.msk [vmem:[#allocation2 + $0x14] sm:$0xc] %vm2061, %v2118
        %v2121 = vld [vmem:[%s388 + $0x7] sm:$0x1]
        %v2122 = vld [vmem:[%s388 + $0x17] sm:$0x1]
        %v2123 = vld [vmem:[%s388 + $0x27] sm:$0x1]
        %v2124 = vld [vmem:[%s388 + $0x37] sm:$0x1]
        %v2125 = vpack.c.bf16 %v2121, %v2121
        %v2126 = vpack.c.bf16 %v2122, %v2122
        %v2127 = vpack.c.bf16 %v2123, %v2123
        %v2128 = vpack.c.bf16 %v2124, %v2124
        %v2133 = vunpack.c.l.b16 %v2125
        %v2134 = vunpack.c.l.b16 %v2126
        %v2135 = vunpack.c.l.b16 %v2127
        %v2136 = vunpack.c.l.b16 %v2128
        %v2137 = vpack.c.b16 %v2133, %v2133
        %v2138 = vpack.c.b16 %v2134, %v2134
        %v2139 = vpack.c.b16 %v2135, %v2135
        %v2140 = vpack.c.b16 %v2136, %v2136
        %v2141 = vunpack.c.l.b16 %v2137
        %v2142 = vunpack.c.l.b16 %v2138
        %v2143 = vunpack.c.l.b16 %v2139
        %v2144 = vunpack.c.l.b16 %v2140
        %v2145 = vrot.slane %v2142, 7
        %v2146 = vsel %vm1206, %v2145, %v2141
        %v2147 = vrot.slane %v2143, 6
        %v2148 = vsel %vm1209, %v2147, %v2146
        %v2149 = vrot.slane %v2144, 5
        %v2150 = vsel %vm1212, %v2149, %v2148
        %v2151 = vpack.c.b16 %v2150, %v2150
        %2152 = vrot.lane.b32.xlu0 %v2151, 75
        %v2153 = vpop.permute.xlu0 %2152
        %vm2155 = vcmask 738904
        %2156 = vst.msk [vmem:[#allocation2 + $0x4] sm:$0x3] %vm2155, %v2153
        %v2157 = vld [vmem:[%s397 + $0x7] sm:$0x1]
        %v2158 = vld [vmem:[%s397 + $0x17] sm:$0x1]
        %v2159 = vld [vmem:[%s397 + $0x27] sm:$0x1]
        %v2160 = vld [vmem:[%s397 + $0x37] sm:$0x1]
        %v2161 = vpack.c.bf16 %v2157, %v2157
        %v2162 = vpack.c.bf16 %v2158, %v2158
        %v2163 = vpack.c.bf16 %v2159, %v2159
        %v2164 = vpack.c.bf16 %v2160, %v2160
        %v2169 = vunpack.c.l.b16 %v2161
        %v2170 = vunpack.c.l.b16 %v2162
        %v2171 = vunpack.c.l.b16 %v2163
        %v2172 = vunpack.c.l.b16 %v2164
        %v2173 = vpack.c.b16 %v2169, %v2169
        %v2174 = vpack.c.b16 %v2170, %v2170
        %v2175 = vpack.c.b16 %v2171, %v2171
        %v2176 = vpack.c.b16 %v2172, %v2172
        %v2177 = vunpack.c.l.b16 %v2173
        %v2178 = vunpack.c.l.b16 %v2174
        %v2179 = vunpack.c.l.b16 %v2175
        %v2180 = vunpack.c.l.b16 %v2176
        %v2181 = vrot.slane %v2177, 4
        %v2182 = vrot.slane %v2178, 3
        %v2183 = vsel %vm1246, %v2182, %v2181
        %v2184 = vrot.slane %v2179, 2
        %v2185 = vsel %vm1249, %v2184, %v2183
        %v2186 = vrot.slane %v2180, 1
        %v2187 = vsel %vm1252, %v2186, %v2185
        %v2188 = vpack.c.b16 %v2187, %v2187
        %2189 = vrot.lane.b32.xlu0 %v2188, 75
        %v2190 = vpop.permute.xlu0 %2189
        %vm2192 = vcmask 740954
        %2193 = vst.msk [vmem:[#allocation2 + $0x4] sm:$0xc] %vm2192, %v2190
        %v2194 = vld [vmem:[%s406 + $0x7] sm:$0x1]
        %v2195 = vld [vmem:[%s406 + $0x17] sm:$0x1]
        %v2196 = vld [vmem:[%s406 + $0x27] sm:$0x1]
        %v2197 = vld [vmem:[%s406 + $0x37] sm:$0x1]
        %v2198 = vpack.c.bf16 %v2194, %v2194
        %v2199 = vpack.c.bf16 %v2195, %v2195
        %v2200 = vpack.c.bf16 %v2196, %v2196
        %v2201 = vpack.c.bf16 %v2197, %v2197
        %v2206 = vunpack.c.l.b16 %v2198
        %v2207 = vunpack.c.l.b16 %v2199
        %v2208 = vunpack.c.l.b16 %v2200
        %v2209 = vunpack.c.l.b16 %v2201
        %v2210 = vpack.c.b16 %v2206, %v2206
        %v2211 = vpack.c.b16 %v2207, %v2207
        %v2212 = vpack.c.b16 %v2208, %v2208
        %v2213 = vpack.c.b16 %v2209, %v2209
        %v2214 = vunpack.c.l.b16 %v2210
        %v2215 = vunpack.c.l.b16 %v2211
        %v2216 = vunpack.c.l.b16 %v2212
        %v2217 = vunpack.c.l.b16 %v2213
        %v2218 = vrot.slane %v2215, 7
        %v2219 = vsel %vm1206, %v2218, %v2214
        %v2220 = vrot.slane %v2216, 6
        %v2221 = vsel %vm1209, %v2220, %v2219
        %v2222 = vrot.slane %v2217, 5
        %v2223 = vsel %vm1212, %v2222, %v2221
        %v2224 = vpack.c.b16 %v2223, %v2223
        %2225 = vrot.lane.b32.xlu0 %v2224, 75
        %v2226 = vpop.permute.xlu0 %2225
        %2228 = vst.msk [vmem:[#allocation2 + $0x14] sm:$0x3] %vm2155, %v2226
        %v2229 = vld [vmem:[#allocation3] sm:$0x8]
        %v2230 = vld [vmem:[#allocation3 + $0x8] sm:$0x8]
        %v2231 = vld [vmem:[#allocation3 + $0x10] sm:$0x8]
        %v2232 = vld [vmem:[#allocation3 + $0x18] sm:$0x8]
        %v2237 = vunpack.c.l.b16 %v2229
        %v2238 = vunpack.c.l.b16 %v2230
        %v2239 = vunpack.c.l.b16 %v2231
        %v2240 = vunpack.c.l.b16 %v2232
        %v2241 = vrot.slane %v2237, 3
        %v2242 = vrot.slane %v2238, 2
        %v2243 = vsel %vm1246, %v2242, %v2241
        %v2244 = vrot.slane %v2239, 1
        %v2245 = vsel %vm1249, %v2244, %v2243
        %v2246 = vsel %vm1252, %v2240, %v2245
        %v2247 = vpack.c.b16 %v2246, %v2246
        %2248 = vrot.lane.b32.xlu0 %v2247, 75
        %v2249 = vpop.permute.xlu0 %2248
        %2251 = vst.msk [vmem:[#allocation2 + $0x14] sm:$0xc] %vm2192, %v2249
        %v2252 = vld [vmem:[%s388 + $0x8] sm:$0x1]
        %v2253 = vld [vmem:[%s388 + $0x18] sm:$0x1]
        %v2254 = vld [vmem:[%s388 + $0x28] sm:$0x1]
        %v2255 = vld [vmem:[%s388 + $0x38] sm:$0x1]
        %v2256 = vpack.c.bf16 %v2252, %v2252
        %v2257 = vpack.c.bf16 %v2253, %v2253
        %v2258 = vpack.c.bf16 %v2254, %v2254
        %v2259 = vpack.c.bf16 %v2255, %v2255
        %v2264 = vunpack.c.l.b16 %v2256
        %v2265 = vunpack.c.l.b16 %v2257
        %v2266 = vunpack.c.l.b16 %v2258
        %v2267 = vunpack.c.l.b16 %v2259
        %v2268 = vpack.c.b16 %v2264, %v2264
        %v2269 = vpack.c.b16 %v2265, %v2265
        %v2270 = vpack.c.b16 %v2266, %v2266
        %v2271 = vpack.c.b16 %v2267, %v2267
        %v2272 = vunpack.c.l.b16 %v2268
        %v2273 = vunpack.c.l.b16 %v2269
        %v2274 = vunpack.c.l.b16 %v2270
        %v2275 = vunpack.c.l.b16 %v2271
        %v2276 = vrot.slane %v2273, 7
        %v2277 = vsel %vm1206, %v2276, %v2272
        %v2278 = vrot.slane %v2274, 6
        %v2279 = vsel %vm1209, %v2278, %v2277
        %v2280 = vrot.slane %v2275, 5
        %v2281 = vsel %vm1212, %v2280, %v2279
        %v2282 = vpack.c.b16 %v2281, %v2281
        %2283 = vrot.lane.b32.xlu0 %v2282, 97
        %v2284 = vpop.permute.xlu0 %2283
        %vm2286 = vcmask 919304
        %2287 = vst.msk [vmem:[#allocation2 + $0x4] sm:$0x3] %vm2286, %v2284
        %v2288 = vld [vmem:[%s397 + $0x8] sm:$0x1]
        %v2289 = vld [vmem:[%s397 + $0x18] sm:$0x1]
        %v2290 = vld [vmem:[%s397 + $0x28] sm:$0x1]
        %v2291 = vld [vmem:[%s397 + $0x38] sm:$0x1]
        %v2292 = vpack.c.bf16 %v2288, %v2288
        %v2293 = vpack.c.bf16 %v2289, %v2289
        %v2294 = vpack.c.bf16 %v2290, %v2290
        %v2295 = vpack.c.bf16 %v2291, %v2291
        %v2300 = vunpack.c.l.b16 %v2292
        %v2301 = vunpack.c.l.b16 %v2293
        %v2302 = vunpack.c.l.b16 %v2294
        %v2303 = vunpack.c.l.b16 %v2295
        %v2304 = vpack.c.b16 %v2300, %v2300
        %v2305 = vpack.c.b16 %v2301, %v2301
        %v2306 = vpack.c.b16 %v2302, %v2302
        %v2307 = vpack.c.b16 %v2303, %v2303
        %v2308 = vunpack.c.l.b16 %v2304
        %v2309 = vunpack.c.l.b16 %v2305
        %v2310 = vunpack.c.l.b16 %v2306
        %v2311 = vunpack.c.l.b16 %v2307
        %v2312 = vrot.slane %v2308, 4
        %v2313 = vrot.slane %v2309, 3
        %v2314 = vsel %vm1246, %v2313, %v2312
        %v2315 = vrot.slane %v2310, 2
        %v2316 = vsel %vm1249, %v2315, %v2314
        %v2317 = vrot.slane %v2311, 1
        %v2318 = vsel %vm1252, %v2317, %v2316
        %v2319 = vpack.c.b16 %v2318, %v2318
        %2320 = vrot.lane.b32.xlu0 %v2319, 97
        %v2321 = vpop.permute.xlu0 %2320
        %vm2323 = vcmask 921354
        %2324 = vst.msk [vmem:[#allocation2 + $0x4] sm:$0xc] %vm2323, %v2321
        %v2325 = vld [vmem:[%s406 + $0x8] sm:$0x1]
        %v2326 = vld [vmem:[%s406 + $0x18] sm:$0x1]
        %v2327 = vld [vmem:[%s406 + $0x28] sm:$0x1]
        %v2328 = vld [vmem:[%s406 + $0x38] sm:$0x1]
        %v2329 = vpack.c.bf16 %v2325, %v2325
        %v2330 = vpack.c.bf16 %v2326, %v2326
        %v2331 = vpack.c.bf16 %v2327, %v2327
        %v2332 = vpack.c.bf16 %v2328, %v2328
        %v2337 = vunpack.c.l.b16 %v2329
        %v2338 = vunpack.c.l.b16 %v2330
        %v2339 = vunpack.c.l.b16 %v2331
        %v2340 = vunpack.c.l.b16 %v2332
        %v2341 = vpack.c.b16 %v2337, %v2337
        %v2342 = vpack.c.b16 %v2338, %v2338
        %v2343 = vpack.c.b16 %v2339, %v2339
        %v2344 = vpack.c.b16 %v2340, %v2340
        %v2345 = vunpack.c.l.b16 %v2341
        %v2346 = vunpack.c.l.b16 %v2342
        %v2347 = vunpack.c.l.b16 %v2343
        %v2348 = vunpack.c.l.b16 %v2344
        %v2349 = vrot.slane %v2346, 7
        %v2350 = vsel %vm1206, %v2349, %v2345
        %v2351 = vrot.slane %v2347, 6
        %v2352 = vsel %vm1209, %v2351, %v2350
        %v2353 = vrot.slane %v2348, 5
        %v2354 = vsel %vm1212, %v2353, %v2352
        %v2355 = vpack.c.b16 %v2354, %v2354
        %2356 = vrot.lane.b32.xlu0 %v2355, 97
        %v2357 = vpop.permute.xlu0 %2356
        %2359 = vst.msk [vmem:[#allocation2 + $0x14] sm:$0x3] %vm2286, %v2357
        %v2360 = vld [vmem:[#allocation3 + $0x4] sm:$0x1]
        %v2361 = vld [vmem:[#allocation3 + $0xc] sm:$0x1]
        %v2362 = vld [vmem:[#allocation3 + $0x14] sm:$0x1]
        %v2363 = vld [vmem:[#allocation3 + $0x1c] sm:$0x1]
        %v2368 = vunpack.c.l.b16 %v2360
        %v2369 = vunpack.c.l.b16 %v2361
        %v2370 = vunpack.c.l.b16 %v2362
        %v2371 = vunpack.c.l.b16 %v2363
        %v2372 = vrot.slane %v2368, 4
        %v2373 = vrot.slane %v2369, 3
        %v2374 = vsel %vm1246, %v2373, %v2372
        %v2375 = vrot.slane %v2370, 2
        %v2376 = vsel %vm1249, %v2375, %v2374
        %v2377 = vrot.slane %v2371, 1
        %v2378 = vsel %vm1252, %v2377, %v2376
        %v2379 = vpack.c.b16 %v2378, %v2378
        %2380 = vrot.lane.b32.xlu0 %v2379, 97
        %v2381 = vpop.permute.xlu0 %2380
        %2383 = vst.msk [vmem:[#allocation2 + $0x14] sm:$0xc] %vm2323, %v2381
        %v2384 = vld [vmem:[%s388 + $0x9] sm:$0x1]
        %v2385 = vld [vmem:[%s388 + $0x19] sm:$0x1]
        %v2386 = vld [vmem:[%s388 + $0x29] sm:$0x1]
        %v2387 = vld [vmem:[%s388 + $0x39] sm:$0x1]
        %v2388 = vpack.c.bf16 %v2384, %v2384
        %v2389 = vpack.c.bf16 %v2385, %v2385
        %v2390 = vpack.c.bf16 %v2386, %v2386
        %v2391 = vpack.c.bf16 %v2387, %v2387
        %v2396 = vunpack.c.l.b16 %v2388
        %v2397 = vunpack.c.l.b16 %v2389
        %v2398 = vunpack.c.l.b16 %v2390
        %v2399 = vunpack.c.l.b16 %v2391
        %v2400 = vpack.c.b16 %v2396, %v2396
        %v2401 = vpack.c.b16 %v2397, %v2397
        %v2402 = vpack.c.b16 %v2398, %v2398
        %v2403 = vpack.c.b16 %v2399, %v2399
        %v2404 = vunpack.c.l.b16 %v2400
        %v2405 = vunpack.c.l.b16 %v2401
        %v2406 = vunpack.c.l.b16 %v2402
        %v2407 = vunpack.c.l.b16 %v2403
        %v2408 = vrot.slane %v2405, 7
        %v2409 = vsel %vm1206, %v2408, %v2404
        %v2410 = vrot.slane %v2406, 6
        %v2411 = vsel %vm1209, %v2410, %v2409
        %v2412 = vrot.slane %v2407, 5
        %v2413 = vsel %vm1212, %v2412, %v2411
        %v2414 = vpack.c.b16 %v2413, %v2413
        %2415 = vrot.lane.b32.xlu0 %v2414, 119
        %v2416 = vpop.permute.xlu0 %2415
        %v2417 = vrot.slane %v2416, 4
        %vm2418 = vcmask 973824
        %v2419 = vsel %vm2418, %v2417, %v2416
        %vm2421 = vcmask 1042360
        %vm2422 = vcmask 54276
        %vm2423 = vmor %vm2422, %vm2421
        %2424 = vst.msk [vmem:[#allocation2 + $0x4] sm:$0x33] %vm2423, %v2419
        %v2425 = vld [vmem:[%s397 + $0x9] sm:$0x1]
        %v2426 = vld [vmem:[%s397 + $0x19] sm:$0x1]
        %v2427 = vld [vmem:[%s397 + $0x29] sm:$0x1]
        %v2428 = vld [vmem:[%s397 + $0x39] sm:$0x1]
        %v2429 = vpack.c.bf16 %v2425, %v2425
        %v2430 = vpack.c.bf16 %v2426, %v2426
        %v2431 = vpack.c.bf16 %v2427, %v2427
        %v2432 = vpack.c.bf16 %v2428, %v2428
        %v2437 = vunpack.c.l.b16 %v2429
        %v2438 = vunpack.c.l.b16 %v2430
        %v2439 = vunpack.c.l.b16 %v2431
        %v2440 = vunpack.c.l.b16 %v2432
        %v2441 = vpack.c.b16 %v2437, %v2437
        %v2442 = vpack.c.b16 %v2438, %v2438
        %v2443 = vpack.c.b16 %v2439, %v2439
        %v2444 = vpack.c.b16 %v2440, %v2440
        %v2445 = vunpack.c.l.b16 %v2441
        %v2446 = vunpack.c.l.b16 %v2442
        %v2447 = vunpack.c.l.b16 %v2443
        %v2448 = vunpack.c.l.b16 %v2444
        %v2449 = vrot.slane %v2445, 4
        %v2450 = vrot.slane %v2446, 3
        %v2451 = vsel %vm1246, %v2450, %v2449
        %v2452 = vrot.slane %v2447, 2
        %v2453 = vsel %vm1249, %v2452, %v2451
        %v2454 = vrot.slane %v2448, 1
        %v2455 = vsel %vm1252, %v2454, %v2453
        %v2456 = vpack.c.b16 %v2455, %v2455
        %2457 = vrot.lane.b32.xlu0 %v2456, 119
        %v2458 = vpop.permute.xlu0 %2457
        %v2459 = vrot.slane %v2458, 4
        %v2460 = vsel %vm2418, %v2459, %v2458
        %vm2462 = vcmask 1044410
        %vm2463 = vcmask 56326
        %vm2464 = vmor %vm2463, %vm2462
        %2465 = vst.msk [vmem:[#allocation2 + $0x4] sm:$0xcc] %vm2464, %v2460
        %v2466 = vld [vmem:[%s406 + $0x9] sm:$0x1]
        %v2467 = vld [vmem:[%s406 + $0x19] sm:$0x1]
        %v2468 = vld [vmem:[%s406 + $0x29] sm:$0x1]
        %v2469 = vld [vmem:[%s406 + $0x39] sm:$0x1]
        %v2470 = vpack.c.bf16 %v2466, %v2466
        %v2471 = vpack.c.bf16 %v2467, %v2467
        %v2472 = vpack.c.bf16 %v2468, %v2468
        %v2473 = vpack.c.bf16 %v2469, %v2469
        %v2478 = vunpack.c.l.b16 %v2470
        %v2479 = vunpack.c.l.b16 %v2471
        %v2480 = vunpack.c.l.b16 %v2472
        %v2481 = vunpack.c.l.b16 %v2473
        %v2482 = vpack.c.b16 %v2478, %v2478
        %v2483 = vpack.c.b16 %v2479, %v2479
        %v2484 = vpack.c.b16 %v2480, %v2480
        %v2485 = vpack.c.b16 %v2481, %v2481
        %v2486 = vunpack.c.l.b16 %v2482
        %v2487 = vunpack.c.l.b16 %v2483
        %v2488 = vunpack.c.l.b16 %v2484
        %v2489 = vunpack.c.l.b16 %v2485
        %v2490 = vrot.slane %v2487, 7
        %v2491 = vsel %vm1206, %v2490, %v2486
        %v2492 = vrot.slane %v2488, 6
        %v2493 = vsel %vm1209, %v2492, %v2491
        %v2494 = vrot.slane %v2489, 5
        %v2495 = vsel %vm1212, %v2494, %v2493
        %v2496 = vpack.c.b16 %v2495, %v2495
        %2497 = vrot.lane.b32.xlu0 %v2496, 119
        %v2498 = vpop.permute.xlu0 %2497
        %v2499 = vrot.slane %v2498, 4
        %v2500 = vsel %vm2418, %v2499, %v2498
        %2502 = vst.msk [vmem:[#allocation2 + $0x14] sm:$0x33] %vm2423, %v2500
        %v2503 = vld [vmem:[#allocation3 + $0x4] sm:$0x1]
        %v2504 = vld [vmem:[#allocation3 + $0xc] sm:$0x1]
        %v2505 = vld [vmem:[#allocation3 + $0x14] sm:$0x1]
        %v2506 = vld [vmem:[#allocation3 + $0x1c] sm:$0x1]
        %v2511 = vunpack.c.l.b16 %v2503
        %v2512 = vunpack.c.l.b16 %v2504
        %v2513 = vunpack.c.l.b16 %v2505
        %v2514 = vunpack.c.l.b16 %v2506
        %v2515 = vrot.slane %v2511, 5
        %v2516 = vrot.slane %v2512, 4
        %v2517 = vsel %vm1246, %v2516, %v2515
        %v2518 = vrot.slane %v2513, 3
        %v2519 = vsel %vm1249, %v2518, %v2517
        %v2520 = vrot.slane %v2514, 2
        %v2521 = vsel %vm1252, %v2520, %v2519
        %v2522 = vpack.c.b16 %v2521, %v2521
        %2523 = vrot.lane.b32.xlu0 %v2522, 119
        %v2524 = vpop.permute.xlu0 %2523
        %v2525 = vrot.slane %v2524, 4
        %v2526 = vsel %vm2418, %v2525, %v2524
        %2528 = vst.msk [vmem:[#allocation2 + $0x14] sm:$0xcc] %vm2464, %v2526
        %v2529 = vld [vmem:[%s388 + $0xa] sm:$0x1]
        %v2530 = vld [vmem:[%s388 + $0x1a] sm:$0x1]
        %v2531 = vld [vmem:[%s388 + $0x2a] sm:$0x1]
        %v2532 = vld [vmem:[%s388 + $0x3a] sm:$0x1]
        %v2533 = vpack.c.bf16 %v2529, %v2529
        %v2534 = vpack.c.bf16 %v2530, %v2530
        %v2535 = vpack.c.bf16 %v2531, %v2531
        %v2536 = vpack.c.bf16 %v2532, %v2532
        %v2541 = vunpack.c.l.b16 %v2533
        %v2542 = vunpack.c.l.b16 %v2534
        %v2543 = vunpack.c.l.b16 %v2535
        %v2544 = vunpack.c.l.b16 %v2536
        %v2545 = vpack.c.b16 %v2541, %v2541
        %v2546 = vpack.c.b16 %v2542, %v2542
        %v2547 = vpack.c.b16 %v2543, %v2543
        %v2548 = vpack.c.b16 %v2544, %v2544
        %v2549 = vunpack.c.l.b16 %v2545
        %v2550 = vunpack.c.l.b16 %v2546
        %v2551 = vunpack.c.l.b16 %v2547
        %v2552 = vunpack.c.l.b16 %v2548
        %v2553 = vrot.slane %v2550, 7
        %v2554 = vsel %vm1206, %v2553, %v2549
        %v2555 = vrot.slane %v2551, 6
        %v2556 = vsel %vm1209, %v2555, %v2554
        %v2557 = vrot.slane %v2552, 5
        %v2558 = vsel %vm1212, %v2557, %v2556
        %v2559 = vpack.c.b16 %v2558, %v2558
        %2560 = vrot.lane.b32.xlu0 %v2559, 13
        %v2561 = vpop.permute.xlu0 %2560
        %vm2563 = vcmask 230504
        %2564 = vst.msk [vmem:[#allocation2 + $0x8] sm:$0x3] %vm2563, %v2561
        %v2565 = vld [vmem:[%s397 + $0xa] sm:$0x1]
        %v2566 = vld [vmem:[%s397 + $0x1a] sm:$0x1]
        %v2567 = vld [vmem:[%s397 + $0x2a] sm:$0x1]
        %v2568 = vld [vmem:[%s397 + $0x3a] sm:$0x1]
        %v2569 = vpack.c.bf16 %v2565, %v2565
        %v2570 = vpack.c.bf16 %v2566, %v2566
        %v2571 = vpack.c.bf16 %v2567, %v2567
        %v2572 = vpack.c.bf16 %v2568, %v2568
        %v2577 = vunpack.c.l.b16 %v2569
        %v2578 = vunpack.c.l.b16 %v2570
        %v2579 = vunpack.c.l.b16 %v2571
        %v2580 = vunpack.c.l.b16 %v2572
        %v2581 = vpack.c.b16 %v2577, %v2577
        %v2582 = vpack.c.b16 %v2578, %v2578
        %v2583 = vpack.c.b16 %v2579, %v2579
        %v2584 = vpack.c.b16 %v2580, %v2580
        %v2585 = vunpack.c.l.b16 %v2581
        %v2586 = vunpack.c.l.b16 %v2582
        %v2587 = vunpack.c.l.b16 %v2583
        %v2588 = vunpack.c.l.b16 %v2584
        %v2589 = vrot.slane %v2585, 4
        %v2590 = vrot.slane %v2586, 3
        %v2591 = vsel %vm1246, %v2590, %v2589
        %v2592 = vrot.slane %v2587, 2
        %v2593 = vsel %vm1249, %v2592, %v2591
        %v2594 = vrot.slane %v2588, 1
        %v2595 = vsel %vm1252, %v2594, %v2593
        %v2596 = vpack.c.b16 %v2595, %v2595
        %2597 = vrot.lane.b32.xlu0 %v2596, 13
        %v2598 = vpop.permute.xlu0 %2597
        %vm2600 = vcmask 232554
        %2601 = vst.msk [vmem:[#allocation2 + $0x8] sm:$0xc] %vm2600, %v2598
        %v2602 = vld [vmem:[%s406 + $0xa] sm:$0x1]
        %v2603 = vld [vmem:[%s406 + $0x1a] sm:$0x1]
        %v2604 = vld [vmem:[%s406 + $0x2a] sm:$0x1]
        %v2605 = vld [vmem:[%s406 + $0x3a] sm:$0x1]
        %v2606 = vpack.c.bf16 %v2602, %v2602
        %v2607 = vpack.c.bf16 %v2603, %v2603
        %v2608 = vpack.c.bf16 %v2604, %v2604
        %v2609 = vpack.c.bf16 %v2605, %v2605
        %v2614 = vunpack.c.l.b16 %v2606
        %v2615 = vunpack.c.l.b16 %v2607
        %v2616 = vunpack.c.l.b16 %v2608
        %v2617 = vunpack.c.l.b16 %v2609
        %v2618 = vpack.c.b16 %v2614, %v2614
        %v2619 = vpack.c.b16 %v2615, %v2615
        %v2620 = vpack.c.b16 %v2616, %v2616
        %v2621 = vpack.c.b16 %v2617, %v2617
        %v2622 = vunpack.c.l.b16 %v2618
        %v2623 = vunpack.c.l.b16 %v2619
        %v2624 = vunpack.c.l.b16 %v2620
        %v2625 = vunpack.c.l.b16 %v2621
        %v2626 = vrot.slane %v2623, 7
        %v2627 = vsel %vm1206, %v2626, %v2622
        %v2628 = vrot.slane %v2624, 6
        %v2629 = vsel %vm1209, %v2628, %v2627
        %v2630 = vrot.slane %v2625, 5
        %v2631 = vsel %vm1212, %v2630, %v2629
        %v2632 = vpack.c.b16 %v2631, %v2631
        %2633 = vrot.lane.b32.xlu0 %v2632, 13
        %v2634 = vpop.permute.xlu0 %2633
        %2636 = vst.msk [vmem:[#allocation2 + $0x18] sm:$0x3] %vm2563, %v2634
        %v2637 = vld [vmem:[#allocation3 + $0x4] sm:$0x2]
        %v2638 = vld [vmem:[#allocation3 + $0xc] sm:$0x2]
        %v2639 = vld [vmem:[#allocation3 + $0x14] sm:$0x2]
        %v2640 = vld [vmem:[#allocation3 + $0x1c] sm:$0x2]
        %v2645 = vunpack.c.l.b16 %v2637
        %v2646 = vunpack.c.l.b16 %v2638
        %v2647 = vunpack.c.l.b16 %v2639
        %v2648 = vunpack.c.l.b16 %v2640
        %v2649 = vrot.slane %v2645, 6
        %v2650 = vrot.slane %v2646, 5
        %v2651 = vsel %vm1246, %v2650, %v2649
        %v2652 = vrot.slane %v2647, 4
        %v2653 = vsel %vm1249, %v2652, %v2651
        %v2654 = vrot.slane %v2648, 3
        %v2655 = vsel %vm1252, %v2654, %v2653
        %v2656 = vpack.c.b16 %v2655, %v2655
        %2657 = vrot.lane.b32.xlu0 %v2656, 13
        %v2658 = vpop.permute.xlu0 %2657
        %2660 = vst.msk [vmem:[#allocation2 + $0x18] sm:$0xc] %vm2600, %v2658
        %v2661 = vld [vmem:[%s388 + $0xb] sm:$0x1]
        %v2662 = vld [vmem:[%s388 + $0x1b] sm:$0x1]
        %v2663 = vld [vmem:[%s388 + $0x2b] sm:$0x1]
        %v2664 = vld [vmem:[%s388 + $0x3b] sm:$0x1]
        %v2665 = vpack.c.bf16 %v2661, %v2661
        %v2666 = vpack.c.bf16 %v2662, %v2662
        %v2667 = vpack.c.bf16 %v2663, %v2663
        %v2668 = vpack.c.bf16 %v2664, %v2664
        %v2673 = vunpack.c.l.b16 %v2665
        %v2674 = vunpack.c.l.b16 %v2666
        %v2675 = vunpack.c.l.b16 %v2667
        %v2676 = vunpack.c.l.b16 %v2668
        %v2677 = vpack.c.b16 %v2673, %v2673
        %v2678 = vpack.c.b16 %v2674, %v2674
        %v2679 = vpack.c.b16 %v2675, %v2675
        %v2680 = vpack.c.b16 %v2676, %v2676
        %v2681 = vunpack.c.l.b16 %v2677
        %v2682 = vunpack.c.l.b16 %v2678
        %v2683 = vunpack.c.l.b16 %v2679
        %v2684 = vunpack.c.l.b16 %v2680
        %v2685 = vrot.slane %v2682, 7
        %v2686 = vsel %vm1206, %v2685, %v2681
        %v2687 = vrot.slane %v2683, 6
        %v2688 = vsel %vm1209, %v2687, %v2686
        %v2689 = vrot.slane %v2684, 5
        %v2690 = vsel %vm1212, %v2689, %v2688
        %v2691 = vpack.c.b16 %v2690, %v2690
        %2692 = vrot.lane.b32.xlu0 %v2691, 35
        %v2693 = vpop.permute.xlu0 %2692
        %vm2695 = vcmask 410904
        %2696 = vst.msk [vmem:[#allocation2 + $0x8] sm:$0x3] %vm2695, %v2693
        %v2697 = vld [vmem:[%s397 + $0xb] sm:$0x1]
        %v2698 = vld [vmem:[%s397 + $0x1b] sm:$0x1]
        %v2699 = vld [vmem:[%s397 + $0x2b] sm:$0x1]
        %v2700 = vld [vmem:[%s397 + $0x3b] sm:$0x1]
        %v2701 = vpack.c.bf16 %v2697, %v2697
        %v2702 = vpack.c.bf16 %v2698, %v2698
        %v2703 = vpack.c.bf16 %v2699, %v2699
        %v2704 = vpack.c.bf16 %v2700, %v2700
        %v2709 = vunpack.c.l.b16 %v2701
        %v2710 = vunpack.c.l.b16 %v2702
        %v2711 = vunpack.c.l.b16 %v2703
        %v2712 = vunpack.c.l.b16 %v2704
        %v2713 = vpack.c.b16 %v2709, %v2709
        %v2714 = vpack.c.b16 %v2710, %v2710
        %v2715 = vpack.c.b16 %v2711, %v2711
        %v2716 = vpack.c.b16 %v2712, %v2712
        %v2717 = vunpack.c.l.b16 %v2713
        %v2718 = vunpack.c.l.b16 %v2714
        %v2719 = vunpack.c.l.b16 %v2715
        %v2720 = vunpack.c.l.b16 %v2716
        %v2721 = vrot.slane %v2717, 4
        %v2722 = vrot.slane %v2718, 3
        %v2723 = vsel %vm1246, %v2722, %v2721
        %v2724 = vrot.slane %v2719, 2
        %v2725 = vsel %vm1249, %v2724, %v2723
        %v2726 = vrot.slane %v2720, 1
        %v2727 = vsel %vm1252, %v2726, %v2725
        %v2728 = vpack.c.b16 %v2727, %v2727
        %2729 = vrot.lane.b32.xlu0 %v2728, 35
        %v2730 = vpop.permute.xlu0 %2729
        %vm2732 = vcmask 412954
        %2733 = vst.msk [vmem:[#allocation2 + $0x8] sm:$0xc] %vm2732, %v2730
        %v2734 = vld [vmem:[%s406 + $0xb] sm:$0x1]
        %v2735 = vld [vmem:[%s406 + $0x1b] sm:$0x1]
        %v2736 = vld [vmem:[%s406 + $0x2b] sm:$0x1]
        %v2737 = vld [vmem:[%s406 + $0x3b] sm:$0x1]
        %v2738 = vpack.c.bf16 %v2734, %v2734
        %v2739 = vpack.c.bf16 %v2735, %v2735
        %v2740 = vpack.c.bf16 %v2736, %v2736
        %v2741 = vpack.c.bf16 %v2737, %v2737
        %v2746 = vunpack.c.l.b16 %v2738
        %v2747 = vunpack.c.l.b16 %v2739
        %v2748 = vunpack.c.l.b16 %v2740
        %v2749 = vunpack.c.l.b16 %v2741
        %v2750 = vpack.c.b16 %v2746, %v2746
        %v2751 = vpack.c.b16 %v2747, %v2747
        %v2752 = vpack.c.b16 %v2748, %v2748
        %v2753 = vpack.c.b16 %v2749, %v2749
        %v2754 = vunpack.c.l.b16 %v2750
        %v2755 = vunpack.c.l.b16 %v2751
        %v2756 = vunpack.c.l.b16 %v2752
        %v2757 = vunpack.c.l.b16 %v2753
        %v2758 = vrot.slane %v2755, 7
        %v2759 = vsel %vm1206, %v2758, %v2754
        %v2760 = vrot.slane %v2756, 6
        %v2761 = vsel %vm1209, %v2760, %v2759
        %v2762 = vrot.slane %v2757, 5
        %v2763 = vsel %vm1212, %v2762, %v2761
        %v2764 = vpack.c.b16 %v2763, %v2763
        %2765 = vrot.lane.b32.xlu0 %v2764, 35
        %v2766 = vpop.permute.xlu0 %2765
        %2768 = vst.msk [vmem:[#allocation2 + $0x18] sm:$0x3] %vm2695, %v2766
        %v2769 = vld [vmem:[#allocation3 + $0x4] sm:$0x2]
        %v2770 = vld [vmem:[#allocation3 + $0xc] sm:$0x2]
        %v2771 = vld [vmem:[#allocation3 + $0x14] sm:$0x2]
        %v2772 = vld [vmem:[#allocation3 + $0x1c] sm:$0x2]
        %v2777 = vunpack.c.l.b16 %v2769
        %v2778 = vunpack.c.l.b16 %v2770
        %v2779 = vunpack.c.l.b16 %v2771
        %v2780 = vunpack.c.l.b16 %v2772
        %v2781 = vrot.slane %v2777, 7
        %v2782 = vrot.slane %v2778, 6
        %v2783 = vsel %vm1246, %v2782, %v2781
        %v2784 = vrot.slane %v2779, 5
        %v2785 = vsel %vm1249, %v2784, %v2783
        %v2786 = vrot.slane %v2780, 4
        %v2787 = vsel %vm1252, %v2786, %v2785
        %v2788 = vpack.c.b16 %v2787, %v2787
        %2789 = vrot.lane.b32.xlu0 %v2788, 35
        %v2790 = vpop.permute.xlu0 %2789
        %2792 = vst.msk [vmem:[#allocation2 + $0x18] sm:$0xc] %vm2732, %v2790
        %v2793 = vld [vmem:[%s388 + $0xc] sm:$0x1]
        %v2794 = vld [vmem:[%s388 + $0x1c] sm:$0x1]
        %v2795 = vld [vmem:[%s388 + $0x2c] sm:$0x1]
        %v2796 = vld [vmem:[%s388 + $0x3c] sm:$0x1]
        %v2797 = vpack.c.bf16 %v2793, %v2793
        %v2798 = vpack.c.bf16 %v2794, %v2794
        %v2799 = vpack.c.bf16 %v2795, %v2795
        %v2800 = vpack.c.bf16 %v2796, %v2796
        %v2805 = vunpack.c.l.b16 %v2797
        %v2806 = vunpack.c.l.b16 %v2798
        %v2807 = vunpack.c.l.b16 %v2799
        %v2808 = vunpack.c.l.b16 %v2800
        %v2809 = vpack.c.b16 %v2805, %v2805
        %v2810 = vpack.c.b16 %v2806, %v2806
        %v2811 = vpack.c.b16 %v2807, %v2807
        %v2812 = vpack.c.b16 %v2808, %v2808
        %v2813 = vunpack.c.l.b16 %v2809
        %v2814 = vunpack.c.l.b16 %v2810
        %v2815 = vunpack.c.l.b16 %v2811
        %v2816 = vunpack.c.l.b16 %v2812
        %v2817 = vrot.slane %v2814, 7
        %v2818 = vsel %vm1206, %v2817, %v2813
        %v2819 = vrot.slane %v2815, 6
        %v2820 = vsel %vm1209, %v2819, %v2818
        %v2821 = vrot.slane %v2816, 5
        %v2822 = vsel %vm1212, %v2821, %v2820
        %v2823 = vpack.c.b16 %v2822, %v2822
        %2824 = vrot.lane.b32.xlu0 %v2823, 57
        %v2825 = vpop.permute.xlu0 %2824
        %vm2827 = vcmask 591304
        %2828 = vst.msk [vmem:[#allocation2 + $0x8] sm:$0x3] %vm2827, %v2825
        %v2829 = vld [vmem:[%s397 + $0xc] sm:$0x1]
        %v2830 = vld [vmem:[%s397 + $0x1c] sm:$0x1]
        %v2831 = vld [vmem:[%s397 + $0x2c] sm:$0x1]
        %v2832 = vld [vmem:[%s397 + $0x3c] sm:$0x1]
        %v2833 = vpack.c.bf16 %v2829, %v2829
        %v2834 = vpack.c.bf16 %v2830, %v2830
        %v2835 = vpack.c.bf16 %v2831, %v2831
        %v2836 = vpack.c.bf16 %v2832, %v2832
        %v2841 = vunpack.c.l.b16 %v2833
        %v2842 = vunpack.c.l.b16 %v2834
        %v2843 = vunpack.c.l.b16 %v2835
        %v2844 = vunpack.c.l.b16 %v2836
        %v2845 = vpack.c.b16 %v2841, %v2841
        %v2846 = vpack.c.b16 %v2842, %v2842
        %v2847 = vpack.c.b16 %v2843, %v2843
        %v2848 = vpack.c.b16 %v2844, %v2844
        %v2849 = vunpack.c.l.b16 %v2845
        %v2850 = vunpack.c.l.b16 %v2846
        %v2851 = vunpack.c.l.b16 %v2847
        %v2852 = vunpack.c.l.b16 %v2848
        %v2853 = vrot.slane %v2849, 4
        %v2854 = vrot.slane %v2850, 3
        %v2855 = vsel %vm1246, %v2854, %v2853
        %v2856 = vrot.slane %v2851, 2
        %v2857 = vsel %vm1249, %v2856, %v2855
        %v2858 = vrot.slane %v2852, 1
        %v2859 = vsel %vm1252, %v2858, %v2857
        %v2860 = vpack.c.b16 %v2859, %v2859
        %2861 = vrot.lane.b32.xlu0 %v2860, 57
        %v2862 = vpop.permute.xlu0 %2861
        %vm2864 = vcmask 593354
        %2865 = vst.msk [vmem:[#allocation2 + $0x8] sm:$0xc] %vm2864, %v2862
        %v2866 = vld [vmem:[%s406 + $0xc] sm:$0x1]
        %v2867 = vld [vmem:[%s406 + $0x1c] sm:$0x1]
        %v2868 = vld [vmem:[%s406 + $0x2c] sm:$0x1]
        %v2869 = vld [vmem:[%s406 + $0x3c] sm:$0x1]
        %v2870 = vpack.c.bf16 %v2866, %v2866
        %v2871 = vpack.c.bf16 %v2867, %v2867
        %v2872 = vpack.c.bf16 %v2868, %v2868
        %v2873 = vpack.c.bf16 %v2869, %v2869
        %v2878 = vunpack.c.l.b16 %v2870
        %v2879 = vunpack.c.l.b16 %v2871
        %v2880 = vunpack.c.l.b16 %v2872
        %v2881 = vunpack.c.l.b16 %v2873
        %v2882 = vpack.c.b16 %v2878, %v2878
        %v2883 = vpack.c.b16 %v2879, %v2879
        %v2884 = vpack.c.b16 %v2880, %v2880
        %v2885 = vpack.c.b16 %v2881, %v2881
        %v2886 = vunpack.c.l.b16 %v2882
        %v2887 = vunpack.c.l.b16 %v2883
        %v2888 = vunpack.c.l.b16 %v2884
        %v2889 = vunpack.c.l.b16 %v2885
        %v2890 = vrot.slane %v2887, 7
        %v2891 = vsel %vm1206, %v2890, %v2886
        %v2892 = vrot.slane %v2888, 6
        %v2893 = vsel %vm1209, %v2892, %v2891
        %v2894 = vrot.slane %v2889, 5
        %v2895 = vsel %vm1212, %v2894, %v2893
        %v2896 = vpack.c.b16 %v2895, %v2895
        %2897 = vrot.lane.b32.xlu0 %v2896, 57
        %v2898 = vpop.permute.xlu0 %2897
        %2900 = vst.msk [vmem:[#allocation2 + $0x18] sm:$0x3] %vm2827, %v2898
        %v2901 = vld [vmem:[#allocation3 + $0x4] sm:$0x4]
        %v2902 = vld [vmem:[#allocation3 + $0xc] sm:$0x4]
        %v2903 = vld [vmem:[#allocation3 + $0x14] sm:$0x4]
        %v2904 = vld [vmem:[#allocation3 + $0x1c] sm:$0x4]
        %v2909 = vunpack.c.l.b16 %v2901
        %v2910 = vunpack.c.l.b16 %v2902
        %v2911 = vunpack.c.l.b16 %v2903
        %v2912 = vunpack.c.l.b16 %v2904
        %v2913 = vrot.slane %v2910, 7
        %v2914 = vsel %vm1246, %v2913, %v2909
        %v2915 = vrot.slane %v2911, 6
        %v2916 = vsel %vm1249, %v2915, %v2914
        %v2917 = vrot.slane %v2912, 5
        %v2918 = vsel %vm1252, %v2917, %v2916
        %v2919 = vpack.c.b16 %v2918, %v2918
        %2920 = vrot.lane.b32.xlu0 %v2919, 57
        %v2921 = vpop.permute.xlu0 %2920
        %2923 = vst.msk [vmem:[#allocation2 + $0x18] sm:$0xc] %vm2864, %v2921
        %v2924 = vld [vmem:[%s388 + $0xd] sm:$0x1]
        %v2925 = vld [vmem:[%s388 + $0x1d] sm:$0x1]
        %v2926 = vld [vmem:[%s388 + $0x2d] sm:$0x1]
        %v2927 = vld [vmem:[%s388 + $0x3d] sm:$0x1]
        %v2928 = vpack.c.bf16 %v2924, %v2924
        %v2929 = vpack.c.bf16 %v2925, %v2925
        %v2930 = vpack.c.bf16 %v2926, %v2926
        %v2931 = vpack.c.bf16 %v2927, %v2927
        %v2936 = vunpack.c.l.b16 %v2928
        %v2937 = vunpack.c.l.b16 %v2929
        %v2938 = vunpack.c.l.b16 %v2930
        %v2939 = vunpack.c.l.b16 %v2931
        %v2940 = vpack.c.b16 %v2936, %v2936
        %v2941 = vpack.c.b16 %v2937, %v2937
        %v2942 = vpack.c.b16 %v2938, %v2938
        %v2943 = vpack.c.b16 %v2939, %v2939
        %v2944 = vunpack.c.l.b16 %v2940
        %v2945 = vunpack.c.l.b16 %v2941
        %v2946 = vunpack.c.l.b16 %v2942
        %v2947 = vunpack.c.l.b16 %v2943
        %v2948 = vrot.slane %v2945, 7
        %v2949 = vsel %vm1206, %v2948, %v2944
        %v2950 = vrot.slane %v2946, 6
        %v2951 = vsel %vm1209, %v2950, %v2949
        %v2952 = vrot.slane %v2947, 5
        %v2953 = vsel %vm1212, %v2952, %v2951
        %v2954 = vpack.c.b16 %v2953, %v2953
        %2955 = vrot.lane.b32.xlu0 %v2954, 79
        %v2956 = vpop.permute.xlu0 %2955
        %vm2958 = vcmask 771704
        %2959 = vst.msk [vmem:[#allocation2 + $0x8] sm:$0x3] %vm2958, %v2956
        %v2960 = vld [vmem:[%s397 + $0xd] sm:$0x1]
        %v2961 = vld [vmem:[%s397 + $0x1d] sm:$0x1]
        %v2962 = vld [vmem:[%s397 + $0x2d] sm:$0x1]
        %v2963 = vld [vmem:[%s397 + $0x3d] sm:$0x1]
        %v2964 = vpack.c.bf16 %v2960, %v2960
        %v2965 = vpack.c.bf16 %v2961, %v2961
        %v2966 = vpack.c.bf16 %v2962, %v2962
        %v2967 = vpack.c.bf16 %v2963, %v2963
        %v2972 = vunpack.c.l.b16 %v2964
        %v2973 = vunpack.c.l.b16 %v2965
        %v2974 = vunpack.c.l.b16 %v2966
        %v2975 = vunpack.c.l.b16 %v2967
        %v2976 = vpack.c.b16 %v2972, %v2972
        %v2977 = vpack.c.b16 %v2973, %v2973
        %v2978 = vpack.c.b16 %v2974, %v2974
        %v2979 = vpack.c.b16 %v2975, %v2975
        %v2980 = vunpack.c.l.b16 %v2976
        %v2981 = vunpack.c.l.b16 %v2977
        %v2982 = vunpack.c.l.b16 %v2978
        %v2983 = vunpack.c.l.b16 %v2979
        %v2984 = vrot.slane %v2980, 4
        %v2985 = vrot.slane %v2981, 3
        %v2986 = vsel %vm1246, %v2985, %v2984
        %v2987 = vrot.slane %v2982, 2
        %v2988 = vsel %vm1249, %v2987, %v2986
        %v2989 = vrot.slane %v2983, 1
        %v2990 = vsel %vm1252, %v2989, %v2988
        %v2991 = vpack.c.b16 %v2990, %v2990
        %2992 = vrot.lane.b32.xlu0 %v2991, 79
        %v2993 = vpop.permute.xlu0 %2992
        %vm2995 = vcmask 773754
        %2996 = vst.msk [vmem:[#allocation2 + $0x8] sm:$0xc] %vm2995, %v2993
        %v2997 = vld [vmem:[%s406 + $0xd] sm:$0x1]
        %v2998 = vld [vmem:[%s406 + $0x1d] sm:$0x1]
        %v2999 = vld [vmem:[%s406 + $0x2d] sm:$0x1]
        %v3000 = vld [vmem:[%s406 + $0x3d] sm:$0x1]
        %v3001 = vpack.c.bf16 %v2997, %v2997
        %v3002 = vpack.c.bf16 %v2998, %v2998
        %v3003 = vpack.c.bf16 %v2999, %v2999
        %v3004 = vpack.c.bf16 %v3000, %v3000
        %v3009 = vunpack.c.l.b16 %v3001
        %v3010 = vunpack.c.l.b16 %v3002
        %v3011 = vunpack.c.l.b16 %v3003
        %v3012 = vunpack.c.l.b16 %v3004
        %v3013 = vpack.c.b16 %v3009, %v3009
        %v3014 = vpack.c.b16 %v3010, %v3010
        %v3015 = vpack.c.b16 %v3011, %v3011
        %v3016 = vpack.c.b16 %v3012, %v3012
        %v3017 = vunpack.c.l.b16 %v3013
        %v3018 = vunpack.c.l.b16 %v3014
        %v3019 = vunpack.c.l.b16 %v3015
        %v3020 = vunpack.c.l.b16 %v3016
        %v3021 = vrot.slane %v3018, 7
        %v3022 = vsel %vm1206, %v3021, %v3017
        %v3023 = vrot.slane %v3019, 6
        %v3024 = vsel %vm1209, %v3023, %v3022
        %v3025 = vrot.slane %v3020, 5
        %v3026 = vsel %vm1212, %v3025, %v3024
        %v3027 = vpack.c.b16 %v3026, %v3026
        %3028 = vrot.lane.b32.xlu0 %v3027, 79
        %v3029 = vpop.permute.xlu0 %3028
        %3031 = vst.msk [vmem:[#allocation2 + $0x18] sm:$0x3] %vm2958, %v3029
        %v3032 = vld [vmem:[#allocation3 + $0x4] sm:$0x4]
        %v3033 = vld [vmem:[#allocation3 + $0xc] sm:$0x4]
        %v3034 = vld [vmem:[#allocation3 + $0x14] sm:$0x4]
        %v3035 = vld [vmem:[#allocation3 + $0x1c] sm:$0x4]
        %v3040 = vunpack.c.l.b16 %v3032
        %v3041 = vunpack.c.l.b16 %v3033
        %v3042 = vunpack.c.l.b16 %v3034
        %v3043 = vunpack.c.l.b16 %v3035
        %v3044 = vrot.slane %v3040, 1
        %v3045 = vsel %vm1246, %v3041, %v3044
        %v3046 = vrot.slane %v3042, 7
        %v3047 = vsel %vm1249, %v3046, %v3045
        %v3048 = vrot.slane %v3043, 6
        %v3049 = vsel %vm1252, %v3048, %v3047
        %v3050 = vpack.c.b16 %v3049, %v3049
        %3051 = vrot.lane.b32.xlu0 %v3050, 79
        %v3052 = vpop.permute.xlu0 %3051
        %3054 = vst.msk [vmem:[#allocation2 + $0x18] sm:$0xc] %vm2995, %v3052
        %v3055 = vld [vmem:[%s388 + $0xe] sm:$0x1]
        %v3056 = vld [vmem:[%s388 + $0x1e] sm:$0x1]
        %v3057 = vld [vmem:[%s388 + $0x2e] sm:$0x1]
        %v3058 = vld [vmem:[%s388 + $0x3e] sm:$0x1]
        %v3059 = vpack.c.bf16 %v3055, %v3055
        %v3060 = vpack.c.bf16 %v3056, %v3056
        %v3061 = vpack.c.bf16 %v3057, %v3057
        %v3062 = vpack.c.bf16 %v3058, %v3058
        %v3067 = vunpack.c.l.b16 %v3059
        %v3068 = vunpack.c.l.b16 %v3060
        %v3069 = vunpack.c.l.b16 %v3061
        %v3070 = vunpack.c.l.b16 %v3062
        %v3071 = vpack.c.b16 %v3067, %v3067
        %v3072 = vpack.c.b16 %v3068, %v3068
        %v3073 = vpack.c.b16 %v3069, %v3069
        %v3074 = vpack.c.b16 %v3070, %v3070
        %v3075 = vunpack.c.l.b16 %v3071
        %v3076 = vunpack.c.l.b16 %v3072
        %v3077 = vunpack.c.l.b16 %v3073
        %v3078 = vunpack.c.l.b16 %v3074
        %v3079 = vrot.slane %v3076, 7
        %v3080 = vsel %vm1206, %v3079, %v3075
        %v3081 = vrot.slane %v3077, 6
        %v3082 = vsel %vm1209, %v3081, %v3080
        %v3083 = vrot.slane %v3078, 5
        %v3084 = vsel %vm1212, %v3083, %v3082
        %v3085 = vpack.c.b16 %v3084, %v3084
        %3086 = vrot.lane.b32.xlu0 %v3085, 101
        %v3087 = vpop.permute.xlu0 %3086
        %vm3089 = vcmask 952104
        %3090 = vst.msk [vmem:[#allocation2 + $0x8] sm:$0x3] %vm3089, %v3087
        %v3091 = vld [vmem:[%s397 + $0xe] sm:$0x1]
        %v3092 = vld [vmem:[%s397 + $0x1e] sm:$0x1]
        %v3093 = vld [vmem:[%s397 + $0x2e] sm:$0x1]
        %v3094 = vld [vmem:[%s397 + $0x3e] sm:$0x1]
        %v3095 = vpack.c.bf16 %v3091, %v3091
        %v3096 = vpack.c.bf16 %v3092, %v3092
        %v3097 = vpack.c.bf16 %v3093, %v3093
        %v3098 = vpack.c.bf16 %v3094, %v3094
        %v3103 = vunpack.c.l.b16 %v3095
        %v3104 = vunpack.c.l.b16 %v3096
        %v3105 = vunpack.c.l.b16 %v3097
        %v3106 = vunpack.c.l.b16 %v3098
        %v3107 = vpack.c.b16 %v3103, %v3103
        %v3108 = vpack.c.b16 %v3104, %v3104
        %v3109 = vpack.c.b16 %v3105, %v3105
        %v3110 = vpack.c.b16 %v3106, %v3106
        %v3111 = vunpack.c.l.b16 %v3107
        %v3112 = vunpack.c.l.b16 %v3108
        %v3113 = vunpack.c.l.b16 %v3109
        %v3114 = vunpack.c.l.b16 %v3110
        %v3115 = vrot.slane %v3111, 4
        %v3116 = vrot.slane %v3112, 3
        %v3117 = vsel %vm1246, %v3116, %v3115
        %v3118 = vrot.slane %v3113, 2
        %v3119 = vsel %vm1249, %v3118, %v3117
        %v3120 = vrot.slane %v3114, 1
        %v3121 = vsel %vm1252, %v3120, %v3119
        %v3122 = vpack.c.b16 %v3121, %v3121
        %3123 = vrot.lane.b32.xlu0 %v3122, 101
        %v3124 = vpop.permute.xlu0 %3123
        %vm3126 = vcmask 954154
        %3127 = vst.msk [vmem:[#allocation2 + $0x8] sm:$0xc] %vm3126, %v3124
        %v3128 = vld [vmem:[%s406 + $0xe] sm:$0x1]
        %v3129 = vld [vmem:[%s406 + $0x1e] sm:$0x1]
        %v3130 = vld [vmem:[%s406 + $0x2e] sm:$0x1]
        %v3131 = vld [vmem:[%s406 + $0x3e] sm:$0x1]
        %v3132 = vpack.c.bf16 %v3128, %v3128
        %v3133 = vpack.c.bf16 %v3129, %v3129
        %v3134 = vpack.c.bf16 %v3130, %v3130
        %v3135 = vpack.c.bf16 %v3131, %v3131
        %v3140 = vunpack.c.l.b16 %v3132
        %v3141 = vunpack.c.l.b16 %v3133
        %v3142 = vunpack.c.l.b16 %v3134
        %v3143 = vunpack.c.l.b16 %v3135
        %v3144 = vpack.c.b16 %v3140, %v3140
        %v3145 = vpack.c.b16 %v3141, %v3141
        %v3146 = vpack.c.b16 %v3142, %v3142
        %v3147 = vpack.c.b16 %v3143, %v3143
        %v3148 = vunpack.c.l.b16 %v3144
        %v3149 = vunpack.c.l.b16 %v3145
        %v3150 = vunpack.c.l.b16 %v3146
        %v3151 = vunpack.c.l.b16 %v3147
        %v3152 = vrot.slane %v3149, 7
        %v3153 = vsel %vm1206, %v3152, %v3148
        %v3154 = vrot.slane %v3150, 6
        %v3155 = vsel %vm1209, %v3154, %v3153
        %v3156 = vrot.slane %v3151, 5
        %v3157 = vsel %vm1212, %v3156, %v3155
        %v3158 = vpack.c.b16 %v3157, %v3157
        %3159 = vrot.lane.b32.xlu0 %v3158, 101
        %v3160 = vpop.permute.xlu0 %3159
        %3162 = vst.msk [vmem:[#allocation2 + $0x18] sm:$0x3] %vm3089, %v3160
        %v3163 = vld [vmem:[#allocation3 + $0x4] sm:$0x8]
        %v3164 = vld [vmem:[#allocation3 + $0xc] sm:$0x8]
        %v3165 = vld [vmem:[#allocation3 + $0x14] sm:$0x8]
        %v3166 = vld [vmem:[#allocation3 + $0x1c] sm:$0x8]
        %v3171 = vunpack.c.l.b16 %v3163
        %v3172 = vunpack.c.l.b16 %v3164
        %v3173 = vunpack.c.l.b16 %v3165
        %v3174 = vunpack.c.l.b16 %v3166
        %v3175 = vrot.slane %v3171, 2
        %v3176 = vrot.slane %v3172, 1
        %v3177 = vsel %vm1246, %v3176, %v3175
        %v3178 = vsel %vm1249, %v3173, %v3177
        %v3179 = vrot.slane %v3174, 7
        %v3180 = vsel %vm1252, %v3179, %v3178
        %v3181 = vpack.c.b16 %v3180, %v3180
        %3182 = vrot.lane.b32.xlu0 %v3181, 101
        %v3183 = vpop.permute.xlu0 %3182
        %3185 = vst.msk [vmem:[#allocation2 + $0x18] sm:$0xc] %vm3126, %v3183
        %v3186 = vld [vmem:[%s388 + $0xf] sm:$0x1]
        %v3187 = vld [vmem:[%s388 + $0x1f] sm:$0x1]
        %v3188 = vld [vmem:[%s388 + $0x2f] sm:$0x1]
        %v3189 = vld [vmem:[%s388 + $0x3f] sm:$0x1]
        %v3190 = vpack.c.bf16 %v3186, %v3186
        %v3191 = vpack.c.bf16 %v3187, %v3187
        %v3192 = vpack.c.bf16 %v3188, %v3188
        %v3193 = vpack.c.bf16 %v3189, %v3189
        %v3198 = vunpack.c.l.b16 %v3190
        %v3199 = vunpack.c.l.b16 %v3191
        %v3200 = vunpack.c.l.b16 %v3192
        %v3201 = vunpack.c.l.b16 %v3193
        %v3202 = vpack.c.b16 %v3198, %v3198
        %v3203 = vpack.c.b16 %v3199, %v3199
        %v3204 = vpack.c.b16 %v3200, %v3200
        %v3205 = vpack.c.b16 %v3201, %v3201
        %v3206 = vunpack.c.l.b16 %v3202
        %v3207 = vunpack.c.l.b16 %v3203
        %v3208 = vunpack.c.l.b16 %v3204
        %v3209 = vunpack.c.l.b16 %v3205
        %v3210 = vrot.slane %v3207, 7
        %v3211 = vsel %vm1206, %v3210, %v3206
        %v3212 = vrot.slane %v3208, 6
        %v3213 = vsel %vm1209, %v3212, %v3211
        %v3214 = vrot.slane %v3209, 5
        %v3215 = vsel %vm1212, %v3214, %v3213
        %v3216 = vpack.c.b16 %v3215, %v3215
        %3217 = vrot.lane.b32.xlu0 %v3216, 123
        %v3218 = vpop.permute.xlu0 %3217
        %v3219 = vrot.slane %v3218, 4
        %vm3220 = vcmask 1006592
        %v3221 = vsel %vm3220, %v3219, %v3218
        %vm3223 = vcmask 1042392
        %vm3224 = vcmask 87044
        %vm3225 = vmor %vm3224, %vm3223
        %3226 = vst.msk [vmem:[#allocation2 + $0x8] sm:$0x33] %vm3225, %v3221
        %v3227 = vld [vmem:[%s397 + $0xf] sm:$0x1]
        %v3228 = vld [vmem:[%s397 + $0x1f] sm:$0x1]
        %v3229 = vld [vmem:[%s397 + $0x2f] sm:$0x1]
        %v3230 = vld [vmem:[%s397 + $0x3f] sm:$0x1]
        %v3231 = vpack.c.bf16 %v3227, %v3227
        %v3232 = vpack.c.bf16 %v3228, %v3228
        %v3233 = vpack.c.bf16 %v3229, %v3229
        %v3234 = vpack.c.bf16 %v3230, %v3230
        %v3239 = vunpack.c.l.b16 %v3231
        %v3240 = vunpack.c.l.b16 %v3232
        %v3241 = vunpack.c.l.b16 %v3233
        %v3242 = vunpack.c.l.b16 %v3234
        %v3243 = vpack.c.b16 %v3239, %v3239
        %v3244 = vpack.c.b16 %v3240, %v3240
        %v3245 = vpack.c.b16 %v3241, %v3241
        %v3246 = vpack.c.b16 %v3242, %v3242
        %v3247 = vunpack.c.l.b16 %v3243
        %v3248 = vunpack.c.l.b16 %v3244
        %v3249 = vunpack.c.l.b16 %v3245
        %v3250 = vunpack.c.l.b16 %v3246
        %v3251 = vrot.slane %v3247, 4
        %v3252 = vrot.slane %v3248, 3
        %v3253 = vsel %vm1246, %v3252, %v3251
        %v3254 = vrot.slane %v3249, 2
        %v3255 = vsel %vm1249, %v3254, %v3253
        %v3256 = vrot.slane %v3250, 1
        %v3257 = vsel %vm1252, %v3256, %v3255
        %v3258 = vpack.c.b16 %v3257, %v3257
        %3259 = vrot.lane.b32.xlu0 %v3258, 123
        %v3260 = vpop.permute.xlu0 %3259
        %v3261 = vrot.slane %v3260, 4
        %v3262 = vsel %vm3220, %v3261, %v3260
        %vm3264 = vcmask 1044442
        %vm3265 = vcmask 89094
        %vm3266 = vmor %vm3265, %vm3264
        %3267 = vst.msk [vmem:[#allocation2 + $0x8] sm:$0xcc] %vm3266, %v3262
        %v3268 = vld [vmem:[%s406 + $0xf] sm:$0x1]
        %v3269 = vld [vmem:[%s406 + $0x1f] sm:$0x1]
        %v3270 = vld [vmem:[%s406 + $0x2f] sm:$0x1]
        %v3271 = vld [vmem:[%s406 + $0x3f] sm:$0x1]
        %v3272 = vpack.c.bf16 %v3268, %v3268
        %v3273 = vpack.c.bf16 %v3269, %v3269
        %v3274 = vpack.c.bf16 %v3270, %v3270
        %v3275 = vpack.c.bf16 %v3271, %v3271
        %v3280 = vunpack.c.l.b16 %v3272
        %v3281 = vunpack.c.l.b16 %v3273
        %v3282 = vunpack.c.l.b16 %v3274
        %v3283 = vunpack.c.l.b16 %v3275
        %v3284 = vpack.c.b16 %v3280, %v3280
        %v3285 = vpack.c.b16 %v3281, %v3281
        %v3286 = vpack.c.b16 %v3282, %v3282
        %v3287 = vpack.c.b16 %v3283, %v3283
        %v3288 = vunpack.c.l.b16 %v3284
        %v3289 = vunpack.c.l.b16 %v3285
        %v3290 = vunpack.c.l.b16 %v3286
        %v3291 = vunpack.c.l.b16 %v3287
        %v3292 = vrot.slane %v3289, 7
        %v3293 = vsel %vm1206, %v3292, %v3288
        %v3294 = vrot.slane %v3290, 6
        %v3295 = vsel %vm1209, %v3294, %v3293
        %v3296 = vrot.slane %v3291, 5
        %v3297 = vsel %vm1212, %v3296, %v3295
        %v3298 = vpack.c.b16 %v3297, %v3297
        %3299 = vrot.lane.b32.xlu0 %v3298, 123
        %v3300 = vpop.permute.xlu0 %3299
        %v3301 = vrot.slane %v3300, 4
        %v3302 = vsel %vm3220, %v3301, %v3300
        %3304 = vst.msk [vmem:[#allocation2 + $0x18] sm:$0x33] %vm3225, %v3302
        %v3305 = vld [vmem:[#allocation3 + $0x4] sm:$0x8]
        %v3306 = vld [vmem:[#allocation3 + $0xc] sm:$0x8]
        %v3307 = vld [vmem:[#allocation3 + $0x14] sm:$0x8]
        %v3308 = vld [vmem:[#allocation3 + $0x1c] sm:$0x8]
        %v3313 = vunpack.c.l.b16 %v3305
        %v3314 = vunpack.c.l.b16 %v3306
        %v3315 = vunpack.c.l.b16 %v3307
        %v3316 = vunpack.c.l.b16 %v3308
        %v3317 = vrot.slane %v3313, 3
        %v3318 = vrot.slane %v3314, 2
        %v3319 = vsel %vm1246, %v3318, %v3317
        %v3320 = vrot.slane %v3315, 1
        %v3321 = vsel %vm1249, %v3320, %v3319
        %v3322 = vsel %vm1252, %v3316, %v3321
        %v3323 = vpack.c.b16 %v3322, %v3322
        %3324 = vrot.lane.b32.xlu0 %v3323, 123
        %v3325 = vpop.permute.xlu0 %3324
        %v3326 = vrot.slane %v3325, 4
        %v3327 = vsel %vm3220, %v3326, %v3325
        %3329 = vst.msk [vmem:[#allocation2 + $0x18] sm:$0xcc] %vm3266, %v3327
        %v3330 = vld [vmem:[#allocation2] sm:$0xff]
        %v3331 = vld [vmem:[#allocation2 + $0x8] sm:$0xff]
        %v3332 = vld [vmem:[#allocation2 + $0x10] sm:$0xff]
        %v3333 = vld [vmem:[#allocation2 + $0x18] sm:$0xff]
        %v3338 = vunpack.c.l.b16 %v3330
        %v3339 = vunpack.c.h.b16 %v3330
        %v3340 = vunpack.c.l.b16 %v3331
        %v3341 = vunpack.c.l.b16 %v3332
        %v3342 = vunpack.c.h.b16 %v3332
        %v3343 = vunpack.c.l.b16 %v3333
        %v3344 = vpack.c.b16 %v3341, %v3338
        %v3345 = vpack.c.b16 %v3342, %v3339
        %v3346 = vpack.c.b16 %v3343, %v3340
        %3350 = vrot.lane.b32.xlu0 %v3344, 126
        %v3351 = vpop.permute.xlu0 %3350
        %3352 = vrot.lane.b32.xlu0 %v3345, 126
        %v3353 = vpop.permute.xlu0 %3352
        %3354 = vrot.lane.b32.xlu0 %v3346, 126
        %v3355 = vpop.permute.xlu0 %3354
        %vm3356 = vcmask 1031168
        %v3357 = vsel %vm3356, %v3351, %v3353
        %v3358 = vsel %vm3356, %v3353, %v3355
        %3362 = vrot.lane.b32.xlu0 %v3344, 124
        %v3363 = vpop.permute.xlu0 %3362
        %3364 = vrot.lane.b32.xlu0 %v3345, 124
        %v3365 = vpop.permute.xlu0 %3364
        %3366 = vrot.lane.b32.xlu0 %v3346, 124
        %v3367 = vpop.permute.xlu0 %3366
        %vm3368 = vcmask 1014784
        %v3369 = vsel %vm3368, %v3363, %v3365
        %v3370 = vsel %vm3368, %v3365, %v3367
        %v3374 = vunpack.c.h.b16 %v3331
        %v3375 = vunpack.c.h.b16 %v3333
        %v3376 = vpack.c.b16 %v3375, %v3374
        %3377 = vrot.lane.b32.xlu0 %v3344, 84
        %v3378 = vpop.permute.xlu0 %3377
        %3379 = vrot.lane.b32.xlu0 %v3345, 84
        %v3380 = vpop.permute.xlu0 %3379
        %3381 = vrot.lane.b32.xlu0 %v3346, 84
        %v3382 = vpop.permute.xlu0 %3381
        %3383 = vrot.lane.b32.xlu0 %v3376, 84
        %v3384 = vpop.permute.xlu0 %3383
        %vm3385 = vcmask 687104
        %v3386 = vsel %vm3385, %v3378, %v3380
        %v3387 = vsel %vm3385, %v3380, %v3382
        %v3388 = vsel %vm3385, %v3382, %v3384
        %3392 = vrot.lane.b32.xlu0 %v3344, 82
        %v3393 = vpop.permute.xlu0 %3392
        %3394 = vrot.lane.b32.xlu0 %v3345, 82
        %v3395 = vpop.permute.xlu0 %3394
        %3396 = vrot.lane.b32.xlu0 %v3346, 82
        %v3397 = vpop.permute.xlu0 %3396
        %3398 = vrot.lane.b32.xlu0 %v3376, 82
        %v3399 = vpop.permute.xlu0 %3398
        %vm3400 = vcmask 670720
        %v3401 = vsel %vm3400, %v3393, %v3395
        %v3402 = vsel %vm3400, %v3395, %v3397
        %v3403 = vsel %vm3400, %v3397, %v3399
        %3407 = vrot.lane.b32.xlu0 %v3344, 80
        %v3408 = vpop.permute.xlu0 %3407
        %3409 = vrot.lane.b32.xlu0 %v3345, 80
        %v3410 = vpop.permute.xlu0 %3409
        %3411 = vrot.lane.b32.xlu0 %v3346, 80
        %v3412 = vpop.permute.xlu0 %3411
        %3413 = vrot.lane.b32.xlu0 %v3376, 80
        %v3414 = vpop.permute.xlu0 %3413
        %vm3415 = vcmask 654336
        %v3416 = vsel %vm3415, %v3408, %v3410
        %v3417 = vsel %vm3415, %v3410, %v3412
        %v3418 = vsel %vm3415, %v3412, %v3414
        %3422 = vrot.lane.b32.xlu0 %v3344, 40
        %v3423 = vpop.permute.xlu0 %3422
        %3424 = vrot.lane.b32.xlu0 %v3345, 40
        %v3425 = vpop.permute.xlu0 %3424
        %3426 = vrot.lane.b32.xlu0 %v3346, 40
        %v3427 = vpop.permute.xlu0 %3426
        %3428 = vrot.lane.b32.xlu0 %v3376, 40
        %v3429 = vpop.permute.xlu0 %3428
        %vm3430 = vcmask 326656
        %v3431 = vsel %vm3430, %v3423, %v3425
        %v3432 = vsel %vm3430, %v3425, %v3427
        %v3433 = vsel %vm3430, %v3427, %v3429
        %3437 = vrot.lane.b32.xlu0 %v3344, 38
        %v3438 = vpop.permute.xlu0 %3437
        %3439 = vrot.lane.b32.xlu0 %v3345, 38
        %v3440 = vpop.permute.xlu0 %3439
        %3441 = vrot.lane.b32.xlu0 %v3346, 38
        %v3442 = vpop.permute.xlu0 %3441
        %3443 = vrot.lane.b32.xlu0 %v3376, 38
        %v3444 = vpop.permute.xlu0 %3443
        %vm3445 = vcmask 310272
        %v3446 = vsel %vm3445, %v3438, %v3440
        %v3447 = vsel %vm3445, %v3440, %v3442
        %v3448 = vsel %vm3445, %v3442, %v3444
        %3452 = vrot.lane.b32.xlu0 %v3344, 36
        %v3453 = vpop.permute.xlu0 %3452
        %3454 = vrot.lane.b32.xlu0 %v3345, 36
        %v3455 = vpop.permute.xlu0 %3454
        %3456 = vrot.lane.b32.xlu0 %v3346, 36
        %v3457 = vpop.permute.xlu0 %3456
        %3458 = vrot.lane.b32.xlu0 %v3376, 36
        %v3459 = vpop.permute.xlu0 %3458
        %vm3460 = vcmask 293888
        %v3461 = vsel %vm3460, %v3453, %v3455
        %v3462 = vsel %vm3460, %v3455, %v3457
        %v3463 = vsel %vm3460, %v3457, %v3459
        %v3467 = vld [vmem:[%s4] sm:$0xff]
        %v3468 = vld [vmem:[%s5] sm:$0xff]
        %3470 = vset.pattern.permute.xlu0 0
        %3471 = vperm.xlu0 %3470, %v3468
        %v3472 = vpop.permute.xlu0 %3471
        %v3475 = vunpack.c.l.b16 %v3467
        %v3476 = vunpack.c.h.b16 %v3467
        %v3477 = vpack.c.b16 %v3475, %v3475
        %v3478 = vpack.c.b16 %v3476, %v3476
        %vm3480 = vcmask 130048
        %v3482 = vsel %vm3480, %v3478, 0
        %3484 = vmatprep.subr.bf16.mxu0 %v3447
        %3485 = vmatpush1.bf16.msra.mxu0 %v3446
        %3486 = vmatprep.subr.bf16.mxu0 %v3432
        %3487 = vmatpush1.bf16.msra.mxu0 %v3431
        %3488 = vmatprep.subr.bf16.mxu0 %v3417
        %3489 = vmatpush1.bf16.msra.mxu0 %v3416
        %3490 = vmatprep.subr.bf16.mxu0 %v3402
        %3491 = vmatpush1.bf16.msra.mxu0 %v3401
        %3492 = vmatprep.subr.bf16.mxu0 %v3387
        %3493 = vmatpush1.bf16.msra.mxu0 %v3386
        %3494 = vmatprep.subr.bf16.mxu0 %v3370
        %3495 = vmatpush1.bf16.msra.mxu0 %v3369
        %3496 = vmatprep.subr.bf16.mxu0 %v3358
        %3497 = vmatpush1.bf16.msra.mxu0 %v3357
        %3498 = vmatprep.subr.bf16.mxu0 %v3345
        %3499 = vmatpush1.bf16.msra.mxu0 %v3344
        %3500 = vmatprep.subr.bf16.mxu0 0
        %3501 = vmatpush2.bf16.msra.mxu0 0
        %3502 = vmatprep.subr.bf16.mxu0 0
        %3503 = vmatpush2.bf16.msra.mxu0 0
        %3504 = vmatprep.subr.bf16.mxu0 0
        %3505 = vmatpush2.bf16.msra.mxu0 0
        %3506 = vmatprep.subr.bf16.mxu0 0
        %3507 = vmatpush2.bf16.msra.mxu0 0
        %3508 = vmatprep.subr.bf16.mxu0 0
        %3509 = vmatpush2.bf16.msra.mxu0 0
        %3510 = vmatprep.subr.bf16.mxu0 0
        %3511 = vmatpush2.bf16.msra.mxu0 0
        %3512 = vmatprep.subr.bf16.mxu0 0
        %3513 = vmatpush2.bf16.msra.mxu0 0
        %3514 = vmatprep.subr.bf16.mxu0 %v3462
        %3515 = vmatpush2.bf16.msra.mxu0 %v3461
        %3516 = vmatprep.mubr.bf16.mxu0 %v3482
        %3517 = vmatmul.mubr.bf16.gmra.mxu0 %v3477
        %v3518 = vpop.f32.mrf.mxu0
        %v3519 = vadd.f32 %v3472, %v3518
        %v3520 = vpop.f32.mrf.mxu0
        %v3521 = vadd.f32 %v3472, %v3520
        %v3522 = vpop.f32.mrf.mxu0
        %v3523 = vpop.f32.mrf.mxu0
        %3524 = vdwg.mxu0
        %3525 = vmatprep.subr.bf16.mxu0 0
        %3526 = vmatpush1.bf16.msra.mxu0 %v3448
        %3527 = vmatprep.subr.bf16.mxu0 0
        %3528 = vmatpush1.bf16.msra.mxu0 %v3433
        %3529 = vmatprep.subr.bf16.mxu0 0
        %3530 = vmatpush1.bf16.msra.mxu0 %v3418
        %3531 = vmatprep.subr.bf16.mxu0 0
        %3532 = vmatpush1.bf16.msra.mxu0 %v3403
        %3533 = vmatprep.subr.bf16.mxu0 0
        %3534 = vmatpush1.bf16.msra.mxu0 %v3388
        %3535 = vmatprep.subr.bf16.mxu0 0
        %3536 = vmatpush1.bf16.msra.mxu0 %v3367
        %3537 = vmatprep.subr.bf16.mxu0 0
        %3538 = vmatpush1.bf16.msra.mxu0 %v3355
        %3539 = vmatprep.subr.bf16.mxu0 0
        %3540 = vmatpush1.bf16.msra.mxu0 %v3346
        %3541 = vmatprep.subr.bf16.mxu0 0
        %3542 = vmatpush2.bf16.msra.mxu0 0
        %3543 = vmatprep.subr.bf16.mxu0 0
        %3544 = vmatpush2.bf16.msra.mxu0 0
        %3545 = vmatprep.subr.bf16.mxu0 0
        %3546 = vmatpush2.bf16.msra.mxu0 0
        %3547 = vmatprep.subr.bf16.mxu0 0
        %3548 = vmatpush2.bf16.msra.mxu0 0
        %3549 = vmatprep.subr.bf16.mxu0 0
        %3550 = vmatpush2.bf16.msra.mxu0 0
        %3551 = vmatprep.subr.bf16.mxu0 0
        %3552 = vmatpush2.bf16.msra.mxu0 0
        %3553 = vmatprep.subr.bf16.mxu0 0
        %3554 = vmatpush2.bf16.msra.mxu0 0
        %3555 = vmatprep.subr.bf16.mxu0 0
        %3556 = vmatpush2.bf16.msra.mxu0 %v3463
        %3557 = vmatprep.mubr.bf16.mxu0 %v3482
        %3558 = vmatmul.mubr.bf16.gmra.mxu0 %v3477
        %v3559 = vpop.f32.mrf.mxu0
        %v3560 = vadd.f32 %v3472, %v3559
        %v3561 = vpop.f32.mrf.mxu0
        %v3562 = vpop.f32.mrf.mxu0
        %v3563 = vpop.f32.mrf.mxu0
        %3564 = vdwg.mxu0
        %v3565 = vmax.f32 %v3519, 0.0
        %v3566 = vmax.f32 %v3521, 0.0
        %v3567 = vmax.f32 %v3560, 0.0
        %v3568 = vld [vmem:[%s8] sm:$0x7]
        %v3570 = vlaneseq
        %v3571 = vshrl.u32 %v3570, 7
        %v3572 = vsub.s32 0, %v3571
        %v3573 = vrot.slane %v3568, %v3572
        %v3574 = vlaneseq
        %v3575 = vshrl.u32 %v3574, 7
        %v3576 = vsub.s32 1, %v3575
        %v3577 = vrot.slane %v3568, %v3576
        %v3578 = vlaneseq
        %v3579 = vshrl.u32 %v3578, 7
        %v3580 = vsub.s32 2, %v3579
        %v3581 = vrot.slane %v3568, %v3580
        %v3585 = vmul.f32 %v3565, %v3573
        %v3586 = vmul.f32 %v3566, %v3577
        %v3587 = vmul.f32 %v3567, %v3581
        %3591 = vrot.lane.b32.xlu0 %v3585, 69
        %v3592 = vpop.permute.xlu0 %3591
        %3593 = vrot.lane.b32.xlu0 %v3586, 69
        %v3594 = vpop.permute.xlu0 %3593
        %3595 = vrot.lane.b32.xlu0 %v3587, 69
        %v3596 = vpop.permute.xlu0 %3595
        %vm3597 = vcmask 564224
        %v3598 = vsel %vm3597, %v3592, %v3594
        %v3599 = vsel %vm3597, %v3594, %v3596
        %v3604 = vsel %vm3597, 0.0, %v3592
        %vm3605 = vcmask 302080
        %v3606 = vsel %vm3605, %v3596, 0.0
        %3608 = vrot.lane.b32.xlu0 %v3604, 125
        %v3609 = vpop.permute.xlu0 %3608
        %3610 = vrot.lane.b32.xlu0 %v3598, 125
        %v3611 = vpop.permute.xlu0 %3610
        %3612 = vrot.lane.b32.xlu0 %v3599, 125
        %v3613 = vpop.permute.xlu0 %3612
        %vm3614 = vcmask 1022976
        %v3615 = vsel %vm3614, %v3609, %v3611
        %v3616 = vsel %vm3614, %v3611, %v3613
        %3620 = vrot.lane.b32.xlu0 %v3604, 122
        %v3621 = vpop.permute.xlu0 %3620
        %3622 = vrot.lane.b32.xlu0 %v3598, 122
        %v3623 = vpop.permute.xlu0 %3622
        %3624 = vrot.lane.b32.xlu0 %v3599, 122
        %v3625 = vpop.permute.xlu0 %3624
        %vm3626 = vcmask 998400
        %v3627 = vsel %vm3626, %v3621, %v3623
        %v3628 = vsel %vm3626, %v3623, %v3625
        %3633 = vrot.lane.b32.xlu0 %v3604, 62
        %v3634 = vpop.permute.xlu0 %3633
        %3635 = vrot.lane.b32.xlu0 %v3598, 62
        %v3636 = vpop.permute.xlu0 %3635
        %3637 = vrot.lane.b32.xlu0 %v3599, 62
        %v3638 = vpop.permute.xlu0 %3637
        %3639 = vrot.lane.b32.xlu0 %v3606, 62
        %v3640 = vpop.permute.xlu0 %3639
        %vm3641 = vcmask 506880
        %v3642 = vsel %vm3641, %v3634, %v3636
        %v3643 = vsel %vm3641, %v3636, %v3638
        %v3644 = vsel %vm3641, %v3638, %v3640
        %3648 = vrot.lane.b32.xlu0 %v3604, 59
        %v3649 = vpop.permute.xlu0 %3648
        %3650 = vrot.lane.b32.xlu0 %v3598, 59
        %v3651 = vpop.permute.xlu0 %3650
        %3652 = vrot.lane.b32.xlu0 %v3599, 59
        %v3653 = vpop.permute.xlu0 %3652
        %3654 = vrot.lane.b32.xlu0 %v3606, 59
        %v3655 = vpop.permute.xlu0 %3654
        %vm3656 = vcmask 482304
        %v3657 = vsel %vm3656, %v3649, %v3651
        %v3658 = vsel %vm3656, %v3651, %v3653
        %v3659 = vsel %vm3656, %v3653, %v3655
        %3663 = vrot.lane.b32.xlu0 %v3604, 56
        %v3664 = vpop.permute.xlu0 %3663
        %3665 = vrot.lane.b32.xlu0 %v3598, 56
        %v3666 = vpop.permute.xlu0 %3665
        %3667 = vrot.lane.b32.xlu0 %v3599, 56
        %v3668 = vpop.permute.xlu0 %3667
        %3669 = vrot.lane.b32.xlu0 %v3606, 56
        %v3670 = vpop.permute.xlu0 %3669
        %vm3671 = vcmask 457728
        %v3672 = vsel %vm3671, %v3664, %v3666
        %v3673 = vsel %vm3671, %v3666, %v3668
        %v3674 = vsel %vm3671, %v3668, %v3670
        %3678 = vrot.lane.b32.xlu0 %v3598, 124
        %v3679 = vpop.permute.xlu0 %3678
        %3680 = vrot.lane.b32.xlu0 %v3599, 124
        %v3681 = vpop.permute.xlu0 %3680
        %3682 = vrot.lane.b32.xlu0 %v3606, 124
        %v3683 = vpop.permute.xlu0 %3682
        %vm3684 = vcmask 1014784
        %v3685 = vsel %vm3684, %v3679, %v3681
        %v3686 = vsel %vm3684, %v3681, %v3683
        %3690 = vrot.lane.b32.xlu0 %v3598, 121
        %v3691 = vpop.permute.xlu0 %3690
        %3692 = vrot.lane.b32.xlu0 %v3599, 121
        %v3693 = vpop.permute.xlu0 %3692
        %3694 = vrot.lane.b32.xlu0 %v3606, 121
        %v3695 = vpop.permute.xlu0 %3694
        %vm3696 = vcmask 990208
        %v3697 = vsel %vm3696, %v3691, %v3693
        %v3698 = vsel %vm3696, %v3693, %v3695
        %3702 = vrot.lane.b32.xlu0 %v3598, 118
        %v3703 = vpop.permute.xlu0 %3702
        %3704 = vrot.lane.b32.xlu0 %v3599, 118
        %v3705 = vpop.permute.xlu0 %3704
        %3706 = vrot.lane.b32.xlu0 %v3606, 118
        %v3707 = vpop.permute.xlu0 %3706
        %vm3708 = vcmask 965632
        %v3709 = vsel %vm3708, %v3703, %v3705
        %v3710 = vsel %vm3708, %v3705, %v3707
        %v3714 = vpack.c.bf16 %v3615, %v3604
        %v3715 = vpack.c.bf16 %v3616, %v3598
        %v3716 = vpack.c.bf16 %v3613, %v3599
        %v3717 = vpack.c.bf16 %v3642, %v3627
        %v3718 = vpack.c.bf16 %v3643, %v3628
        %v3719 = vpack.c.bf16 %v3644, %v3625
        %v3720 = vpack.c.bf16 %v3672, %v3657
        %v3721 = vpack.c.bf16 %v3673, %v3658
        %v3722 = vpack.c.bf16 %v3674, %v3659
        %v3723 = vpack.c.bf16 %v3697, %v3685
        %v3724 = vpack.c.bf16 %v3698, %v3686
        %v3725 = vpack.c.bf16 %v3695, %v3683
        %v3726 = vpack.c.bf16 %v3709, %v3709
        %v3727 = vpack.c.bf16 %v3710, %v3710
        %v3728 = vpack.c.bf16 %v3707, %v3707
        %v3729 = vld [vmem:[%s6] sm:$0xf]
        %v3730 = vld [vmem:[%s7] sm:$0xff]
        %3732 = vset.pattern.permute.xlu0 0
        %3733 = vperm.xlu0 %3732, %v3730
        %v3734 = vpop.permute.xlu0 %3733
        %vm3736 = vcmask 588800
        %v3738 = vsel %vm3736, %v3729, 0
        %v3741 = vsel %vm1175, %v3726, 0
        %v3744 = vsel %vm1175, %v3727, 0
        %v3747 = vsel %vm1175, %v3728, 0
        %3749 = vmatprep.subr.bf16.mxu0 0
        %3750 = vmatpush1.bf16.msra.mxu0 0
        %3751 = vmatprep.subr.bf16.mxu0 0
        %3752 = vmatpush1.bf16.msra.mxu0 0
        %3753 = vmatprep.subr.bf16.mxu0 0
        %3754 = vmatpush1.bf16.msra.mxu0 0
        %3755 = vmatprep.subr.bf16.mxu0 %v3744
        %3756 = vmatpush1.bf16.msra.mxu0 %v3741
        %3757 = vmatprep.subr.bf16.mxu0 %v3724
        %3758 = vmatpush1.bf16.msra.mxu0 %v3723
        %3759 = vmatprep.subr.bf16.mxu0 %v3721
        %3760 = vmatpush1.bf16.msra.mxu0 %v3720
        %3761 = vmatprep.subr.bf16.mxu0 %v3718
        %3762 = vmatpush1.bf16.msra.mxu0 %v3717
        %3763 = vmatprep.subr.bf16.mxu0 %v3715
        %3764 = vmatpush1.bf16.msra.mxu0 %v3714
        %3765 = vmatprep.subr.bf16.mxu0 0
        %3766 = vmatpush2.bf16.msra.mxu0 0
        %3767 = vmatprep.subr.bf16.mxu0 0
        %3768 = vmatpush2.bf16.msra.mxu0 0
        %3769 = vmatprep.subr.bf16.mxu0 0
        %3770 = vmatpush2.bf16.msra.mxu0 0
        %3771 = vmatprep.subr.bf16.mxu0 0
        %3772 = vmatpush2.bf16.msra.mxu0 0
        %3773 = vmatprep.subr.bf16.mxu0 0
        %3774 = vmatpush2.bf16.msra.mxu0 0
        %3775 = vmatprep.subr.bf16.mxu0 0
        %3776 = vmatpush2.bf16.msra.mxu0 0
        %3777 = vmatprep.subr.bf16.mxu0 0
        %3778 = vmatpush2.bf16.msra.mxu0 0
        %3779 = vmatprep.subr.bf16.mxu0 0
        %3780 = vmatpush2.bf16.msra.mxu0 0
        %3781 = vmatprep.mubr.bf16.mxu0 0
        %3782 = vmatmul.mubr.bf16.gmra.mxu0 %v3738
        %v3783 = vpop.f32.mrf.mxu0
        %v3784 = vadd.f32 %v3734, %v3783
        %v3785 = vpop.f32.mrf.mxu0
        %v3786 = vadd.f32 %v3734, %v3785
        %v3787 = vpop.f32.mrf.mxu0
        %v3788 = vpop.f32.mrf.mxu0
        %3789 = vdwg.mxu0
        %3790 = vmatprep.subr.bf16.mxu0 0
        %3791 = vmatpush1.bf16.msra.mxu0 0
        %3792 = vmatprep.subr.bf16.mxu0 0
        %3793 = vmatpush1.bf16.msra.mxu0 0
        %3794 = vmatprep.subr.bf16.mxu0 0
        %3795 = vmatpush1.bf16.msra.mxu0 0
        %3796 = vmatprep.subr.bf16.mxu0 0
        %3797 = vmatpush1.bf16.msra.mxu0 %v3747
        %3798 = vmatprep.subr.bf16.mxu0 0
        %3799 = vmatpush1.bf16.msra.mxu0 %v3725
        %3800 = vmatprep.subr.bf16.mxu0 0
        %3801 = vmatpush1.bf16.msra.mxu0 %v3722
        %3802 = vmatprep.subr.bf16.mxu0 0
        %3803 = vmatpush1.bf16.msra.mxu0 %v3719
        %3804 = vmatprep.subr.bf16.mxu0 0
        %3805 = vmatpush1.bf16.msra.mxu0 %v3716
        %3806 = vmatprep.subr.bf16.mxu0 0
        %3807 = vmatpush2.bf16.msra.mxu0 0
        %3808 = vmatprep.subr.bf16.mxu0 0
        %3809 = vmatpush2.bf16.msra.mxu0 0
        %3810 = vmatprep.subr.bf16.mxu0 0
        %3811 = vmatpush2.bf16.msra.mxu0 0
        %3812 = vmatprep.subr.bf16.mxu0 0
        %3813 = vmatpush2.bf16.msra.mxu0 0
        %3814 = vmatprep.subr.bf16.mxu0 0
        %3815 = vmatpush2.bf16.msra.mxu0 0
        %3816 = vmatprep.subr.bf16.mxu0 0
        %3817 = vmatpush2.bf16.msra.mxu0 0
        %3818 = vmatprep.subr.bf16.mxu0 0
        %3819 = vmatpush2.bf16.msra.mxu0 0
        %3820 = vmatprep.subr.bf16.mxu0 0
        %3821 = vmatpush2.bf16.msra.mxu0 0
        %3822 = vmatprep.mubr.bf16.mxu0 0
        %3823 = vmatmul.mubr.bf16.gmra.mxu0 %v3738
        %v3824 = vpop.f32.mrf.mxu0
        %v3825 = vadd.f32 %v3734, %v3824
        %v3826 = vpop.f32.mrf.mxu0
        %v3827 = vpop.f32.mrf.mxu0
        %v3828 = vpop.f32.mrf.mxu0
        %3829 = vdwg.mxu0
        %v3830 = vmax.f32 %v3784, 0.0
        %v3831 = vmax.f32 %v3786, 0.0
        %v3832 = vmax.f32 %v3825, 0.0
        %3834 = vrot.lane.b32.xlu0 %v3830, 125
        %v3835 = vpop.permute.xlu0 %3834
        %3837 = vrot.lane.b32.xlu0 %v3830, 119
        %v3838 = vpop.permute.xlu0 %3837
        %3840 = vrot.lane.b32.xlu0 %v3830, 113
        %v3841 = vpop.permute.xlu0 %3840
        %3843 = vrot.lane.b32.xlu0 %v3830, 107
        %v3844 = vpop.permute.xlu0 %3843
        %3846 = vrot.lane.b32.xlu0 %v3830, 101
        %v3847 = vpop.permute.xlu0 %3846
        %3850 = vrot.lane.b32.xlu0 %v3830, 95
        %v3851 = vpop.permute.xlu0 %3850
        %3852 = vrot.lane.b32.xlu0 %v3831, 95
        %v3853 = vpop.permute.xlu0 %3852
        %vm3854 = vcmask 777216
        %v3855 = vsel %vm3854, %v3851, %v3853
        %3857 = vrot.lane.b32.xlu0 %v3831, 89
        %v3858 = vpop.permute.xlu0 %3857
        %3860 = vrot.lane.b32.xlu0 %v3831, 83
        %v3861 = vpop.permute.xlu0 %3860
        %3863 = vrot.lane.b32.xlu0 %v3831, 77
        %v3864 = vpop.permute.xlu0 %3863
        %3866 = vrot.lane.b32.xlu0 %v3831, 71
        %v3867 = vpop.permute.xlu0 %3866
        %3869 = vrot.lane.b32.xlu0 %v3831, 65
        %v3870 = vpop.permute.xlu0 %3869
        %3873 = vrot.lane.b32.xlu0 %v3831, 59
        %v3874 = vpop.permute.xlu0 %3873
        %3875 = vrot.lane.b32.xlu0 %v3832, 59
        %v3876 = vpop.permute.xlu0 %3875
        %v3877 = vsel %vm3656, %v3874, %v3876
        %3879 = vrot.lane.b32.xlu0 %v3832, 53
        %v3880 = vpop.permute.xlu0 %3879
        %3882 = vrot.lane.b32.xlu0 %v3832, 47
        %v3883 = vpop.permute.xlu0 %3882
        %3885 = vrot.lane.b32.xlu0 %v3832, 41
        %v3886 = vpop.permute.xlu0 %3885
        %3888 = vrot.lane.b32.xlu0 %v3832, 35
        %v3889 = vpop.permute.xlu0 %3888
        %v3891 = vsel %vm3480, %v3835, %v3838
        %vm3892 = vcmask 261120
        %v3893 = vsel %vm3892, %v3891, %v3841
        %vm3894 = vcmask 392192
        %v3895 = vsel %vm3894, %v3893, %v3844
        %vm3896 = vcmask 523264
        %v3897 = vsel %vm3896, %v3895, %v3847
        %vm3898 = vcmask 654336
        %v3899 = vsel %vm3898, %v3897, %v3855
        %vm3900 = vcmask 785408
        %v3901 = vsel %vm3900, %v3899, %v3858
        %vm3902 = vcmask 916480
        %v3903 = vsel %vm3902, %v3901, %v3861
        %v3904 = vsel %vm3480, %v3864, %v3867
        %v3905 = vsel %vm3892, %v3904, %v3870
        %v3906 = vsel %vm3894, %v3905, %v3877
        %v3907 = vsel %vm3896, %v3906, %v3880
        %v3908 = vsel %vm3898, %v3907, %v3883
        %v3909 = vsel %vm3900, %v3908, %v3886
        %v3910 = vsel %vm3902, %v3909, %v3889
        %3911 = vst [vmem:[%s469] sm:$0xff] %v3903
        %3912 = vst [vmem:[%s469 + $0x8] sm:$0xff] %v3910
        %p3913 = scmp.lt.s32.totalorder %s29, 1
        %s3914 = scalar_select %p3913, %s29, 1
        %s3915 = smul.addr %s3914, 2
        %s3916 = smul.addr %s3915, 8
        %s3917 = scalar_lea.vmem %s9, %s3916
        // Predicated region
        $region73: #{_up4_forward.1} parent=55 // pred_check
          %p3918 = pneg %p256
        $region74: #{_up4_forward.1} parent=55 // pred_check_branch
          %3920 = sbr.rel (%p3918) target = $region76
        $region75: #{_up4_forward.1} parent=55 // pred_region
          _
        $region76: #{_up4_forward.1} parent=55 // pred_fallthru
          _
      $region56: #{_up4_forward.1} parent=5 // pred_fallthru
        _
      %p3921 = scmp.le.s32.totalorder 2, %s24
      // Predicated region
      $region77: #{_up4_forward.1} parent=5 // pred_check
        %p3922 = pneg %p3921
      $region78: #{_up4_forward.1} parent=5 // pred_check_branch
        %3924 = sbr.rel (%p3922) target = $region80
      $region79: #{_up4_forward.1} parent=5 // pred_region
        %s3925 = ssub.s32 %s24, 2
        // Predicated region
        $region81: #{_up4_forward.1} parent=79 // pred_check
          %p3926 = pneg %p262
        $region82: #{_up4_forward.1} parent=79 // pred_check_branch
          %3928 = sbr.rel (%p3926) target = $region84
        $region83: #{_up4_forward.1} parent=79 // pred_region
          %p3929 = scmp.lt.s32.totalorder %s30, 1
          %s3930 = scalar_select %p3929, %s30, 1
          %s3931 = smul.addr %s3930, 2
          %s3932 = smul.addr %s3931, 8
          %s3933 = scalar_lea.vmem %s9, %s3932
        $region84: #{_up4_forward.1} parent=79 // pred_fallthru
          _
      $region80: #{_up4_forward.1} parent=5 // pred_fallthru
        _
    $region6: #{_up4_forward.1} parent=1 // loop_footer
      %s28 = sadd.s32 1, %s24
    $region7: #{_up4_forward.1} parent=1 // loop_footer_branch
      %23 = sbr.rel target = $region3
    $region8: #{_up4_forward.1} parent=1 // loop_exit
      _
    %3934 = vsyncpa [#allocation5], 1
    %s3935 = scalar_lea.sflag [#allocation5], 1
    %3936 = vsyncpa %s3935, 1
    %3937 = vsyncpa [#allocation7], 1
    %s3938 = scalar_lea.sflag [#allocation7], 1
    %3939 = vsyncpa %s3938, 1
    %3940 = vsyncpa [#allocation10], 1
    %s3941 = scalar_lea.sflag [#allocation10], 1
    %3942 = vsyncpa %s3941, 1

</llo_original>
